<compile_context>
chip_gen: v6e
topology: v6e:2x2x1
jax: 0.10.0
libtpu: 0.0.40
codegen_flags: <defaults>
</compile_context>

<pallas_src>
import math

import jax
import jax.numpy as jnp
from jax.experimental import pallas as pl
from jax.experimental.pallas import tpu as pltpu


def bottleneck_forward(x, p):
    N, Cin, H, W = x.shape
    assert Cin == 1 and H % 2 == 0 and W % 2 == 0
    Hh, Wh = H // 2, W // 2
    eps = 1e-5

    Wp = ((W + 2 + 7) // 8) * 8           # padded row stride (>= W+2, lane friendly)
    Lrow = H * Wp                          # valid-activation extent inside an image slot
    Lpad = (H + 2) * Wp                    # zero-padded plane extent
    S = ((Lpad + 127) // 128) * 128        # per-image lane stride (vreg multiple)
    NS = N * S                             # slab width (batch packed on lanes)
    TAIL = 128                             # slack so every conv1 tap slice stays in bounds
    OutL = N * Hh * Wh                     # pooled output lanes (lane-dense store)
    offs = [dy * Wp + dx for dy in range(3) for dx in range(3)]
    count = float(N * H * W)
    inv_count = 1.0 / count

    assert S - Lrow >= Wp + 1              # slot-tail zeros provide the 3x3 halo via roll
    assert TAIL >= 2 * Wp + 2
    assert OutL <= 128

    # ---- packed-parameter block layout: ONE (32, 128) f32 input -----------------
    C_W2, C_W1 = 0, 72                                    # (8,72) conv2, (8,9) conv1
    C_B1, C_G1, C_BE1, C_B2, C_G2, C_BE2 = 81, 82, 83, 84, 85, 86
    C_W3 = 88                                             # (16,8) conv3
    C_B3, C_G3, C_BE3 = 96, 97, 98
    C_WS, C_BS, C_GS, C_BES = 99, 100, 101, 102           # bs cancels through train-mode BN
    R_TGT = 24                                            # row: pool target lane ids (as f32)

    def kernel(aux_ref, pp_ref, out_ref, im2row_ref):
        f32 = jnp.float32
        col8 = lambda c: pp_ref[0:8, c:c + 1]
        col16 = lambda c: pp_ref[0:16, c:c + 1]
        mask = aux_ref[1:2, pl.ds(0, NS)]                 # (1, NS): 1.0 on real (n,y,x) lanes

        def bn_affine(a, g, be):
            # training-mode BN over masked batch lanes, one pass (sum + sum-of-squares):
            # returns (scale, shift) so that normalized = a * scale + shift
            am = a * mask
            s1 = jnp.sum(am, axis=1, keepdims=True)
            s2 = jnp.sum(am * am, axis=1, keepdims=True)  # mask in {0,1} => (a*m)^2 == a^2*m
            mean = s1 * inv_count
            var = s2 * inv_count - mean * mean
            scale = jax.lax.rsqrt(var + eps) * g
            return scale, be - mean * scale

        # ---- conv1: 1 -> 8, 3x3, pad 1 (per-tap broadcast FMA over the batch slab) ----
        acc1 = jnp.zeros((8, NS), f32)
        for t, off in enumerate(offs):
            acc1 = acc1 + col8(C_W1 + t) * aux_ref[0:1, pl.ds(off, NS)]
        acc1 = acc1 + col8(C_B1)
        sc1, sh1 = bn_affine(acc1, col8(C_G1), col8(C_BE1))
        y1m = jnp.maximum(acc1 * sc1 + sh1, 0.0) * mask   # masked zeros double as conv2 halo

        # ---- conv2: 8 -> 8, 3x3, pad 1 as ONE K=72 MXU matmul; im2row rows are
        #      XLU rolls of the resident y1m (no q1 scratch, no unaligned reloads) ----
        for t, off in enumerate(offs):
            s = off - (Wp + 1)                            # tap shift in activation coords
            tap = y1m if s == 0 else pltpu.roll(y1m, (-s) % NS, axis=1)  # tap[c] = y1m[c+s]
            im2row_ref[pl.ds(t * 8, 8), :] = tap
        acc2 = jnp.dot(pp_ref[0:8, C_W2:C_W2 + 72], im2row_ref[...],
                       preferred_element_type=f32) + col8(C_B2)
        sc2, sh2 = bn_affine(acc2, col8(C_G2), col8(C_BE2))
        y2 = jnp.maximum(acc2 * sc2 + sh2, 0.0)

        # ---- conv3: 8 -> 16, 1x1 + BN3 ----
        acc3 = jnp.dot(pp_ref[0:16, C_W3:C_W3 + 8], y2,
                       preferred_element_type=f32) + col16(C_B3)
        sc3, sh3 = bn_affine(acc3, col16(C_G3), col16(C_BE3))

        # ---- shortcut: BN(ws*x + bs) == a_sc*x + b_sc exactly (affine of 1-ch stats;
        #      bs cancels; pad lanes of x are zero so the sums need no mask) ----
        x_act = aux_ref[0:1, pl.ds(Wp + 1, NS)]           # (1, NS) original x, activation coords
        sx1 = jnp.sum(x_act, axis=1, keepdims=True)
        sx2 = jnp.sum(x_act * x_act, axis=1, keepdims=True)
        mx = sx1 * inv_count
        vx = sx2 * inv_count - mx * mx
        ws = col16(C_WS)
        a_sc = ws * col16(C_GS) * jax.lax.rsqrt(ws * ws * vx + eps)
        b_sc = col16(C_BES) - a_sc * mx

        # ---- residual add + ReLU (both BN affines folded into one FMA) ----
        pre = jnp.maximum(acc3 * sc3 + a_sc * x_act + (sh3 + b_sc), 0.0)   # (16, NS)

        # ---- 2x2/2 max pool: XLU-rolled shifted maxima + in-kernel one-hot selection ----
        hv = jnp.maximum(
            jnp.maximum(pre, pltpu.roll(pre, NS - 1, axis=1)),             # pre[c+1]
            jnp.maximum(pltpu.roll(pre, NS - Wp, axis=1),                  # pre[c+Wp]
                        pltpu.roll(pre, NS - Wp - 1, axis=1)))             # pre[c+Wp+1]
        lane_id = jax.lax.broadcasted_iota(jnp.int32, (NS, OutL), 0)
        tgt = pp_ref[R_TGT:R_TGT + 1, 0:OutL].astype(jnp.int32)            # (1, OutL)
        sel = (lane_id == tgt).astype(f32)                 # one-hot built in-kernel (no HBM DMA)
        out_ref[...] = jnp.dot(hv, sel, preferred_element_type=f32)

    # ---------------- wrapper: layout prep in plain JAX ----------------
    xpad = jnp.pad(x[:, 0].astype(jnp.float32), ((0, 0), (1, 1), (1, Wp - W - 1)))
    xflat = jnp.pad(xpad.reshape(N, Lpad), ((0, 0), (0, S - Lpad)))
    xrow = jnp.pad(xflat.reshape(1, NS), ((0, 0), (0, TAIL)))               # (1, NS+TAIL)

    lane = jnp.arange(NS, dtype=jnp.int32)
    p_loc = lane % S
    mask = ((p_loc < Lrow) & ((p_loc % Wp) < W)).astype(jnp.float32)[None, :]
    aux = jnp.concatenate([xrow, jnp.pad(mask, ((0, 0), (0, TAIL)))], axis=0)  # (2, NS+TAIL)

    o = jnp.arange(OutL, dtype=jnp.int32)
    n_i, rem = o // (Hh * Wh), o % (Hh * Wh)
    tgt = n_i * S + 2 * (rem // Wh) * Wp + 2 * (rem % Wh)                   # pool window top-left

    f32c = lambda v: v.astype(jnp.float32)
    pp = jnp.zeros((32, 128), jnp.float32)
    pp = pp.at[0:8, C_W2:C_W2 + 72].set(f32c(p["W2"]).transpose(0, 2, 3, 1).reshape(8, 72))
    pp = pp.at[0:8, C_W1:C_W1 + 9].set(f32c(p["W1"]).reshape(8, 9))
    for c, name in ((C_B1, "b1"), (C_G1, "g1"), (C_BE1, "be1"),
                    (C_B2, "b2"), (C_G2, "g2"), (C_BE2, "be2")):
        pp = pp.at[0:8, c].set(f32c(p[name]))
    pp = pp.at[0:16, C_W3:C_W3 + 8].set(f32c(p["W3"]).reshape(16, 8))
    for c, name in ((C_B3, "b3"), (C_G3, "g3"), (C_BE3, "be3"),
                    (C_BS, "bs"), (C_GS, "gs"), (C_BES, "bes")):
        pp = pp.at[0:16, c].set(f32c(p[name]))
    pp = pp.at[0:16, C_WS].set(f32c(p["Ws"]).reshape(16))
    pp = pp.at[R_TGT, 0:OutL].set(tgt.astype(jnp.float32))

    vmem = pl.BlockSpec(memory_space=pltpu.MemorySpace.VMEM)
    out_flat = pl.pallas_call(
        kernel,
        out_shape=jax.ShapeDtypeStruct((16, OutL), jnp.float32),
        in_specs=[vmem, vmem],
        out_specs=vmem,
        scratch_shapes=[pltpu.VMEM((72, NS), jnp.float32)],   # im2row slab for conv2
        compiler_params=pltpu.CompilerParams(vmem_limit_bytes=8 * 1024 * 1024),
    )(aux, pp)
    # (16, N*Hh*Wh) lane-dense slab -> NCHW
    return out_flat.reshape(16, N, Hh, Wh).transpose(1, 0, 2, 3)


def init_params(key):
    ks = jax.random.split(key, 8)

    def u(k, shape, fan_in):
        b = 1.0 / math.sqrt(fan_in)
        return jax.random.uniform(k, shape, jnp.float32, -b, b)

    return dict(
        W1=u(ks[0], (8, 1, 3, 3), 9),   b1=u(ks[1], (8,), 9),
        W2=u(ks[2], (8, 8, 3, 3), 72),  b2=u(ks[3], (8,), 72),
        W3=u(ks[4], (16, 8, 1, 1), 8),  b3=u(ks[5], (16,), 8),
        Ws=u(ks[6], (16, 1, 1, 1), 1),  bs=u(ks[7], (16,), 1),
        g1=jnp.ones((8,)),  be1=jnp.zeros((8,)),
        g2=jnp.ones((8,)),  be2=jnp.zeros((8,)),
        g3=jnp.ones((16,)), be3=jnp.zeros((16,)),
        gs=jnp.ones((16,)), bes=jnp.zeros((16,)),
    )


def ref_forward(x, p):
    # pure-JAX reference (training-mode BatchNorm), for a correctness sanity check
    def conv(inp, w, b, pad):
        y = jax.lax.conv_general_dilated(inp, w, window_strides=(1, 1),
                                         padding=[(pad, pad), (pad, pad)],
                                         dimension_numbers=("NCHW", "OIHW", "NCHW"))
        return y + b.reshape(1, -1, 1, 1)

    def bn(y, g, be):
        mean = jnp.mean(y, axis=(0, 2, 3), keepdims=True)
        var = jnp.mean(jnp.square(y - mean), axis=(0, 2, 3), keepdims=True)
        return (y - mean) * jax.lax.rsqrt(var + 1e-5) * g.reshape(1, -1, 1, 1) + be.reshape(1, -1, 1, 1)

    out = jax.nn.relu(bn(conv(x, p["W1"], p["b1"], 1), p["g1"], p["be1"]))
    out = jax.nn.relu(bn(conv(out, p["W2"], p["b2"], 1), p["g2"], p["be2"]))
    out = bn(conv(out, p["W3"], p["b3"], 0), p["g3"], p["be3"])
    sc = bn(conv(x, p["Ws"], p["bs"], 0), p["gs"], p["bes"])
    out = jax.nn.relu(out + sc)
    N, C, H, W = out.shape
    return out.reshape(N, C, H // 2, 2, W // 2, 2).max(axis=(3, 5))


if __name__ == "__main__":
    key = jax.random.PRNGKey(0)
    kx, kp = jax.random.split(key)
    x = jax.random.normal(kx, (2, 1, 16, 16), jnp.float32)   # NCHW, nn.Conv2d(1, ...)
    params = init_params(kp)

    out = jax.block_until_ready(bottleneck_forward(x, params))
    assert out.shape == (2, 16, 8, 8)

    ref = ref_forward(x, params)
    if not jnp.allclose(out, ref, atol=2e-2, rtol=2e-2):
        raise AssertionError(
            f"mismatch vs reference, max abs diff = {float(jnp.max(jnp.abs(out - ref)))}")
    print("KERNEL_OK")
</pallas_src>

<mosaic_0001>
module attributes {stable_mosaic.version = 11 : i64} {
  func.func @kernel(%arg0: memref<2x1152xf32, #tpu.memory_space<vmem>>, %arg1: memref<32x128xf32, #tpu.memory_space<vmem>>, %arg2: memref<16x128xf32, #tpu.memory_space<vmem>>, %arg3: memref<72x1024xf32, #tpu.memory_space<vmem>>) attributes {dimension_semantics = [], scalar_prefetch = 0 : i64, scratch_operands = 1 : i64, tpu.core_type = #tpu.core_type<tc>} {
    %c1 = arith.constant 1 : index
    %c0 = arith.constant 0 : index
    %0 = vector.load %arg0[%c1, %c0] : memref<2x1152xf32, #tpu.memory_space<vmem>>, vector<1x1024xf32>
    %cst = arith.constant 0.000000e+00 : f32
    %1 = vector.broadcast %cst : f32 to vector<8x1024xf32>
    %c0_0 = arith.constant 0 : index
    %c72 = arith.constant 72 : index
    %2 = vector.load %arg1[%c0_0, %c72] : memref<32x128xf32, #tpu.memory_space<vmem>>, vector<8x1xf32>
    %c0_1 = arith.constant 0 : index
    %c0_2 = arith.constant 0 : index
    %3 = vector.load %arg0[%c0_1, %c0_2] : memref<2x1152xf32, #tpu.memory_space<vmem>>, vector<1x1024xf32>
    %4 = vector.broadcast %2 : vector<8x1xf32> to vector<8x1024xf32>
    %5 = vector.broadcast %3 : vector<1x1024xf32> to vector<8x1024xf32>
    %6 = arith.mulf %4, %5 : vector<8x1024xf32>
    %7 = arith.addf %1, %6 : vector<8x1024xf32>
    %c0_3 = arith.constant 0 : index
    %c73 = arith.constant 73 : index
    %8 = vector.load %arg1[%c0_3, %c73] : memref<32x128xf32, #tpu.memory_space<vmem>>, vector<8x1xf32>
    %c0_4 = arith.constant 0 : index
    %c1_5 = arith.constant 1 : index
    %9 = vector.load %arg0[%c0_4, %c1_5] : memref<2x1152xf32, #tpu.memory_space<vmem>>, vector<1x1024xf32>
    %10 = vector.broadcast %8 : vector<8x1xf32> to vector<8x1024xf32>
    %11 = vector.broadcast %9 : vector<1x1024xf32> to vector<8x1024xf32>
    %12 = arith.mulf %10, %11 : vector<8x1024xf32>
    %13 = arith.addf %7, %12 : vector<8x1024xf32>
    %c0_6 = arith.constant 0 : index
    %c74 = arith.constant 74 : index
    %14 = vector.load %arg1[%c0_6, %c74] : memref<32x128xf32, #tpu.memory_space<vmem>>, vector<8x1xf32>
    %c0_7 = arith.constant 0 : index
    %c2 = arith.constant 2 : index
    %15 = vector.load %arg0[%c0_7, %c2] : memref<2x1152xf32, #tpu.memory_space<vmem>>, vector<1x1024xf32>
    %16 = vector.broadcast %14 : vector<8x1xf32> to vector<8x1024xf32>
    %17 = vector.broadcast %15 : vector<1x1024xf32> to vector<8x1024xf32>
    %18 = arith.mulf %16, %17 : vector<8x1024xf32>
    %19 = arith.addf %13, %18 : vector<8x1024xf32>
    %c0_8 = arith.constant 0 : index
    %c75 = arith.constant 75 : index
    %20 = vector.load %arg1[%c0_8, %c75] : memref<32x128xf32, #tpu.memory_space<vmem>>, vector<8x1xf32>
    %c0_9 = arith.constant 0 : index
    %c24 = arith.constant 24 : index
    %21 = vector.load %arg0[%c0_9, %c24] : memref<2x1152xf32, #tpu.memory_space<vmem>>, vector<1x1024xf32>
    %22 = vector.broadcast %20 : vector<8x1xf32> to vector<8x1024xf32>
    %23 = vector.broadcast %21 : vector<1x1024xf32> to vector<8x1024xf32>
    %24 = arith.mulf %22, %23 : vector<8x1024xf32>
    %25 = arith.addf %19, %24 : vector<8x1024xf32>
    %c0_10 = arith.constant 0 : index
    %c76 = arith.constant 76 : index
    %26 = vector.load %arg1[%c0_10, %c76] : memref<32x128xf32, #tpu.memory_space<vmem>>, vector<8x1xf32>
    %c0_11 = arith.constant 0 : index
    %c25 = arith.constant 25 : index
    %27 = vector.load %arg0[%c0_11, %c25] : memref<2x1152xf32, #tpu.memory_space<vmem>>, vector<1x1024xf32>
    %28 = vector.broadcast %26 : vector<8x1xf32> to vector<8x1024xf32>
    %29 = vector.broadcast %27 : vector<1x1024xf32> to vector<8x1024xf32>
    %30 = arith.mulf %28, %29 : vector<8x1024xf32>
    %31 = arith.addf %25, %30 : vector<8x1024xf32>
    %c0_12 = arith.constant 0 : index
    %c77 = arith.constant 77 : index
    %32 = vector.load %arg1[%c0_12, %c77] : memref<32x128xf32, #tpu.memory_space<vmem>>, vector<8x1xf32>
    %c0_13 = arith.constant 0 : index
    %c26 = arith.constant 26 : index
    %33 = vector.load %arg0[%c0_13, %c26] : memref<2x1152xf32, #tpu.memory_space<vmem>>, vector<1x1024xf32>
    %34 = vector.broadcast %32 : vector<8x1xf32> to vector<8x1024xf32>
    %35 = vector.broadcast %33 : vector<1x1024xf32> to vector<8x1024xf32>
    %36 = arith.mulf %34, %35 : vector<8x1024xf32>
    %37 = arith.addf %31, %36 : vector<8x1024xf32>
    %c0_14 = arith.constant 0 : index
    %c78 = arith.constant 78 : index
    %38 = vector.load %arg1[%c0_14, %c78] : memref<32x128xf32, #tpu.memory_space<vmem>>, vector<8x1xf32>
    %c0_15 = arith.constant 0 : index
    %c48 = arith.constant 48 : index
    %39 = vector.load %arg0[%c0_15, %c48] : memref<2x1152xf32, #tpu.memory_space<vmem>>, vector<1x1024xf32>
    %40 = vector.broadcast %38 : vector<8x1xf32> to vector<8x1024xf32>
    %41 = vector.broadcast %39 : vector<1x1024xf32> to vector<8x1024xf32>
    %42 = arith.mulf %40, %41 : vector<8x1024xf32>
    %43 = arith.addf %37, %42 : vector<8x1024xf32>
    %c0_16 = arith.constant 0 : index
    %c79 = arith.constant 79 : index
    %44 = vector.load %arg1[%c0_16, %c79] : memref<32x128xf32, #tpu.memory_space<vmem>>, vector<8x1xf32>
    %c0_17 = arith.constant 0 : index
    %c49 = arith.constant 49 : index
    %45 = vector.load %arg0[%c0_17, %c49] : memref<2x1152xf32, #tpu.memory_space<vmem>>, vector<1x1024xf32>
    %46 = vector.broadcast %44 : vector<8x1xf32> to vector<8x1024xf32>
    %47 = vector.broadcast %45 : vector<1x1024xf32> to vector<8x1024xf32>
    %48 = arith.mulf %46, %47 : vector<8x1024xf32>
    %49 = arith.addf %43, %48 : vector<8x1024xf32>
    %c0_18 = arith.constant 0 : index
    %c80 = arith.constant 80 : index
    %50 = vector.load %arg1[%c0_18, %c80] : memref<32x128xf32, #tpu.memory_space<vmem>>, vector<8x1xf32>
    %c0_19 = arith.constant 0 : index
    %c50 = arith.constant 50 : index
    %51 = vector.load %arg0[%c0_19, %c50] : memref<2x1152xf32, #tpu.memory_space<vmem>>, vector<1x1024xf32>
    %52 = vector.broadcast %50 : vector<8x1xf32> to vector<8x1024xf32>
    %53 = vector.broadcast %51 : vector<1x1024xf32> to vector<8x1024xf32>
    %54 = arith.mulf %52, %53 : vector<8x1024xf32>
    %55 = arith.addf %49, %54 : vector<8x1024xf32>
    %c0_20 = arith.constant 0 : index
    %c81 = arith.constant 81 : index
    %56 = vector.load %arg1[%c0_20, %c81] : memref<32x128xf32, #tpu.memory_space<vmem>>, vector<8x1xf32>
    %57 = vector.broadcast %56 : vector<8x1xf32> to vector<8x1024xf32>
    %58 = arith.addf %55, %57 : vector<8x1024xf32>
    %c0_21 = arith.constant 0 : index
    %c82 = arith.constant 82 : index
    %59 = vector.load %arg1[%c0_21, %c82] : memref<32x128xf32, #tpu.memory_space<vmem>>, vector<8x1xf32>
    %c0_22 = arith.constant 0 : index
    %c83 = arith.constant 83 : index
    %60 = vector.load %arg1[%c0_22, %c83] : memref<32x128xf32, #tpu.memory_space<vmem>>, vector<8x1xf32>
    %61 = vector.broadcast %0 : vector<1x1024xf32> to vector<8x1024xf32>
    %62 = arith.mulf %58, %61 : vector<8x1024xf32>
    %cst_23 = arith.constant dense<0.000000e+00> : vector<8xf32>
    %63 = vector.multi_reduction <add>, %62, %cst_23 [1] : vector<8x1024xf32> to vector<8xf32>
    %64 = vector.shape_cast %63 : vector<8xf32> to vector<8x1xf32>
    %65 = arith.mulf %62, %62 : vector<8x1024xf32>
    %cst_24 = arith.constant dense<0.000000e+00> : vector<8xf32>
    %66 = vector.multi_reduction <add>, %65, %cst_24 [1] : vector<8x1024xf32> to vector<8xf32>
    %67 = vector.shape_cast %66 : vector<8xf32> to vector<8x1xf32>
    %cst_25 = arith.constant 0.001953125 : f32
    %68 = vector.broadcast %cst_25 : f32 to vector<8x1xf32>
    %69 = arith.mulf %64, %68 : vector<8x1xf32>
    %cst_26 = arith.constant 0.001953125 : f32
    %70 = vector.broadcast %cst_26 : f32 to vector<8x1xf32>
    %71 = arith.mulf %67, %70 : vector<8x1xf32>
    %72 = arith.mulf %69, %69 : vector<8x1xf32>
    %73 = arith.subf %71, %72 : vector<8x1xf32>
    %cst_27 = arith.constant 9.99999974E-6 : f32
    %74 = vector.broadcast %cst_27 : f32 to vector<8x1xf32>
    %75 = arith.addf %73, %74 : vector<8x1xf32>
    %76 = math.rsqrt %75 : vector<8x1xf32>
    %77 = arith.mulf %76, %59 : vector<8x1xf32>
    %78 = arith.mulf %69, %77 : vector<8x1xf32>
    %79 = arith.subf %60, %78 : vector<8x1xf32>
    %80 = vector.broadcast %77 : vector<8x1xf32> to vector<8x1024xf32>
    %81 = arith.mulf %58, %80 : vector<8x1024xf32>
    %82 = vector.broadcast %79 : vector<8x1xf32> to vector<8x1024xf32>
    %83 = arith.addf %81, %82 : vector<8x1024xf32>
    %cst_28 = arith.constant 0.000000e+00 : f32
    %84 = vector.broadcast %cst_28 : f32 to vector<8x1024xf32>
    %85 = arith.maximumf %83, %84 : vector<8x1024xf32>
    %86 = vector.broadcast %0 : vector<1x1024xf32> to vector<8x1024xf32>
    %87 = arith.mulf %85, %86 : vector<8x1024xf32>
    %c25_i32 = arith.constant 25 : i32
    %88 = tpu.dynamic_rotate %87 by %c25_i32 dim 1 : vector<8x1024xf32>, i32 -> vector<8x1024xf32>
    %c0_29 = arith.constant 0 : index
    %c0_30 = arith.constant 0 : index
    %89 = vector.load %arg3[%c0_29, %c0_30] : memref<72x1024xf32, #tpu.memory_space<vmem>>, vector<8x1024xf32>
    tpu.vector_store %arg3[%c0_29, %c0_30], %88 {strides = array<i32>} : memref<72x1024xf32, #tpu.memory_space<vmem>>, vector<8x1024xf32>,
    %c24_i32 = arith.constant 24 : i32
    %90 = tpu.dynamic_rotate %87 by %c24_i32 dim 1 : vector<8x1024xf32>, i32 -> vector<8x1024xf32>
    %c8 = arith.constant 8 : index
    %c0_31 = arith.constant 0 : index
    %91 = vector.load %arg3[%c8, %c0_31] : memref<72x1024xf32, #tpu.memory_space<vmem>>, vector<8x1024xf32>
    tpu.vector_store %arg3[%c8, %c0_31], %90 {strides = array<i32>} : memref<72x1024xf32, #tpu.memory_space<vmem>>, vector<8x1024xf32>,
    %c23_i32 = arith.constant 23 : i32
    %92 = tpu.dynamic_rotate %87 by %c23_i32 dim 1 : vector<8x1024xf32>, i32 -> vector<8x1024xf32>
    %c16 = arith.constant 16 : index
    %c0_32 = arith.constant 0 : index
    %93 = vector.load %arg3[%c16, %c0_32] : memref<72x1024xf32, #tpu.memory_space<vmem>>, vector<8x1024xf32>
    tpu.vector_store %arg3[%c16, %c0_32], %92 {strides = array<i32>} : memref<72x1024xf32, #tpu.memory_space<vmem>>, vector<8x1024xf32>,
    %c1_i32 = arith.constant 1 : i32
    %94 = tpu.dynamic_rotate %87 by %c1_i32 dim 1 : vector<8x1024xf32>, i32 -> vector<8x1024xf32>
    %c24_33 = arith.constant 24 : index
    %c0_34 = arith.constant 0 : index
    %95 = vector.load %arg3[%c24_33, %c0_34] : memref<72x1024xf32, #tpu.memory_space<vmem>>, vector<8x1024xf32>
    tpu.vector_store %arg3[%c24_33, %c0_34], %94 {strides = array<i32>} : memref<72x1024xf32, #tpu.memory_space<vmem>>, vector<8x1024xf32>,
    %c32 = arith.constant 32 : index
    %c0_35 = arith.constant 0 : index
    %96 = vector.load %arg3[%c32, %c0_35] : memref<72x1024xf32, #tpu.memory_space<vmem>>, vector<8x1024xf32>
    tpu.vector_store %arg3[%c32, %c0_35], %87 {strides = array<i32>} : memref<72x1024xf32, #tpu.memory_space<vmem>>, vector<8x1024xf32>,
    %c1023_i32 = arith.constant 1023 : i32
    %97 = tpu.dynamic_rotate %87 by %c1023_i32 dim 1 : vector<8x1024xf32>, i32 -> vector<8x1024xf32>
    %c40 = arith.constant 40 : index
    %c0_36 = arith.constant 0 : index
    %98 = vector.load %arg3[%c40, %c0_36] : memref<72x1024xf32, #tpu.memory_space<vmem>>, vector<8x1024xf32>
    tpu.vector_store %arg3[%c40, %c0_36], %97 {strides = array<i32>} : memref<72x1024xf32, #tpu.memory_space<vmem>>, vector<8x1024xf32>,
    %c1001_i32 = arith.constant 1001 : i32
    %99 = tpu.dynamic_rotate %87 by %c1001_i32 dim 1 : vector<8x1024xf32>, i32 -> vector<8x1024xf32>
    %c48_37 = arith.constant 48 : index
    %c0_38 = arith.constant 0 : index
    %100 = vector.load %arg3[%c48_37, %c0_38] : memref<72x1024xf32, #tpu.memory_space<vmem>>, vector<8x1024xf32>
    tpu.vector_store %arg3[%c48_37, %c0_38], %99 {strides = array<i32>} : memref<72x1024xf32, #tpu.memory_space<vmem>>, vector<8x1024xf32>,
    %c1000_i32 = arith.constant 1000 : i32
    %101 = tpu.dynamic_rotate %87 by %c1000_i32 dim 1 : vector<8x1024xf32>, i32 -> vector<8x1024xf32>
    %c56 = arith.constant 56 : index
    %c0_39 = arith.constant 0 : index
    %102 = vector.load %arg3[%c56, %c0_39] : memref<72x1024xf32, #tpu.memory_space<vmem>>, vector<8x1024xf32>
    tpu.vector_store %arg3[%c56, %c0_39], %101 {strides = array<i32>} : memref<72x1024xf32, #tpu.memory_space<vmem>>, vector<8x1024xf32>,
    %c999_i32 = arith.constant 999 : i32
    %103 = tpu.dynamic_rotate %87 by %c999_i32 dim 1 : vector<8x1024xf32>, i32 -> vector<8x1024xf32>
    %c64 = arith.constant 64 : index
    %c0_40 = arith.constant 0 : index
    %104 = vector.load %arg3[%c64, %c0_40] : memref<72x1024xf32, #tpu.memory_space<vmem>>, vector<8x1024xf32>
    tpu.vector_store %arg3[%c64, %c0_40], %103 {strides = array<i32>} : memref<72x1024xf32, #tpu.memory_space<vmem>>, vector<8x1024xf32>,
    %c0_41 = arith.constant 0 : index
    %c0_42 = arith.constant 0 : index
    %105 = vector.load %arg1[%c0_41, %c0_42] : memref<32x128xf32, #tpu.memory_space<vmem>>, vector<8x72xf32>
    %c0_43 = arith.constant 0 : index
    %c0_44 = arith.constant 0 : index
    %106 = vector.load %arg3[%c0_43, %c0_44] : memref<72x1024xf32, #tpu.memory_space<vmem>>, vector<72x1024xf32>
    %cst_45 = arith.constant dense<0.000000e+00> : vector<8x1024xf32>
    %107 = tpu.matmul %105, %106, %cst_45 {dimension_numbers = #tpu.dot_dimension_numbers<[1], [0], [0], [1], [0, 0, 1, 1], [], []>} : vector<8x72xf32>, vector<72x1024xf32>, vector<8x1024xf32> -> vector<8x1024xf32>
    %c0_46 = arith.constant 0 : index
    %c84 = arith.constant 84 : index
    %108 = vector.load %arg1[%c0_46, %c84] : memref<32x128xf32, #tpu.memory_space<vmem>>, vector<8x1xf32>
    %109 = vector.broadcast %108 : vector<8x1xf32> to vector<8x1024xf32>
    %110 = arith.addf %107, %109 : vector<8x1024xf32>
    %c0_47 = arith.constant 0 : index
    %c85 = arith.constant 85 : index
    %111 = vector.load %arg1[%c0_47, %c85] : memref<32x128xf32, #tpu.memory_space<vmem>>, vector<8x1xf32>
    %c0_48 = arith.constant 0 : index
    %c86 = arith.constant 86 : index
    %112 = vector.load %arg1[%c0_48, %c86] : memref<32x128xf32, #tpu.memory_space<vmem>>, vector<8x1xf32>
    %113 = vector.broadcast %0 : vector<1x1024xf32> to vector<8x1024xf32>
    %114 = arith.mulf %110, %113 : vector<8x1024xf32>
    %cst_49 = arith.constant dense<0.000000e+00> : vector<8xf32>
    %115 = vector.multi_reduction <add>, %114, %cst_49 [1] : vector<8x1024xf32> to vector<8xf32>
    %116 = vector.shape_cast %115 : vector<8xf32> to vector<8x1xf32>
    %117 = arith.mulf %114, %114 : vector<8x1024xf32>
    %cst_50 = arith.constant dense<0.000000e+00> : vector<8xf32>
    %118 = vector.multi_reduction <add>, %117, %cst_50 [1] : vector<8x1024xf32> to vector<8xf32>
    %119 = vector.shape_cast %118 : vector<8xf32> to vector<8x1xf32>
    %cst_51 = arith.constant 0.001953125 : f32
    %120 = vector.broadcast %cst_51 : f32 to vector<8x1xf32>
    %121 = arith.mulf %116, %120 : vector<8x1xf32>
    %cst_52 = arith.constant 0.001953125 : f32
    %122 = vector.broadcast %cst_52 : f32 to vector<8x1xf32>
    %123 = arith.mulf %119, %122 : vector<8x1xf32>
    %124 = arith.mulf %121, %121 : vector<8x1xf32>
    %125 = arith.subf %123, %124 : vector<8x1xf32>
    %cst_53 = arith.constant 9.99999974E-6 : f32
    %126 = vector.broadcast %cst_53 : f32 to vector<8x1xf32>
    %127 = arith.addf %125, %126 : vector<8x1xf32>
    %128 = math.rsqrt %127 : vector<8x1xf32>
    %129 = arith.mulf %128, %111 : vector<8x1xf32>
    %130 = arith.mulf %121, %129 : vector<8x1xf32>
    %131 = arith.subf %112, %130 : vector<8x1xf32>
    %132 = vector.broadcast %129 : vector<8x1xf32> to vector<8x1024xf32>
    %133 = arith.mulf %110, %132 : vector<8x1024xf32>
    %134 = vector.broadcast %131 : vector<8x1xf32> to vector<8x1024xf32>
    %135 = arith.addf %133, %134 : vector<8x1024xf32>
    %cst_54 = arith.constant 0.000000e+00 : f32
    %136 = vector.broadcast %cst_54 : f32 to vector<8x1024xf32>
    %137 = arith.maximumf %135, %136 : vector<8x1024xf32>
    %c0_55 = arith.constant 0 : index
    %c88 = arith.constant 88 : index
    %138 = vector.load %arg1[%c0_55, %c88] : memref<32x128xf32, #tpu.memory_space<vmem>>, vector<16x8xf32>
    %cst_56 = arith.constant dense<0.000000e+00> : vector<16x1024xf32>
    %139 = tpu.matmul %138, %137, %cst_56 {dimension_numbers = #tpu.dot_dimension_numbers<[1], [0], [0], [1], [0, 0, 1, 1], [], []>} : vector<16x8xf32>, vector<8x1024xf32>, vector<16x1024xf32> -> vector<16x1024xf32>
    %c0_57 = arith.constant 0 : index
    %c96 = arith.constant 96 : index
    %140 = vector.load %arg1[%c0_57, %c96] : memref<32x128xf32, #tpu.memory_space<vmem>>, vector<16x1xf32>
    %141 = vector.broadcast %140 : vector<16x1xf32> to vector<16x1024xf32>
    %142 = arith.addf %139, %141 : vector<16x1024xf32>
    %c0_58 = arith.constant 0 : index
    %c97 = arith.constant 97 : index
    %143 = vector.load %arg1[%c0_58, %c97] : memref<32x128xf32, #tpu.memory_space<vmem>>, vector<16x1xf32>
    %c0_59 = arith.constant 0 : index
    %c98 = arith.constant 98 : index
    %144 = vector.load %arg1[%c0_59, %c98] : memref<32x128xf32, #tpu.memory_space<vmem>>, vector<16x1xf32>
    %145 = vector.broadcast %0 : vector<1x1024xf32> to vector<16x1024xf32>
    %146 = arith.mulf %142, %145 : vector<16x1024xf32>
    %cst_60 = arith.constant dense<0.000000e+00> : vector<16xf32>
    %147 = vector.multi_reduction <add>, %146, %cst_60 [1] : vector<16x1024xf32> to vector<16xf32>
    %148 = vector.shape_cast %147 : vector<16xf32> to vector<16x1xf32>
    %149 = arith.mulf %146, %146 : vector<16x1024xf32>
    %cst_61 = arith.constant dense<0.000000e+00> : vector<16xf32>
    %150 = vector.multi_reduction <add>, %149, %cst_61 [1] : vector<16x1024xf32> to vector<16xf32>
    %151 = vector.shape_cast %150 : vector<16xf32> to vector<16x1xf32>
    %cst_62 = arith.constant 0.001953125 : f32
    %152 = vector.broadcast %cst_62 : f32 to vector<16x1xf32>
    %153 = arith.mulf %148, %152 : vector<16x1xf32>
    %cst_63 = arith.constant 0.001953125 : f32
    %154 = vector.broadcast %cst_63 : f32 to vector<16x1xf32>
    %155 = arith.mulf %151, %154 : vector<16x1xf32>
    %156 = arith.mulf %153, %153 : vector<16x1xf32>
    %157 = arith.subf %155, %156 : vector<16x1xf32>
    %cst_64 = arith.constant 9.99999974E-6 : f32
    %158 = vector.broadcast %cst_64 : f32 to vector<16x1xf32>
    %159 = arith.addf %157, %158 : vector<16x1xf32>
    %160 = math.rsqrt %159 : vector<16x1xf32>
    %161 = arith.mulf %160, %143 : vector<16x1xf32>
    %162 = arith.mulf %153, %161 : vector<16x1xf32>
    %163 = arith.subf %144, %162 : vector<16x1xf32>
    %c0_65 = arith.constant 0 : index
    %c25_66 = arith.constant 25 : index
    %164 = vector.load %arg0[%c0_65, %c25_66] : memref<2x1152xf32, #tpu.memory_space<vmem>>, vector<1x1024xf32>
    %cst_67 = arith.constant dense<0.000000e+00> : vector<1xf32>
    %165 = vector.multi_reduction <add>, %164, %cst_67 [1] : vector<1x1024xf32> to vector<1xf32>
    %166 = vector.shape_cast %165 : vector<1xf32> to vector<1x1xf32>
    %167 = arith.mulf %164, %164 : vector<1x1024xf32>
    %cst_68 = arith.constant dense<0.000000e+00> : vector<1xf32>
    %168 = vector.multi_reduction <add>, %167, %cst_68 [1] : vector<1x1024xf32> to vector<1xf32>
    %169 = vector.shape_cast %168 : vector<1xf32> to vector<1x1xf32>
    %cst_69 = arith.constant 0.001953125 : f32
    %170 = vector.broadcast %cst_69 : f32 to vector<1x1xf32>
    %171 = arith.mulf %166, %170 : vector<1x1xf32>
    %cst_70 = arith.constant 0.001953125 : f32
    %172 = vector.broadcast %cst_70 : f32 to vector<1x1xf32>
    %173 = arith.mulf %169, %172 : vector<1x1xf32>
    %174 = arith.mulf %171, %171 : vector<1x1xf32>
    %175 = arith.subf %173, %174 : vector<1x1xf32>
    %c0_71 = arith.constant 0 : index
    %c99 = arith.constant 99 : index
    %176 = vector.load %arg1[%c0_71, %c99] : memref<32x128xf32, #tpu.memory_space<vmem>>, vector<16x1xf32>
    %c0_72 = arith.constant 0 : index
    %c101 = arith.constant 101 : index
    %177 = vector.load %arg1[%c0_72, %c101] : memref<32x128xf32, #tpu.memory_space<vmem>>, vector<16x1xf32>
    %178 = arith.mulf %176, %177 : vector<16x1xf32>
    %179 = arith.mulf %176, %176 : vector<16x1xf32>
    %180 = vector.broadcast %175 : vector<1x1xf32> to vector<16x1xf32>
    %181 = arith.mulf %179, %180 : vector<16x1xf32>
    %cst_73 = arith.constant 9.99999974E-6 : f32
    %182 = vector.broadcast %cst_73 : f32 to vector<16x1xf32>
    %183 = arith.addf %181, %182 : vector<16x1xf32>
    %184 = math.rsqrt %183 : vector<16x1xf32>
    %185 = arith.mulf %178, %184 : vector<16x1xf32>
    %c0_74 = arith.constant 0 : index
    %c102 = arith.constant 102 : index
    %186 = vector.load %arg1[%c0_74, %c102] : memref<32x128xf32, #tpu.memory_space<vmem>>, vector<16x1xf32>
    %187 = vector.broadcast %171 : vector<1x1xf32> to vector<16x1xf32>
    %188 = arith.mulf %185, %187 : vector<16x1xf32>
    %189 = arith.subf %186, %188 : vector<16x1xf32>
    %190 = vector.broadcast %161 : vector<16x1xf32> to vector<16x1024xf32>
    %191 = arith.mulf %142, %190 : vector<16x1024xf32>
    %192 = vector.broadcast %185 : vector<16x1xf32> to vector<16x1024xf32>
    %193 = vector.broadcast %164 : vector<1x1024xf32> to vector<16x1024xf32>
    %194 = arith.mulf %192, %193 : vector<16x1024xf32>
    %195 = arith.addf %191, %194 : vector<16x1024xf32>
    %196 = arith.addf %163, %189 : vector<16x1xf32>
    %197 = vector.broadcast %196 : vector<16x1xf32> to vector<16x1024xf32>
    %198 = arith.addf %195, %197 : vector<16x1024xf32>
    %cst_75 = arith.constant 0.000000e+00 : f32
    %199 = vector.broadcast %cst_75 : f32 to vector<16x1024xf32>
    %200 = arith.maximumf %198, %199 : vector<16x1024xf32>
    %c1023_i32_76 = arith.constant 1023 : i32
    %201 = tpu.dynamic_rotate %200 by %c1023_i32_76 dim 1 : vector<16x1024xf32>, i32 -> vector<16x1024xf32>
    %202 = arith.maximumf %200, %201 : vector<16x1024xf32>
    %c1000_i32_77 = arith.constant 1000 : i32
    %203 = tpu.dynamic_rotate %200 by %c1000_i32_77 dim 1 : vector<16x1024xf32>, i32 -> vector<16x1024xf32>
    %c999_i32_78 = arith.constant 999 : i32
    %204 = tpu.dynamic_rotate %200 by %c999_i32_78 dim 1 : vector<16x1024xf32>, i32 -> vector<16x1024xf32>
    %205 = arith.maximumf %203, %204 : vector<16x1024xf32>
    %206 = arith.maximumf %202, %205 : vector<16x1024xf32>
    %207 = tpu.iota {dimensions = array<i32: 0>} : vector<1024x128xi32>
    %c24_79 = arith.constant 24 : index
    %c0_80 = arith.constant 0 : index
    %208 = vector.load %arg1[%c24_79, %c0_80] : memref<32x128xf32, #tpu.memory_space<vmem>>, vector<1x128xf32>
    %209 = arith.fptosi %208 : vector<1x128xf32> to vector<1x128xi32>
    %210 = vector.broadcast %209 : vector<1x128xi32> to vector<1024x128xi32>
    %211 = arith.cmpi eq, %207, %210 : vector<1024x128xi32>
    %212 = arith.extui %211 : vector<1024x128xi1> to vector<1024x128xi32>
    %213 = arith.sitofp %212 : vector<1024x128xi32> to vector<1024x128xf32>
    %cst_81 = arith.constant dense<0.000000e+00> : vector<16x128xf32>
    %214 = tpu.matmul %206, %213, %cst_81 {dimension_numbers = #tpu.dot_dimension_numbers<[1], [0], [0], [1], [0, 0, 1, 1], [], []>} : vector<16x1024xf32>, vector<1024x128xf32>, vector<16x128xf32> -> vector<16x128xf32>
    %c0_82 = arith.constant 0 : index
    %c0_83 = arith.constant 0 : index
    %215 = vector.load %arg2[%c0_82, %c0_83] : memref<16x128xf32, #tpu.memory_space<vmem>>, vector<16x128xf32>
    tpu.vector_store %arg2[%c0_82, %c0_83], %214 {strides = array<i32>} : memref<16x128xf32, #tpu.memory_space<vmem>>, vector<16x128xf32>,
    return
  }
}

</mosaic_0001>

<llo_original>
// kernel: tpu_custom_call.1
$region0: #{tpu_custom_call.1}
  #allocation0 [shape = 'u32[]', space=smem, size = 0x4, offset = 0x4, fixed_abs, tag = 'smem constant byte address 0x4 - core index']
  #allocation1 [shape = 'u32[144,128]{1,0:T(1,128)}', space=vmem, size = 0x12000, scoped, tag = 'internal scratch']
  #allocation2 [shape = 'f32[72,1024]{1,0:T(8,128)}', space=vmem, size = 0x48000, scoped, tag = 'scratch operand']
  %s0 = inlined_call_operand.hbm [shape: f32[2,1152], index: 0, kind: input, shape index: {}]
  %s1 = inlined_call_operand.hbm [shape: f32[32,128], index: 1, kind: input, shape index: {}]
  %s2 = inlined_call_operand.hbm [shape: f32[16,128], index: 2, kind: output, shape index: {}]
  %s3 = sld [smem:[#allocation0]]
  $region26: #{tpu_custom_call.1} parent=0
    _
  %s5 = ssub.s32 1, %s3
  %s6 = scalar_select 0, %s5, %s3
  $region1: #{tpu_custom_call.1} parent=0
    #allocation3 [shape = 'u8[9216]{0}', space=vmem, size = 0x2400, scoped, tag = 'input window, operand 0, single buffered']
    #allocation4 [shape = 's32[1]{0}', space=sflag, size = 0x4, scoped, tag = 'scoped memory for tpu_custom_call.1']
    #allocation5 [shape = 's32[1]{0}', space=sflag, size = 0x4, scoped, tag = 'scoped memory for tpu_custom_call.1']
    #allocation6 [shape = 'u8[16384]{0}', space=vmem, size = 0x4000, scoped, tag = 'input window, operand 1, single buffered']
    #allocation7 [shape = 's32[1]{0}', space=sflag, size = 0x4, scoped, tag = 'scoped memory for tpu_custom_call.1']
    #allocation8 [shape = 'u8[8192]{0}', space=vmem, size = 0x2000, scoped, tag = 'output window, operand 0, single buffered']
    %7 = vsyncpa [#allocation4], 0
    %8 = vsyncpa [#allocation7], 0
    %9 = vsyncpa [#allocation5], 0
    // Predicated region
    $region2: #{tpu_custom_call.1} parent=1 // pred_check
      _
    $region3: #{tpu_custom_call.1} parent=1 // pred_check_branch
      %11 = sbr.rel (0) target = $region5
    $region4: #{tpu_custom_call.1} parent=1 // pred_region
      %s13 = ssub.s32 288, 288
      %14 = vsyncadd [#allocation4], %s13
      %s16 = sshll.u32 [#allocation3], 4
      %s17 = int_to_ptr.vmem [resolvable:$true] %s16
      %19 = dma.hbm_to_vmem [thread:$0]  %s0, 288, %s17, [#allocation4]
    $region5: #{tpu_custom_call.1} parent=1 // pred_fallthru
      _
    // Predicated region
    $region6: #{tpu_custom_call.1} parent=1 // pred_check
      _
    $region7: #{tpu_custom_call.1} parent=1 // pred_check_branch
      %21 = sbr.rel (0) target = $region9
    $region8: #{tpu_custom_call.1} parent=1 // pred_region
      %s23 = ssub.s32 512, 512
      %24 = vsyncadd [#allocation7], %s23
      %s25 = sshll.u32 [#allocation6], 4
      %s26 = int_to_ptr.vmem [resolvable:$true] %s25
      %31 = dma.hbm_to_vmem [thread:$0]  %s1, 512, %s26, [#allocation7], 128, 128, 8
    $region9: #{tpu_custom_call.1} parent=1 // pred_fallthru
      _
    // Predicated region
    $region10: #{tpu_custom_call.1} parent=1 // pred_check
      _
    $region11: #{tpu_custom_call.1} parent=1 // pred_check_branch
      %33 = sbr.rel (0) target = $region13
    $region12: #{tpu_custom_call.1} parent=1 // pred_region
      %34 = dma.done [#allocation4], 288
    $region13: #{tpu_custom_call.1} parent=1 // pred_fallthru
      _
    // Predicated region
    $region14: #{tpu_custom_call.1} parent=1 // pred_check
      _
    $region15: #{tpu_custom_call.1} parent=1 // pred_check_branch
      %36 = sbr.rel (0) target = $region17
    $region16: #{tpu_custom_call.1} parent=1 // pred_region
      %37 = dma.done [#allocation7], 512
    $region17: #{tpu_custom_call.1} parent=1 // pred_fallthru
      _
    %s38 = scalar_lea.vmem [#allocation3], 1
    %v39 = vld [vmem:[%s38] ss:$2 sm:$0xff]
    %v40 = vld [vmem:[#allocation6] sm:$0xff]
    %v41 = vld [vmem:[#allocation3] ss:$2 sm:$0xff]
    %43 = vset.pattern.permute.xlu0 72
    %44 = vperm.xlu0 %43, %v40
    %v45 = vpop.permute.xlu0 %44
    %v48 = vlaneseq
    %v49 = vshrl.u32 %v48, 7
    %v50 = vsub.s32 0, %v49
    %v51 = vrot.slane %v41, %v50
    %v52 = vlaneseq
    %v53 = vshrl.u32 %v52, 7
    %v54 = vsub.s32 1, %v53
    %v55 = vrot.slane %v41, %v54
    %v56 = vlaneseq
    %v57 = vshrl.u32 %v56, 7
    %v58 = vsub.s32 2, %v57
    %v59 = vrot.slane %v41, %v58
    %v60 = vlaneseq
    %v61 = vshrl.u32 %v60, 7
    %v62 = vsub.s32 3, %v61
    %v63 = vrot.slane %v41, %v62
    %v64 = vlaneseq
    %v65 = vshrl.u32 %v64, 7
    %v66 = vsub.s32 4, %v65
    %v67 = vrot.slane %v41, %v66
    %v68 = vlaneseq
    %v69 = vshrl.u32 %v68, 7
    %v70 = vsub.s32 5, %v69
    %v71 = vrot.slane %v41, %v70
    %v72 = vlaneseq
    %v73 = vshrl.u32 %v72, 7
    %v74 = vsub.s32 6, %v73
    %v75 = vrot.slane %v41, %v74
    %v76 = vlaneseq
    %v77 = vshrl.u32 %v76, 7
    %v78 = vsub.s32 7, %v77
    %v79 = vrot.slane %v41, %v78
    %v88 = vmul.f32 %v45, %v51
    %v89 = vmul.f32 %v45, %v55
    %v90 = vmul.f32 %v45, %v59
    %v91 = vmul.f32 %v45, %v63
    %v92 = vmul.f32 %v45, %v67
    %v93 = vmul.f32 %v45, %v71
    %v94 = vmul.f32 %v45, %v75
    %v95 = vmul.f32 %v45, %v79
    %v96 = vadd.f32 %v88, 0.0
    %v97 = vadd.f32 %v89, 0.0
    %v98 = vadd.f32 %v90, 0.0
    %v99 = vadd.f32 %v91, 0.0
    %v100 = vadd.f32 %v92, 0.0
    %v101 = vadd.f32 %v93, 0.0
    %v102 = vadd.f32 %v94, 0.0
    %v103 = vadd.f32 %v95, 0.0
    %v104 = vld [vmem:[#allocation3] ss:$2 sm:$0xff]
    %s105 = scalar_lea.vmem [#allocation3], 16
    %v106 = vld [vmem:[%s105] ss:$2 sm:$0x1]
    %107 = vset.pattern.permute.xlu0 73
    %108 = vperm.xlu0 %107, %v40
    %v109 = vpop.permute.xlu0 %108
    %v113 = vlaneseq
    %v114 = vshrl.u32 %v113, 7
    %v115 = vsub.s32 0, %v114
    %v116 = vrot.slane %v104, %v115
    %v117 = vlaneseq
    %v118 = vshrl.u32 %v117, 7
    %v119 = vsub.s32 1, %v118
    %v120 = vrot.slane %v104, %v119
    %v121 = vlaneseq
    %v122 = vshrl.u32 %v121, 7
    %v123 = vsub.s32 2, %v122
    %v124 = vrot.slane %v104, %v123
    %v125 = vlaneseq
    %v126 = vshrl.u32 %v125, 7
    %v127 = vsub.s32 3, %v126
    %v128 = vrot.slane %v104, %v127
    %v129 = vlaneseq
    %v130 = vshrl.u32 %v129, 7
    %v131 = vsub.s32 4, %v130
    %v132 = vrot.slane %v104, %v131
    %v133 = vlaneseq
    %v134 = vshrl.u32 %v133, 7
    %v135 = vsub.s32 5, %v134
    %v136 = vrot.slane %v104, %v135
    %v137 = vlaneseq
    %v138 = vshrl.u32 %v137, 7
    %v139 = vsub.s32 6, %v138
    %v140 = vrot.slane %v104, %v139
    %v141 = vlaneseq
    %v142 = vshrl.u32 %v141, 7
    %v143 = vsub.s32 7, %v142
    %v144 = vrot.slane %v104, %v143
    %v145 = vlaneseq
    %v146 = vshrl.u32 %v145, 7
    %v147 = vsub.s32 0, %v146
    %v148 = vrot.slane %v106, %v147
    %v158 = vmul.f32 %v109, %v116
    %v159 = vmul.f32 %v109, %v120
    %v160 = vmul.f32 %v109, %v124
    %v161 = vmul.f32 %v109, %v128
    %v162 = vmul.f32 %v109, %v132
    %v163 = vmul.f32 %v109, %v136
    %v164 = vmul.f32 %v109, %v140
    %v165 = vmul.f32 %v109, %v144
    %v166 = vmul.f32 %v109, %v148
    %176 = vrot.lane.b32.xlu0 %v158, 127
    %v177 = vpop.permute.xlu0 %176
    %178 = vrot.lane.b32.xlu0 %v159, 127
    %v179 = vpop.permute.xlu0 %178
    %180 = vrot.lane.b32.xlu0 %v160, 127
    %v181 = vpop.permute.xlu0 %180
    %182 = vrot.lane.b32.xlu0 %v161, 127
    %v183 = vpop.permute.xlu0 %182
    %184 = vrot.lane.b32.xlu0 %v162, 127
    %v185 = vpop.permute.xlu0 %184
    %186 = vrot.lane.b32.xlu0 %v163, 127
    %v187 = vpop.permute.xlu0 %186
    %188 = vrot.lane.b32.xlu0 %v164, 127
    %v189 = vpop.permute.xlu0 %188
    %190 = vrot.lane.b32.xlu0 %v165, 127
    %v191 = vpop.permute.xlu0 %190
    %192 = vrot.lane.b32.xlu0 %v166, 127
    %v193 = vpop.permute.xlu0 %192
    %vm194 = vcmask 1039360
    %v195 = vsel %vm194, %v177, %v179
    %v196 = vsel %vm194, %v179, %v181
    %v197 = vsel %vm194, %v181, %v183
    %v198 = vsel %vm194, %v183, %v185
    %v199 = vsel %vm194, %v185, %v187
    %v200 = vsel %vm194, %v187, %v189
    %v201 = vsel %vm194, %v189, %v191
    %v202 = vsel %vm194, %v191, %v193
    %v211 = vadd.f32 %v96, %v195
    %v212 = vadd.f32 %v97, %v196
    %v213 = vadd.f32 %v98, %v197
    %v214 = vadd.f32 %v99, %v198
    %v215 = vadd.f32 %v100, %v199
    %v216 = vadd.f32 %v101, %v200
    %v217 = vadd.f32 %v102, %v201
    %v218 = vadd.f32 %v103, %v202
    %219 = vset.pattern.permute.xlu0 74
    %220 = vperm.xlu0 %219, %v40
    %v221 = vpop.permute.xlu0 %220
    %v223 = vmul.f32 %v221, %v116
    %v224 = vmul.f32 %v221, %v120
    %v225 = vmul.f32 %v221, %v124
    %v226 = vmul.f32 %v221, %v128
    %v227 = vmul.f32 %v221, %v132
    %v228 = vmul.f32 %v221, %v136
    %v229 = vmul.f32 %v221, %v140
    %v230 = vmul.f32 %v221, %v144
    %v231 = vmul.f32 %v221, %v148
    %241 = vrot.lane.b32.xlu0 %v223, 126
    %v242 = vpop.permute.xlu0 %241
    %243 = vrot.lane.b32.xlu0 %v224, 126
    %v244 = vpop.permute.xlu0 %243
    %245 = vrot.lane.b32.xlu0 %v225, 126
    %v246 = vpop.permute.xlu0 %245
    %247 = vrot.lane.b32.xlu0 %v226, 126
    %v248 = vpop.permute.xlu0 %247
    %249 = vrot.lane.b32.xlu0 %v227, 126
    %v250 = vpop.permute.xlu0 %249
    %251 = vrot.lane.b32.xlu0 %v228, 126
    %v252 = vpop.permute.xlu0 %251
    %253 = vrot.lane.b32.xlu0 %v229, 126
    %v254 = vpop.permute.xlu0 %253
    %255 = vrot.lane.b32.xlu0 %v230, 126
    %v256 = vpop.permute.xlu0 %255
    %257 = vrot.lane.b32.xlu0 %v231, 126
    %v258 = vpop.permute.xlu0 %257
    %vm259 = vcmask 1031168
    %v260 = vsel %vm259, %v242, %v244
    %v261 = vsel %vm259, %v244, %v246
    %v262 = vsel %vm259, %v246, %v248
    %v263 = vsel %vm259, %v248, %v250
    %v264 = vsel %vm259, %v250, %v252
    %v265 = vsel %vm259, %v252, %v254
    %v266 = vsel %vm259, %v254, %v256
    %v267 = vsel %vm259, %v256, %v258
    %v276 = vadd.f32 %v211, %v260
    %v277 = vadd.f32 %v212, %v261
    %v278 = vadd.f32 %v213, %v262
    %v279 = vadd.f32 %v214, %v263
    %v280 = vadd.f32 %v215, %v264
    %v281 = vadd.f32 %v216, %v265
    %v282 = vadd.f32 %v217, %v266
    %v283 = vadd.f32 %v218, %v267
    %284 = vset.pattern.permute.xlu0 75
    %285 = vperm.xlu0 %284, %v40
    %v286 = vpop.permute.xlu0 %285
    %v288 = vmul.f32 %v286, %v116
    %v289 = vmul.f32 %v286, %v120
    %v290 = vmul.f32 %v286, %v124
    %v291 = vmul.f32 %v286, %v128
    %v292 = vmul.f32 %v286, %v132
    %v293 = vmul.f32 %v286, %v136
    %v294 = vmul.f32 %v286, %v140
    %v295 = vmul.f32 %v286, %v144
    %v296 = vmul.f32 %v286, %v148
    %306 = vrot.lane.b32.xlu0 %v288, 104
    %v307 = vpop.permute.xlu0 %306
    %308 = vrot.lane.b32.xlu0 %v289, 104
    %v309 = vpop.permute.xlu0 %308
    %310 = vrot.lane.b32.xlu0 %v290, 104
    %v311 = vpop.permute.xlu0 %310
    %312 = vrot.lane.b32.xlu0 %v291, 104
    %v313 = vpop.permute.xlu0 %312
    %314 = vrot.lane.b32.xlu0 %v292, 104
    %v315 = vpop.permute.xlu0 %314
    %316 = vrot.lane.b32.xlu0 %v293, 104
    %v317 = vpop.permute.xlu0 %316
    %318 = vrot.lane.b32.xlu0 %v294, 104
    %v319 = vpop.permute.xlu0 %318
    %320 = vrot.lane.b32.xlu0 %v295, 104
    %v321 = vpop.permute.xlu0 %320
    %322 = vrot.lane.b32.xlu0 %v296, 104
    %v323 = vpop.permute.xlu0 %322
    %vm324 = vcmask 850944
    %v325 = vsel %vm324, %v307, %v309
    %v326 = vsel %vm324, %v309, %v311
    %v327 = vsel %vm324, %v311, %v313
    %v328 = vsel %vm324, %v313, %v315
    %v329 = vsel %vm324, %v315, %v317
    %v330 = vsel %vm324, %v317, %v319
    %v331 = vsel %vm324, %v319, %v321
    %v332 = vsel %vm324, %v321, %v323
    %v341 = vadd.f32 %v276, %v325
    %v342 = vadd.f32 %v277, %v326
    %v343 = vadd.f32 %v278, %v327
    %v344 = vadd.f32 %v279, %v328
    %v345 = vadd.f32 %v280, %v329
    %v346 = vadd.f32 %v281, %v330
    %v347 = vadd.f32 %v282, %v331
    %v348 = vadd.f32 %v283, %v332
    %349 = vset.pattern.permute.xlu0 76
    %350 = vperm.xlu0 %349, %v40
    %v351 = vpop.permute.xlu0 %350
    %v353 = vmul.f32 %v351, %v116
    %v354 = vmul.f32 %v351, %v120
    %v355 = vmul.f32 %v351, %v124
    %v356 = vmul.f32 %v351, %v128
    %v357 = vmul.f32 %v351, %v132
    %v358 = vmul.f32 %v351, %v136
    %v359 = vmul.f32 %v351, %v140
    %v360 = vmul.f32 %v351, %v144
    %v361 = vmul.f32 %v351, %v148
    %371 = vrot.lane.b32.xlu0 %v353, 103
    %v372 = vpop.permute.xlu0 %371
    %373 = vrot.lane.b32.xlu0 %v354, 103
    %v374 = vpop.permute.xlu0 %373
    %375 = vrot.lane.b32.xlu0 %v355, 103
    %v376 = vpop.permute.xlu0 %375
    %377 = vrot.lane.b32.xlu0 %v356, 103
    %v378 = vpop.permute.xlu0 %377
    %379 = vrot.lane.b32.xlu0 %v357, 103
    %v380 = vpop.permute.xlu0 %379
    %381 = vrot.lane.b32.xlu0 %v358, 103
    %v382 = vpop.permute.xlu0 %381
    %383 = vrot.lane.b32.xlu0 %v359, 103
    %v384 = vpop.permute.xlu0 %383
    %385 = vrot.lane.b32.xlu0 %v360, 103
    %v386 = vpop.permute.xlu0 %385
    %387 = vrot.lane.b32.xlu0 %v361, 103
    %v388 = vpop.permute.xlu0 %387
    %vm389 = vcmask 842752
    %v390 = vsel %vm389, %v372, %v374
    %v391 = vsel %vm389, %v374, %v376
    %v392 = vsel %vm389, %v376, %v378
    %v393 = vsel %vm389, %v378, %v380
    %v394 = vsel %vm389, %v380, %v382
    %v395 = vsel %vm389, %v382, %v384
    %v396 = vsel %vm389, %v384, %v386
    %v397 = vsel %vm389, %v386, %v388
    %v406 = vadd.f32 %v341, %v390
    %v407 = vadd.f32 %v342, %v391
    %v408 = vadd.f32 %v343, %v392
    %v409 = vadd.f32 %v344, %v393
    %v410 = vadd.f32 %v345, %v394
    %v411 = vadd.f32 %v346, %v395
    %v412 = vadd.f32 %v347, %v396
    %v413 = vadd.f32 %v348, %v397
    %414 = vset.pattern.permute.xlu0 77
    %415 = vperm.xlu0 %414, %v40
    %v416 = vpop.permute.xlu0 %415
    %v418 = vmul.f32 %v416, %v116
    %v419 = vmul.f32 %v416, %v120
    %v420 = vmul.f32 %v416, %v124
    %v421 = vmul.f32 %v416, %v128
    %v422 = vmul.f32 %v416, %v132
    %v423 = vmul.f32 %v416, %v136
    %v424 = vmul.f32 %v416, %v140
    %v425 = vmul.f32 %v416, %v144
    %v426 = vmul.f32 %v416, %v148
    %436 = vrot.lane.b32.xlu0 %v418, 102
    %v437 = vpop.permute.xlu0 %436
    %438 = vrot.lane.b32.xlu0 %v419, 102
    %v439 = vpop.permute.xlu0 %438
    %440 = vrot.lane.b32.xlu0 %v420, 102
    %v441 = vpop.permute.xlu0 %440
    %442 = vrot.lane.b32.xlu0 %v421, 102
    %v443 = vpop.permute.xlu0 %442
    %444 = vrot.lane.b32.xlu0 %v422, 102
    %v445 = vpop.permute.xlu0 %444
    %446 = vrot.lane.b32.xlu0 %v423, 102
    %v447 = vpop.permute.xlu0 %446
    %448 = vrot.lane.b32.xlu0 %v424, 102
    %v449 = vpop.permute.xlu0 %448
    %450 = vrot.lane.b32.xlu0 %v425, 102
    %v451 = vpop.permute.xlu0 %450
    %452 = vrot.lane.b32.xlu0 %v426, 102
    %v453 = vpop.permute.xlu0 %452
    %vm454 = vcmask 834560
    %v455 = vsel %vm454, %v437, %v439
    %v456 = vsel %vm454, %v439, %v441
    %v457 = vsel %vm454, %v441, %v443
    %v458 = vsel %vm454, %v443, %v445
    %v459 = vsel %vm454, %v445, %v447
    %v460 = vsel %vm454, %v447, %v449
    %v461 = vsel %vm454, %v449, %v451
    %v462 = vsel %vm454, %v451, %v453
    %v471 = vadd.f32 %v406, %v455
    %v472 = vadd.f32 %v407, %v456
    %v473 = vadd.f32 %v408, %v457
    %v474 = vadd.f32 %v409, %v458
    %v475 = vadd.f32 %v410, %v459
    %v476 = vadd.f32 %v411, %v460
    %v477 = vadd.f32 %v412, %v461
    %v478 = vadd.f32 %v413, %v462
    %479 = vset.pattern.permute.xlu0 78
    %480 = vperm.xlu0 %479, %v40
    %v481 = vpop.permute.xlu0 %480
    %v483 = vmul.f32 %v481, %v116
    %v484 = vmul.f32 %v481, %v120
    %v485 = vmul.f32 %v481, %v124
    %v486 = vmul.f32 %v481, %v128
    %v487 = vmul.f32 %v481, %v132
    %v488 = vmul.f32 %v481, %v136
    %v489 = vmul.f32 %v481, %v140
    %v490 = vmul.f32 %v481, %v144
    %v491 = vmul.f32 %v481, %v148
    %501 = vrot.lane.b32.xlu0 %v483, 80
    %v502 = vpop.permute.xlu0 %501
    %503 = vrot.lane.b32.xlu0 %v484, 80
    %v504 = vpop.permute.xlu0 %503
    %505 = vrot.lane.b32.xlu0 %v485, 80
    %v506 = vpop.permute.xlu0 %505
    %507 = vrot.lane.b32.xlu0 %v486, 80
    %v508 = vpop.permute.xlu0 %507
    %509 = vrot.lane.b32.xlu0 %v487, 80
    %v510 = vpop.permute.xlu0 %509
    %511 = vrot.lane.b32.xlu0 %v488, 80
    %v512 = vpop.permute.xlu0 %511
    %513 = vrot.lane.b32.xlu0 %v489, 80
    %v514 = vpop.permute.xlu0 %513
    %515 = vrot.lane.b32.xlu0 %v490, 80
    %v516 = vpop.permute.xlu0 %515
    %517 = vrot.lane.b32.xlu0 %v491, 80
    %v518 = vpop.permute.xlu0 %517
    %vm519 = vcmask 654336
    %v520 = vsel %vm519, %v502, %v504
    %v521 = vsel %vm519, %v504, %v506
    %v522 = vsel %vm519, %v506, %v508
    %v523 = vsel %vm519, %v508, %v510
    %v524 = vsel %vm519, %v510, %v512
    %v525 = vsel %vm519, %v512, %v514
    %v526 = vsel %vm519, %v514, %v516
    %v527 = vsel %vm519, %v516, %v518
    %v536 = vadd.f32 %v471, %v520
    %v537 = vadd.f32 %v472, %v521
    %v538 = vadd.f32 %v473, %v522
    %v539 = vadd.f32 %v474, %v523
    %v540 = vadd.f32 %v475, %v524
    %v541 = vadd.f32 %v476, %v525
    %v542 = vadd.f32 %v477, %v526
    %v543 = vadd.f32 %v478, %v527
    %544 = vset.pattern.permute.xlu0 79
    %545 = vperm.xlu0 %544, %v40
    %v546 = vpop.permute.xlu0 %545
    %v548 = vmul.f32 %v546, %v116
    %v549 = vmul.f32 %v546, %v120
    %v550 = vmul.f32 %v546, %v124
    %v551 = vmul.f32 %v546, %v128
    %v552 = vmul.f32 %v546, %v132
    %v553 = vmul.f32 %v546, %v136
    %v554 = vmul.f32 %v546, %v140
    %v555 = vmul.f32 %v546, %v144
    %v556 = vmul.f32 %v546, %v148
    %566 = vrot.lane.b32.xlu0 %v548, 79
    %v567 = vpop.permute.xlu0 %566
    %568 = vrot.lane.b32.xlu0 %v549, 79
    %v569 = vpop.permute.xlu0 %568
    %570 = vrot.lane.b32.xlu0 %v550, 79
    %v571 = vpop.permute.xlu0 %570
    %572 = vrot.lane.b32.xlu0 %v551, 79
    %v573 = vpop.permute.xlu0 %572
    %574 = vrot.lane.b32.xlu0 %v552, 79
    %v575 = vpop.permute.xlu0 %574
    %576 = vrot.lane.b32.xlu0 %v553, 79
    %v577 = vpop.permute.xlu0 %576
    %578 = vrot.lane.b32.xlu0 %v554, 79
    %v579 = vpop.permute.xlu0 %578
    %580 = vrot.lane.b32.xlu0 %v555, 79
    %v581 = vpop.permute.xlu0 %580
    %582 = vrot.lane.b32.xlu0 %v556, 79
    %v583 = vpop.permute.xlu0 %582
    %vm584 = vcmask 646144
    %v585 = vsel %vm584, %v567, %v569
    %v586 = vsel %vm584, %v569, %v571
    %v587 = vsel %vm584, %v571, %v573
    %v588 = vsel %vm584, %v573, %v575
    %v589 = vsel %vm584, %v575, %v577
    %v590 = vsel %vm584, %v577, %v579
    %v591 = vsel %vm584, %v579, %v581
    %v592 = vsel %vm584, %v581, %v583
    %v601 = vadd.f32 %v536, %v585
    %v602 = vadd.f32 %v537, %v586
    %v603 = vadd.f32 %v538, %v587
    %v604 = vadd.f32 %v539, %v588
    %v605 = vadd.f32 %v540, %v589
    %v606 = vadd.f32 %v541, %v590
    %v607 = vadd.f32 %v542, %v591
    %v608 = vadd.f32 %v543, %v592
    %609 = vset.pattern.permute.xlu0 80
    %610 = vperm.xlu0 %609, %v40
    %v611 = vpop.permute.xlu0 %610
    %v613 = vmul.f32 %v611, %v116
    %v614 = vmul.f32 %v611, %v120
    %v615 = vmul.f32 %v611, %v124
    %v616 = vmul.f32 %v611, %v128
    %v617 = vmul.f32 %v611, %v132
    %v618 = vmul.f32 %v611, %v136
    %v619 = vmul.f32 %v611, %v140
    %v620 = vmul.f32 %v611, %v144
    %v621 = vmul.f32 %v611, %v148
    %631 = vrot.lane.b32.xlu0 %v613, 78
    %v632 = vpop.permute.xlu0 %631
    %633 = vrot.lane.b32.xlu0 %v614, 78
    %v634 = vpop.permute.xlu0 %633
    %635 = vrot.lane.b32.xlu0 %v615, 78
    %v636 = vpop.permute.xlu0 %635
    %637 = vrot.lane.b32.xlu0 %v616, 78
    %v638 = vpop.permute.xlu0 %637
    %639 = vrot.lane.b32.xlu0 %v617, 78
    %v640 = vpop.permute.xlu0 %639
    %641 = vrot.lane.b32.xlu0 %v618, 78
    %v642 = vpop.permute.xlu0 %641
    %643 = vrot.lane.b32.xlu0 %v619, 78
    %v644 = vpop.permute.xlu0 %643
    %645 = vrot.lane.b32.xlu0 %v620, 78
    %v646 = vpop.permute.xlu0 %645
    %647 = vrot.lane.b32.xlu0 %v621, 78
    %v648 = vpop.permute.xlu0 %647
    %vm649 = vcmask 637952
    %v650 = vsel %vm649, %v632, %v634
    %v651 = vsel %vm649, %v634, %v636
    %v652 = vsel %vm649, %v636, %v638
    %v653 = vsel %vm649, %v638, %v640
    %v654 = vsel %vm649, %v640, %v642
    %v655 = vsel %vm649, %v642, %v644
    %v656 = vsel %vm649, %v644, %v646
    %v657 = vsel %vm649, %v646, %v648
    %v666 = vadd.f32 %v601, %v650
    %v667 = vadd.f32 %v602, %v651
    %v668 = vadd.f32 %v603, %v652
    %v669 = vadd.f32 %v604, %v653
    %v670 = vadd.f32 %v605, %v654
    %v671 = vadd.f32 %v606, %v655
    %v672 = vadd.f32 %v607, %v656
    %v673 = vadd.f32 %v608, %v657
    %674 = vset.pattern.permute.xlu0 81
    %675 = vperm.xlu0 %674, %v40
    %v676 = vpop.permute.xlu0 %675
    %v678 = vadd.f32 %v666, %v676
    %v679 = vadd.f32 %v667, %v676
    %v680 = vadd.f32 %v668, %v676
    %v681 = vadd.f32 %v669, %v676
    %v682 = vadd.f32 %v670, %v676
    %v683 = vadd.f32 %v671, %v676
    %v684 = vadd.f32 %v672, %v676
    %v685 = vadd.f32 %v673, %v676
    %v687 = vlaneseq
    %v688 = vshrl.u32 %v687, 7
    %v689 = vsub.s32 0, %v688
    %v690 = vrot.slane %v39, %v689
    %v691 = vlaneseq
    %v692 = vshrl.u32 %v691, 7
    %v693 = vsub.s32 1, %v692
    %v694 = vrot.slane %v39, %v693
    %v695 = vlaneseq
    %v696 = vshrl.u32 %v695, 7
    %v697 = vsub.s32 2, %v696
    %v698 = vrot.slane %v39, %v697
    %v699 = vlaneseq
    %v700 = vshrl.u32 %v699, 7
    %v701 = vsub.s32 3, %v700
    %v702 = vrot.slane %v39, %v701
    %v703 = vlaneseq
    %v704 = vshrl.u32 %v703, 7
    %v705 = vsub.s32 4, %v704
    %v706 = vrot.slane %v39, %v705
    %v707 = vlaneseq
    %v708 = vshrl.u32 %v707, 7
    %v709 = vsub.s32 5, %v708
    %v710 = vrot.slane %v39, %v709
    %v711 = vlaneseq
    %v712 = vshrl.u32 %v711, 7
    %v713 = vsub.s32 6, %v712
    %v714 = vrot.slane %v39, %v713
    %v715 = vlaneseq
    %v716 = vshrl.u32 %v715, 7
    %v717 = vsub.s32 7, %v716
    %v718 = vrot.slane %v39, %v717
    %v727 = vmul.f32 %v678, %v690
    %v728 = vmul.f32 %v679, %v694
    %v729 = vmul.f32 %v680, %v698
    %v730 = vmul.f32 %v681, %v702
    %v731 = vmul.f32 %v682, %v706
    %v732 = vmul.f32 %v683, %v710
    %v733 = vmul.f32 %v684, %v714
    %v734 = vmul.f32 %v685, %v718
    %v735 = vadd.f32 %v727, %v728
    %v736 = vadd.f32 %v735, %v729
    %v737 = vadd.f32 %v736, %v730
    %v738 = vadd.f32 %v737, %v731
    %v739 = vadd.f32 %v738, %v732
    %v740 = vadd.f32 %v739, %v733
    %v741 = vadd.f32 %v740, %v734
    %742 = vadd.xlane.f32.xlu0 %v741
    %v743 = vpop.xlane.xlu0 %742
    %v744 = vmul.f32 %v727, %v727
    %v745 = vmul.f32 %v728, %v728
    %v746 = vmul.f32 %v729, %v729
    %v747 = vmul.f32 %v730, %v730
    %v748 = vmul.f32 %v731, %v731
    %v749 = vmul.f32 %v732, %v732
    %v750 = vmul.f32 %v733, %v733
    %v751 = vmul.f32 %v734, %v734
    %v752 = vadd.f32 %v744, %v745
    %v753 = vadd.f32 %v752, %v746
    %v754 = vadd.f32 %v753, %v747
    %v755 = vadd.f32 %v754, %v748
    %v756 = vadd.f32 %v755, %v749
    %v757 = vadd.f32 %v756, %v750
    %v758 = vadd.f32 %v757, %v751
    %759 = vadd.xlane.f32.xlu0 %v758
    %v760 = vpop.xlane.xlu0 %759
    %v761 = vmul.f32 %v743, 0.001953125
    %v762 = vmul.f32 %v760, 0.001953125
    %v763 = vmul.f32 %v761, %v761
    %v764 = vsub.f32 %v762, %v763
    %v765 = vadd.f32 %v764, 1e-05
    %v766 = vrsqrt.pop %v765
    %v767 = vmul.f32 %v766, %v40
    %v768 = vmul.f32 %v761, %v767
    %770 = vrot.lane.b32.xlu0 %v768, 1
    %v771 = vpop.permute.xlu0 %770
    %v773 = vsub.f32 %v40, %v771
    %775 = vset.pattern.permute.xlu0 82
    %776 = vperm.xlu0 %775, %v767
    %v777 = vpop.permute.xlu0 %776
    %v779 = vmul.f32 %v678, %v777
    %v780 = vmul.f32 %v679, %v777
    %v781 = vmul.f32 %v680, %v777
    %v782 = vmul.f32 %v681, %v777
    %v783 = vmul.f32 %v682, %v777
    %v784 = vmul.f32 %v683, %v777
    %v785 = vmul.f32 %v684, %v777
    %v786 = vmul.f32 %v685, %v777
    %788 = vset.pattern.permute.xlu0 83
    %789 = vperm.xlu0 %788, %v773
    %v790 = vpop.permute.xlu0 %789
    %v792 = vadd.f32 %v779, %v790
    %v793 = vadd.f32 %v780, %v790
    %v794 = vadd.f32 %v781, %v790
    %v795 = vadd.f32 %v782, %v790
    %v796 = vadd.f32 %v783, %v790
    %v797 = vadd.f32 %v784, %v790
    %v798 = vadd.f32 %v785, %v790
    %v799 = vadd.f32 %v786, %v790
    %v800 = vmax.f32 %v792, 0.0
    %v801 = vmax.f32 %v793, 0.0
    %v802 = vmax.f32 %v794, 0.0
    %v803 = vmax.f32 %v795, 0.0
    %v804 = vmax.f32 %v796, 0.0
    %v805 = vmax.f32 %v797, 0.0
    %v806 = vmax.f32 %v798, 0.0
    %v807 = vmax.f32 %v799, 0.0
    %v808 = vmul.f32 %v800, %v690
    %v809 = vmul.f32 %v801, %v694
    %v810 = vmul.f32 %v802, %v698
    %v811 = vmul.f32 %v803, %v702
    %v812 = vmul.f32 %v804, %v706
    %v813 = vmul.f32 %v805, %v710
    %v814 = vmul.f32 %v806, %v714
    %v815 = vmul.f32 %v807, %v718
    %816 = vrot.lane.b32.xlu0 %v808, 25
    %v817 = vpop.permute.xlu0 %816
    %818 = vrot.lane.b32.xlu0 %v809, 25
    %v819 = vpop.permute.xlu0 %818
    %820 = vrot.lane.b32.xlu0 %v810, 25
    %v821 = vpop.permute.xlu0 %820
    %822 = vrot.lane.b32.xlu0 %v811, 25
    %v823 = vpop.permute.xlu0 %822
    %824 = vrot.lane.b32.xlu0 %v812, 25
    %v825 = vpop.permute.xlu0 %824
    %826 = vrot.lane.b32.xlu0 %v813, 25
    %v827 = vpop.permute.xlu0 %826
    %828 = vrot.lane.b32.xlu0 %v814, 25
    %v829 = vpop.permute.xlu0 %828
    %830 = vrot.lane.b32.xlu0 %v815, 25
    %v831 = vpop.permute.xlu0 %830
    %v832 = vlaneseq
    %v833 = vand.u32 %v832, 127
    %vm834 = vcmp.lt.s32.totalorder %v833, 25
    %v835 = vsel %vm834, %v829, %v831
    %v836 = vsel %vm834, %v827, %v829
    %v837 = vsel %vm834, %v825, %v827
    %v838 = vsel %vm834, %v823, %v825
    %v839 = vsel %vm834, %v821, %v823
    %v840 = vsel %vm834, %v819, %v821
    %v841 = vsel %vm834, %v817, %v819
    %v842 = vsel %vm834, %v831, %v817
    %843 = vst [vmem:[#allocation2] sm:$0xff] %v842
    %844 = vst [vmem:[#allocation2 + $0x8] sm:$0xff] %v841
    %845 = vst [vmem:[#allocation2 + $0x10] sm:$0xff] %v840
    %846 = vst [vmem:[#allocation2 + $0x18] sm:$0xff] %v839
    %847 = vst [vmem:[#allocation2 + $0x20] sm:$0xff] %v838
    %848 = vst [vmem:[#allocation2 + $0x28] sm:$0xff] %v837
    %849 = vst [vmem:[#allocation2 + $0x30] sm:$0xff] %v836
    %850 = vst [vmem:[#allocation2 + $0x38] sm:$0xff] %v835
    %851 = vrot.lane.b32.xlu0 %v808, 24
    %v852 = vpop.permute.xlu0 %851
    %853 = vrot.lane.b32.xlu0 %v809, 24
    %v854 = vpop.permute.xlu0 %853
    %855 = vrot.lane.b32.xlu0 %v810, 24
    %v856 = vpop.permute.xlu0 %855
    %857 = vrot.lane.b32.xlu0 %v811, 24
    %v858 = vpop.permute.xlu0 %857
    %859 = vrot.lane.b32.xlu0 %v812, 24
    %v860 = vpop.permute.xlu0 %859
    %861 = vrot.lane.b32.xlu0 %v813, 24
    %v862 = vpop.permute.xlu0 %861
    %863 = vrot.lane.b32.xlu0 %v814, 24
    %v864 = vpop.permute.xlu0 %863
    %865 = vrot.lane.b32.xlu0 %v815, 24
    %v866 = vpop.permute.xlu0 %865
    %vm867 = vcmp.lt.s32.totalorder %v833, 24
    %v868 = vsel %vm867, %v864, %v866
    %v869 = vsel %vm867, %v862, %v864
    %v870 = vsel %vm867, %v860, %v862
    %v871 = vsel %vm867, %v858, %v860
    %v872 = vsel %vm867, %v856, %v858
    %v873 = vsel %vm867, %v854, %v856
    %v874 = vsel %vm867, %v852, %v854
    %v875 = vsel %vm867, %v866, %v852
    %876 = vst [vmem:[#allocation2 + $0x40] sm:$0xff] %v875
    %877 = vst [vmem:[#allocation2 + $0x48] sm:$0xff] %v874
    %878 = vst [vmem:[#allocation2 + $0x50] sm:$0xff] %v873
    %879 = vst [vmem:[#allocation2 + $0x58] sm:$0xff] %v872
    %880 = vst [vmem:[#allocation2 + $0x60] sm:$0xff] %v871
    %881 = vst [vmem:[#allocation2 + $0x68] sm:$0xff] %v870
    %882 = vst [vmem:[#allocation2 + $0x70] sm:$0xff] %v869
    %883 = vst [vmem:[#allocation2 + $0x78] sm:$0xff] %v868
    %884 = vrot.lane.b32.xlu0 %v808, 23
    %v885 = vpop.permute.xlu0 %884
    %886 = vrot.lane.b32.xlu0 %v809, 23
    %v887 = vpop.permute.xlu0 %886
    %888 = vrot.lane.b32.xlu0 %v810, 23
    %v889 = vpop.permute.xlu0 %888
    %890 = vrot.lane.b32.xlu0 %v811, 23
    %v891 = vpop.permute.xlu0 %890
    %892 = vrot.lane.b32.xlu0 %v812, 23
    %v893 = vpop.permute.xlu0 %892
    %894 = vrot.lane.b32.xlu0 %v813, 23
    %v895 = vpop.permute.xlu0 %894
    %896 = vrot.lane.b32.xlu0 %v814, 23
    %v897 = vpop.permute.xlu0 %896
    %898 = vrot.lane.b32.xlu0 %v815, 23
    %v899 = vpop.permute.xlu0 %898
    %vm900 = vcmp.lt.s32.totalorder %v833, 23
    %v901 = vsel %vm900, %v897, %v899
    %v902 = vsel %vm900, %v895, %v897
    %v903 = vsel %vm900, %v893, %v895
    %v904 = vsel %vm900, %v891, %v893
    %v905 = vsel %vm900, %v889, %v891
    %v906 = vsel %vm900, %v887, %v889
    %v907 = vsel %vm900, %v885, %v887
    %v908 = vsel %vm900, %v899, %v885
    %909 = vst [vmem:[#allocation2 + $0x80] sm:$0xff] %v908
    %910 = vst [vmem:[#allocation2 + $0x88] sm:$0xff] %v907
    %911 = vst [vmem:[#allocation2 + $0x90] sm:$0xff] %v906
    %912 = vst [vmem:[#allocation2 + $0x98] sm:$0xff] %v905
    %913 = vst [vmem:[#allocation2 + $0xa0] sm:$0xff] %v904
    %914 = vst [vmem:[#allocation2 + $0xa8] sm:$0xff] %v903
    %915 = vst [vmem:[#allocation2 + $0xb0] sm:$0xff] %v902
    %916 = vst [vmem:[#allocation2 + $0xb8] sm:$0xff] %v901
    %917 = vrot.lane.b32.xlu0 %v808, 1
    %v918 = vpop.permute.xlu0 %917
    %919 = vrot.lane.b32.xlu0 %v809, 1
    %v920 = vpop.permute.xlu0 %919
    %921 = vrot.lane.b32.xlu0 %v810, 1
    %v922 = vpop.permute.xlu0 %921
    %923 = vrot.lane.b32.xlu0 %v811, 1
    %v924 = vpop.permute.xlu0 %923
    %925 = vrot.lane.b32.xlu0 %v812, 1
    %v926 = vpop.permute.xlu0 %925
    %927 = vrot.lane.b32.xlu0 %v813, 1
    %v928 = vpop.permute.xlu0 %927
    %929 = vrot.lane.b32.xlu0 %v814, 1
    %v930 = vpop.permute.xlu0 %929
    %931 = vrot.lane.b32.xlu0 %v815, 1
    %v932 = vpop.permute.xlu0 %931
    %vm933 = vcmp.lt.s32.totalorder %v833, 1
    %v934 = vsel %vm933, %v930, %v932
    %v935 = vsel %vm933, %v928, %v930
    %v936 = vsel %vm933, %v926, %v928
    %v937 = vsel %vm933, %v924, %v926
    %v938 = vsel %vm933, %v922, %v924
    %v939 = vsel %vm933, %v920, %v922
    %v940 = vsel %vm933, %v918, %v920
    %v941 = vsel %vm933, %v932, %v918
    %942 = vst [vmem:[#allocation2 + $0xc0] sm:$0xff] %v941
    %943 = vst [vmem:[#allocation2 + $0xc8] sm:$0xff] %v940
    %944 = vst [vmem:[#allocation2 + $0xd0] sm:$0xff] %v939
    %945 = vst [vmem:[#allocation2 + $0xd8] sm:$0xff] %v938
    %946 = vst [vmem:[#allocation2 + $0xe0] sm:$0xff] %v937
    %947 = vst [vmem:[#allocation2 + $0xe8] sm:$0xff] %v936
    %948 = vst [vmem:[#allocation2 + $0xf0] sm:$0xff] %v935
    %949 = vst [vmem:[#allocation2 + $0xf8] sm:$0xff] %v934
    %950 = vst [vmem:[#allocation2 + $0x100] sm:$0xff] %v808
    %951 = vst [vmem:[#allocation2 + $0x108] sm:$0xff] %v809
    %952 = vst [vmem:[#allocation2 + $0x110] sm:$0xff] %v810
    %953 = vst [vmem:[#allocation2 + $0x118] sm:$0xff] %v811
    %954 = vst [vmem:[#allocation2 + $0x120] sm:$0xff] %v812
    %955 = vst [vmem:[#allocation2 + $0x128] sm:$0xff] %v813
    %956 = vst [vmem:[#allocation2 + $0x130] sm:$0xff] %v814
    %957 = vst [vmem:[#allocation2 + $0x138] sm:$0xff] %v815
    %958 = vrot.lane.b32.xlu0 %v808, 127
    %v959 = vpop.permute.xlu0 %958
    %960 = vrot.lane.b32.xlu0 %v809, 127
    %v961 = vpop.permute.xlu0 %960
    %962 = vrot.lane.b32.xlu0 %v810, 127
    %v963 = vpop.permute.xlu0 %962
    %964 = vrot.lane.b32.xlu0 %v811, 127
    %v965 = vpop.permute.xlu0 %964
    %966 = vrot.lane.b32.xlu0 %v812, 127
    %v967 = vpop.permute.xlu0 %966
    %968 = vrot.lane.b32.xlu0 %v813, 127
    %v969 = vpop.permute.xlu0 %968
    %970 = vrot.lane.b32.xlu0 %v814, 127
    %v971 = vpop.permute.xlu0 %970
    %972 = vrot.lane.b32.xlu0 %v815, 127
    %v973 = vpop.permute.xlu0 %972
    %vm974 = vcmp.lt.s32.totalorder %v833, 127
    %v975 = vsel %vm974, %v971, %v973
    %v976 = vsel %vm974, %v969, %v971
    %v977 = vsel %vm974, %v967, %v969
    %v978 = vsel %vm974, %v965, %v967
    %v979 = vsel %vm974, %v963, %v965
    %v980 = vsel %vm974, %v961, %v963
    %v981 = vsel %vm974, %v959, %v961
    %v982 = vsel %vm974, %v973, %v959
    %983 = vst [vmem:[#allocation2 + $0x140] sm:$0xff] %v981
    %984 = vst [vmem:[#allocation2 + $0x148] sm:$0xff] %v980
    %985 = vst [vmem:[#allocation2 + $0x150] sm:$0xff] %v979
    %986 = vst [vmem:[#allocation2 + $0x158] sm:$0xff] %v978
    %987 = vst [vmem:[#allocation2 + $0x160] sm:$0xff] %v977
    %988 = vst [vmem:[#allocation2 + $0x168] sm:$0xff] %v976
    %989 = vst [vmem:[#allocation2 + $0x170] sm:$0xff] %v975
    %990 = vst [vmem:[#allocation2 + $0x178] sm:$0xff] %v982
    %991 = vrot.lane.b32.xlu0 %v808, 105
    %v992 = vpop.permute.xlu0 %991
    %993 = vrot.lane.b32.xlu0 %v809, 105
    %v994 = vpop.permute.xlu0 %993
    %995 = vrot.lane.b32.xlu0 %v810, 105
    %v996 = vpop.permute.xlu0 %995
    %997 = vrot.lane.b32.xlu0 %v811, 105
    %v998 = vpop.permute.xlu0 %997
    %999 = vrot.lane.b32.xlu0 %v812, 105
    %v1000 = vpop.permute.xlu0 %999
    %1001 = vrot.lane.b32.xlu0 %v813, 105
    %v1002 = vpop.permute.xlu0 %1001
    %1003 = vrot.lane.b32.xlu0 %v814, 105
    %v1004 = vpop.permute.xlu0 %1003
    %1005 = vrot.lane.b32.xlu0 %v815, 105
    %v1006 = vpop.permute.xlu0 %1005
    %vm1007 = vcmp.lt.s32.totalorder %v833, 105
    %v1008 = vsel %vm1007, %v1004, %v1006
    %v1009 = vsel %vm1007, %v1002, %v1004
    %v1010 = vsel %vm1007, %v1000, %v1002
    %v1011 = vsel %vm1007, %v998, %v1000
    %v1012 = vsel %vm1007, %v996, %v998
    %v1013 = vsel %vm1007, %v994, %v996
    %v1014 = vsel %vm1007, %v992, %v994
    %v1015 = vsel %vm1007, %v1006, %v992
    %1016 = vst [vmem:[#allocation2 + $0x180] sm:$0xff] %v1014
    %1017 = vst [vmem:[#allocation2 + $0x188] sm:$0xff] %v1013
    %1018 = vst [vmem:[#allocation2 + $0x190] sm:$0xff] %v1012
    %1019 = vst [vmem:[#allocation2 + $0x198] sm:$0xff] %v1011
    %1020 = vst [vmem:[#allocation2 + $0x1a0] sm:$0xff] %v1010
    %1021 = vst [vmem:[#allocation2 + $0x1a8] sm:$0xff] %v1009
    %1022 = vst [vmem:[#allocation2 + $0x1b0] sm:$0xff] %v1008
    %1023 = vst [vmem:[#allocation2 + $0x1b8] sm:$0xff] %v1015
    %1024 = vrot.lane.b32.xlu0 %v808, 104
    %v1025 = vpop.permute.xlu0 %1024
    %1026 = vrot.lane.b32.xlu0 %v809, 104
    %v1027 = vpop.permute.xlu0 %1026
    %1028 = vrot.lane.b32.xlu0 %v810, 104
    %v1029 = vpop.permute.xlu0 %1028
    %1030 = vrot.lane.b32.xlu0 %v811, 104
    %v1031 = vpop.permute.xlu0 %1030
    %1032 = vrot.lane.b32.xlu0 %v812, 104
    %v1033 = vpop.permute.xlu0 %1032
    %1034 = vrot.lane.b32.xlu0 %v813, 104
    %v1035 = vpop.permute.xlu0 %1034
    %1036 = vrot.lane.b32.xlu0 %v814, 104
    %v1037 = vpop.permute.xlu0 %1036
    %1038 = vrot.lane.b32.xlu0 %v815, 104
    %v1039 = vpop.permute.xlu0 %1038
    %vm1040 = vcmp.lt.s32.totalorder %v833, 104
    %v1041 = vsel %vm1040, %v1037, %v1039
    %v1042 = vsel %vm1040, %v1035, %v1037
    %v1043 = vsel %vm1040, %v1033, %v1035
    %v1044 = vsel %vm1040, %v1031, %v1033
    %v1045 = vsel %vm1040, %v1029, %v1031
    %v1046 = vsel %vm1040, %v1027, %v1029
    %v1047 = vsel %vm1040, %v1025, %v1027
    %v1048 = vsel %vm1040, %v1039, %v1025
    %1049 = vst [vmem:[#allocation2 + $0x1c0] sm:$0xff] %v1047
    %1050 = vst [vmem:[#allocation2 + $0x1c8] sm:$0xff] %v1046
    %1051 = vst [vmem:[#allocation2 + $0x1d0] sm:$0xff] %v1045
    %1052 = vst [vmem:[#allocation2 + $0x1d8] sm:$0xff] %v1044
    %1053 = vst [vmem:[#allocation2 + $0x1e0] sm:$0xff] %v1043
    %1054 = vst [vmem:[#allocation2 + $0x1e8] sm:$0xff] %v1042
    %1055 = vst [vmem:[#allocation2 + $0x1f0] sm:$0xff] %v1041
    %1056 = vst [vmem:[#allocation2 + $0x1f8] sm:$0xff] %v1048
    %1057 = vrot.lane.b32.xlu0 %v808, 103
    %v1058 = vpop.permute.xlu0 %1057
    %1059 = vrot.lane.b32.xlu0 %v809, 103
    %v1060 = vpop.permute.xlu0 %1059
    %1061 = vrot.lane.b32.xlu0 %v810, 103
    %v1062 = vpop.permute.xlu0 %1061
    %1063 = vrot.lane.b32.xlu0 %v811, 103
    %v1064 = vpop.permute.xlu0 %1063
    %1065 = vrot.lane.b32.xlu0 %v812, 103
    %v1066 = vpop.permute.xlu0 %1065
    %1067 = vrot.lane.b32.xlu0 %v813, 103
    %v1068 = vpop.permute.xlu0 %1067
    %1069 = vrot.lane.b32.xlu0 %v814, 103
    %v1070 = vpop.permute.xlu0 %1069
    %1071 = vrot.lane.b32.xlu0 %v815, 103
    %v1072 = vpop.permute.xlu0 %1071
    %vm1073 = vcmp.lt.s32.totalorder %v833, 103
    %v1074 = vsel %vm1073, %v1070, %v1072
    %v1075 = vsel %vm1073, %v1068, %v1070
    %v1076 = vsel %vm1073, %v1066, %v1068
    %v1077 = vsel %vm1073, %v1064, %v1066
    %v1078 = vsel %vm1073, %v1062, %v1064
    %v1079 = vsel %vm1073, %v1060, %v1062
    %v1080 = vsel %vm1073, %v1058, %v1060
    %v1081 = vsel %vm1073, %v1072, %v1058
    %1082 = vst [vmem:[#allocation2 + $0x200] sm:$0xff] %v1080
    %1083 = vst [vmem:[#allocation2 + $0x208] sm:$0xff] %v1079
    %1084 = vst [vmem:[#allocation2 + $0x210] sm:$0xff] %v1078
    %1085 = vst [vmem:[#allocation2 + $0x218] sm:$0xff] %v1077
    %1086 = vst [vmem:[#allocation2 + $0x220] sm:$0xff] %v1076
    %1087 = vst [vmem:[#allocation2 + $0x228] sm:$0xff] %v1075
    %1088 = vst [vmem:[#allocation2 + $0x230] sm:$0xff] %v1074
    %1089 = vst [vmem:[#allocation2 + $0x238] sm:$0xff] %v1081
    %v1090 = vld [vmem:[#allocation6] sm:$0xff]
    %v1091 = vld [vmem:[#allocation2] sm:$0xff]
    %v1092 = vld [vmem:[#allocation2 + $0x8] sm:$0xff]
    %v1093 = vld [vmem:[#allocation2 + $0x10] sm:$0xff]
    %v1094 = vld [vmem:[#allocation2 + $0x18] sm:$0xff]
    %v1095 = vld [vmem:[#allocation2 + $0x20] sm:$0xff]
    %v1096 = vld [vmem:[#allocation2 + $0x28] sm:$0xff]
    %v1097 = vld [vmem:[#allocation2 + $0x30] sm:$0xff]
    %v1098 = vld [vmem:[#allocation2 + $0x38] sm:$0xff]
    %v1099 = vld [vmem:[#allocation2 + $0x40] sm:$0xff]
    %v1100 = vld [vmem:[#allocation2 + $0x48] sm:$0xff]
    %v1101 = vld [vmem:[#allocation2 + $0x50] sm:$0xff]
    %v1102 = vld [vmem:[#allocation2 + $0x58] sm:$0xff]
    %v1103 = vld [vmem:[#allocation2 + $0x60] sm:$0xff]
    %v1104 = vld [vmem:[#allocation2 + $0x68] sm:$0xff]
    %v1105 = vld [vmem:[#allocation2 + $0x70] sm:$0xff]
    %v1106 = vld [vmem:[#allocation2 + $0x78] sm:$0xff]
    %v1107 = vld [vmem:[#allocation2 + $0x80] sm:$0xff]
    %v1108 = vld [vmem:[#allocation2 + $0x88] sm:$0xff]
    %v1109 = vld [vmem:[#allocation2 + $0x90] sm:$0xff]
    %v1110 = vld [vmem:[#allocation2 + $0x98] sm:$0xff]
    %v1111 = vld [vmem:[#allocation2 + $0xa0] sm:$0xff]
    %v1112 = vld [vmem:[#allocation2 + $0xa8] sm:$0xff]
    %v1113 = vld [vmem:[#allocation2 + $0xb0] sm:$0xff]
    %v1114 = vld [vmem:[#allocation2 + $0xb8] sm:$0xff]
    %v1115 = vld [vmem:[#allocation2 + $0xc0] sm:$0xff]
    %v1116 = vld [vmem:[#allocation2 + $0xc8] sm:$0xff]
    %v1117 = vld [vmem:[#allocation2 + $0xd0] sm:$0xff]
    %v1118 = vld [vmem:[#allocation2 + $0xd8] sm:$0xff]
    %v1119 = vld [vmem:[#allocation2 + $0xe0] sm:$0xff]
    %v1120 = vld [vmem:[#allocation2 + $0xe8] sm:$0xff]
    %v1121 = vld [vmem:[#allocation2 + $0xf0] sm:$0xff]
    %v1122 = vld [vmem:[#allocation2 + $0xf8] sm:$0xff]
    %v1123 = vld [vmem:[#allocation2 + $0x100] sm:$0xff]
    %v1124 = vld [vmem:[#allocation2 + $0x108] sm:$0xff]
    %v1125 = vld [vmem:[#allocation2 + $0x110] sm:$0xff]
    %v1126 = vld [vmem:[#allocation2 + $0x118] sm:$0xff]
    %v1127 = vld [vmem:[#allocation2 + $0x120] sm:$0xff]
    %v1128 = vld [vmem:[#allocation2 + $0x128] sm:$0xff]
    %v1129 = vld [vmem:[#allocation2 + $0x130] sm:$0xff]
    %v1130 = vld [vmem:[#allocation2 + $0x138] sm:$0xff]
    %v1131 = vld [vmem:[#allocation2 + $0x140] sm:$0xff]
    %v1132 = vld [vmem:[#allocation2 + $0x148] sm:$0xff]
    %v1133 = vld [vmem:[#allocation2 + $0x150] sm:$0xff]
    %v1134 = vld [vmem:[#allocation2 + $0x158] sm:$0xff]
    %v1135 = vld [vmem:[#allocation2 + $0x160] sm:$0xff]
    %v1136 = vld [vmem:[#allocation2 + $0x168] sm:$0xff]
    %v1137 = vld [vmem:[#allocation2 + $0x170] sm:$0xff]
    %v1138 = vld [vmem:[#allocation2 + $0x178] sm:$0xff]
    %v1139 = vld [vmem:[#allocation2 + $0x180] sm:$0xff]
    %v1140 = vld [vmem:[#allocation2 + $0x188] sm:$0xff]
    %v1141 = vld [vmem:[#allocation2 + $0x190] sm:$0xff]
    %v1142 = vld [vmem:[#allocation2 + $0x198] sm:$0xff]
    %v1143 = vld [vmem:[#allocation2 + $0x1a0] sm:$0xff]
    %v1144 = vld [vmem:[#allocation2 + $0x1a8] sm:$0xff]
    %v1145 = vld [vmem:[#allocation2 + $0x1b0] sm:$0xff]
    %v1146 = vld [vmem:[#allocation2 + $0x1b8] sm:$0xff]
    %v1147 = vld [vmem:[#allocation2 + $0x1c0] sm:$0xff]
    %v1148 = vld [vmem:[#allocation2 + $0x1c8] sm:$0xff]
    %v1149 = vld [vmem:[#allocation2 + $0x1d0] sm:$0xff]
    %v1150 = vld [vmem:[#allocation2 + $0x1d8] sm:$0xff]
    %v1151 = vld [vmem:[#allocation2 + $0x1e0] sm:$0xff]
    %v1152 = vld [vmem:[#allocation2 + $0x1e8] sm:$0xff]
    %v1153 = vld [vmem:[#allocation2 + $0x1f0] sm:$0xff]
    %v1154 = vld [vmem:[#allocation2 + $0x1f8] sm:$0xff]
    %v1155 = vld [vmem:[#allocation2 + $0x200] sm:$0xff]
    %v1156 = vld [vmem:[#allocation2 + $0x208] sm:$0xff]
    %v1157 = vld [vmem:[#allocation2 + $0x210] sm:$0xff]
    %v1158 = vld [vmem:[#allocation2 + $0x218] sm:$0xff]
    %v1159 = vld [vmem:[#allocation2 + $0x220] sm:$0xff]
    %v1160 = vld [vmem:[#allocation2 + $0x228] sm:$0xff]
    %v1161 = vld [vmem:[#allocation2 + $0x230] sm:$0xff]
    %v1162 = vld [vmem:[#allocation2 + $0x238] sm:$0xff]
    %1164 = vset.pattern.permute.xlu0 84
    %1165 = vperm.xlu0 %1164, %v1090
    %v1166 = vpop.permute.xlu0 %1165
    %vm1168 = vcmask 588800
    %v1169 = vsel %vm1168, %v1090, 0
    %1171 = vmatprep.subr.mxu0 0.0
    %1172 = vmatpush1.msra.mxu0 0.0
    %1173 = vmatprep.subr.mxu0 0.0
    %1174 = vmatpush1.msra.mxu0 0.0
    %1175 = vmatprep.subr.mxu0 0.0
    %1176 = vmatpush1.msra.mxu0 0.0
    %1177 = vmatprep.subr.mxu0 0.0
    %1178 = vmatpush1.msra.mxu0 0.0
    %1179 = vmatprep.subr.mxu0 0.0
    %1180 = vmatpush1.msra.mxu0 0.0
    %1181 = vmatprep.subr.mxu0 0.0
    %1182 = vmatpush1.msra.mxu0 0.0
    %1183 = vmatprep.subr.mxu0 0.0
    %1184 = vmatpush1.msra.mxu0 0.0
    %1185 = vmatprep.subr.mxu0 %v1156
    %1186 = vmatpush1.msra.mxu0 %v1155
    %1187 = vmatprep.subr.mxu0 %v1148
    %1188 = vmatpush1.msra.mxu0 %v1147
    %1189 = vmatprep.subr.mxu0 %v1140
    %1190 = vmatpush1.msra.mxu0 %v1139
    %1191 = vmatprep.subr.mxu0 %v1132
    %1192 = vmatpush1.msra.mxu0 %v1131
    %1193 = vmatprep.subr.mxu0 %v1124
    %1194 = vmatpush1.msra.mxu0 %v1123
    %1195 = vmatprep.subr.mxu0 %v1116
    %1196 = vmatpush1.msra.mxu0 %v1115
    %1197 = vmatprep.subr.mxu0 %v1108
    %1198 = vmatpush1.msra.mxu0 %v1107
    %1199 = vmatprep.subr.mxu0 %v1100
    %1200 = vmatpush1.msra.mxu0 %v1099
    %1201 = vmatprep.subr.mxu0 %v1092
    %1202 = vmatpush1.msra.mxu0 %v1091
    %1203 = vmatprep.subr.mxu0 0.0
    %1204 = vmatpush2.msra.mxu0 0.0
    %1205 = vmatprep.subr.mxu0 0.0
    %1206 = vmatpush2.msra.mxu0 0.0
    %1207 = vmatprep.subr.mxu0 0.0
    %1208 = vmatpush2.msra.mxu0 0.0
    %1209 = vmatprep.subr.mxu0 0.0
    %1210 = vmatpush2.msra.mxu0 0.0
    %1211 = vmatprep.subr.mxu0 0.0
    %1212 = vmatpush2.msra.mxu0 0.0
    %1213 = vmatprep.subr.mxu0 0.0
    %1214 = vmatpush2.msra.mxu0 0.0
    %1215 = vmatprep.subr.mxu0 0.0
    %1216 = vmatpush2.msra.mxu0 0.0
    %1217 = vmatprep.subr.mxu0 0.0
    %1218 = vmatpush2.msra.mxu0 0.0
    %1219 = vmatprep.subr.mxu0 0.0
    %1220 = vmatpush2.msra.mxu0 0.0
    %1221 = vmatprep.subr.mxu0 0.0
    %1222 = vmatpush2.msra.mxu0 0.0
    %1223 = vmatprep.subr.mxu0 0.0
    %1224 = vmatpush2.msra.mxu0 0.0
    %1225 = vmatprep.subr.mxu0 0.0
    %1226 = vmatpush2.msra.mxu0 0.0
    %1227 = vmatprep.subr.mxu0 0.0
    %1228 = vmatpush2.msra.mxu0 0.0
    %1229 = vmatprep.subr.mxu0 0.0
    %1230 = vmatpush2.msra.mxu0 0.0
    %1231 = vmatprep.subr.mxu0 0.0
    %1232 = vmatpush2.msra.mxu0 0.0
    %1233 = vmatprep.subr.mxu0 0.0
    %1234 = vmatpush2.msra.mxu0 0.0
    %1235 = vmatprep.mubr.f32.mxu0 0.0
    %1236 = vmatmul.mubr.f32.gmra.mxu0 %v1169
    %v1237 = vpop.f32.mrf.mxu0
    %v1238 = vadd.f32 %v1166, %v1237
    %v1239 = vpop.f32.mrf.mxu0
    %v1240 = vadd.f32 %v1166, %v1239
    %1241 = vdwg.mxu0
    %1242 = vmatprep.subr.mxu0 0.0
    %1243 = vmatpush1.msra.mxu0 0.0
    %1244 = vmatprep.subr.mxu0 0.0
    %1245 = vmatpush1.msra.mxu0 0.0
    %1246 = vmatprep.subr.mxu0 0.0
    %1247 = vmatpush1.msra.mxu0 0.0
    %1248 = vmatprep.subr.mxu0 0.0
    %1249 = vmatpush1.msra.mxu0 0.0
    %1250 = vmatprep.subr.mxu0 0.0
    %1251 = vmatpush1.msra.mxu0 0.0
    %1252 = vmatprep.subr.mxu0 0.0
    %1253 = vmatpush1.msra.mxu0 0.0
    %1254 = vmatprep.subr.mxu0 0.0
    %1255 = vmatpush1.msra.mxu0 0.0
    %1256 = vmatprep.subr.mxu0 %v1158
    %1257 = vmatpush1.msra.mxu0 %v1157
    %1258 = vmatprep.subr.mxu0 %v1150
    %1259 = vmatpush1.msra.mxu0 %v1149
    %1260 = vmatprep.subr.mxu0 %v1142
    %1261 = vmatpush1.msra.mxu0 %v1141
    %1262 = vmatprep.subr.mxu0 %v1134
    %1263 = vmatpush1.msra.mxu0 %v1133
    %1264 = vmatprep.subr.mxu0 %v1126
    %1265 = vmatpush1.msra.mxu0 %v1125
    %1266 = vmatprep.subr.mxu0 %v1118
    %1267 = vmatpush1.msra.mxu0 %v1117
    %1268 = vmatprep.subr.mxu0 %v1110
    %1269 = vmatpush1.msra.mxu0 %v1109
    %1270 = vmatprep.subr.mxu0 %v1102
    %1271 = vmatpush1.msra.mxu0 %v1101
    %1272 = vmatprep.subr.mxu0 %v1094
    %1273 = vmatpush1.msra.mxu0 %v1093
    %1274 = vmatprep.subr.mxu0 0.0
    %1275 = vmatpush2.msra.mxu0 0.0
    %1276 = vmatprep.subr.mxu0 0.0
    %1277 = vmatpush2.msra.mxu0 0.0
    %1278 = vmatprep.subr.mxu0 0.0
    %1279 = vmatpush2.msra.mxu0 0.0
    %1280 = vmatprep.subr.mxu0 0.0
    %1281 = vmatpush2.msra.mxu0 0.0
    %1282 = vmatprep.subr.mxu0 0.0
    %1283 = vmatpush2.msra.mxu0 0.0
    %1284 = vmatprep.subr.mxu0 0.0
    %1285 = vmatpush2.msra.mxu0 0.0
    %1286 = vmatprep.subr.mxu0 0.0
    %1287 = vmatpush2.msra.mxu0 0.0
    %1288 = vmatprep.subr.mxu0 0.0
    %1289 = vmatpush2.msra.mxu0 0.0
    %1290 = vmatprep.subr.mxu0 0.0
    %1291 = vmatpush2.msra.mxu0 0.0
    %1292 = vmatprep.subr.mxu0 0.0
    %1293 = vmatpush2.msra.mxu0 0.0
    %1294 = vmatprep.subr.mxu0 0.0
    %1295 = vmatpush2.msra.mxu0 0.0
    %1296 = vmatprep.subr.mxu0 0.0
    %1297 = vmatpush2.msra.mxu0 0.0
    %1298 = vmatprep.subr.mxu0 0.0
    %1299 = vmatpush2.msra.mxu0 0.0
    %1300 = vmatprep.subr.mxu0 0.0
    %1301 = vmatpush2.msra.mxu0 0.0
    %1302 = vmatprep.subr.mxu0 0.0
    %1303 = vmatpush2.msra.mxu0 0.0
    %1304 = vmatprep.subr.mxu0 0.0
    %1305 = vmatpush2.msra.mxu0 0.0
    %1306 = vmatprep.mubr.f32.mxu0 0.0
    %1307 = vmatmul.mubr.f32.gmra.mxu0 %v1169
    %v1308 = vpop.f32.mrf.mxu0
    %v1309 = vadd.f32 %v1166, %v1308
    %v1310 = vpop.f32.mrf.mxu0
    %v1311 = vadd.f32 %v1166, %v1310
    %1312 = vdwg.mxu0
    %1313 = vmatprep.subr.mxu0 0.0
    %1314 = vmatpush1.msra.mxu0 0.0
    %1315 = vmatprep.subr.mxu0 0.0
    %1316 = vmatpush1.msra.mxu0 0.0
    %1317 = vmatprep.subr.mxu0 0.0
    %1318 = vmatpush1.msra.mxu0 0.0
    %1319 = vmatprep.subr.mxu0 0.0
    %1320 = vmatpush1.msra.mxu0 0.0
    %1321 = vmatprep.subr.mxu0 0.0
    %1322 = vmatpush1.msra.mxu0 0.0
    %1323 = vmatprep.subr.mxu0 0.0
    %1324 = vmatpush1.msra.mxu0 0.0
    %1325 = vmatprep.subr.mxu0 0.0
    %1326 = vmatpush1.msra.mxu0 0.0
    %1327 = vmatprep.subr.mxu0 %v1160
    %1328 = vmatpush1.msra.mxu0 %v1159
    %1329 = vmatprep.subr.mxu0 %v1152
    %1330 = vmatpush1.msra.mxu0 %v1151
    %1331 = vmatprep.subr.mxu0 %v1144
    %1332 = vmatpush1.msra.mxu0 %v1143
    %1333 = vmatprep.subr.mxu0 %v1136
    %1334 = vmatpush1.msra.mxu0 %v1135
    %1335 = vmatprep.subr.mxu0 %v1128
    %1336 = vmatpush1.msra.mxu0 %v1127
    %1337 = vmatprep.subr.mxu0 %v1120
    %1338 = vmatpush1.msra.mxu0 %v1119
    %1339 = vmatprep.subr.mxu0 %v1112
    %1340 = vmatpush1.msra.mxu0 %v1111
    %1341 = vmatprep.subr.mxu0 %v1104
    %1342 = vmatpush1.msra.mxu0 %v1103
    %1343 = vmatprep.subr.mxu0 %v1096
    %1344 = vmatpush1.msra.mxu0 %v1095
    %1345 = vmatprep.subr.mxu0 0.0
    %1346 = vmatpush2.msra.mxu0 0.0
    %1347 = vmatprep.subr.mxu0 0.0
    %1348 = vmatpush2.msra.mxu0 0.0
    %1349 = vmatprep.subr.mxu0 0.0
    %1350 = vmatpush2.msra.mxu0 0.0
    %1351 = vmatprep.subr.mxu0 0.0
    %1352 = vmatpush2.msra.mxu0 0.0
    %1353 = vmatprep.subr.mxu0 0.0
    %1354 = vmatpush2.msra.mxu0 0.0
    %1355 = vmatprep.subr.mxu0 0.0
    %1356 = vmatpush2.msra.mxu0 0.0
    %1357 = vmatprep.subr.mxu0 0.0
    %1358 = vmatpush2.msra.mxu0 0.0
    %1359 = vmatprep.subr.mxu0 0.0
    %1360 = vmatpush2.msra.mxu0 0.0
    %1361 = vmatprep.subr.mxu0 0.0
    %1362 = vmatpush2.msra.mxu0 0.0
    %1363 = vmatprep.subr.mxu0 0.0
    %1364 = vmatpush2.msra.mxu0 0.0
    %1365 = vmatprep.subr.mxu0 0.0
    %1366 = vmatpush2.msra.mxu0 0.0
    %1367 = vmatprep.subr.mxu0 0.0
    %1368 = vmatpush2.msra.mxu0 0.0
    %1369 = vmatprep.subr.mxu0 0.0
    %1370 = vmatpush2.msra.mxu0 0.0
    %1371 = vmatprep.subr.mxu0 0.0
    %1372 = vmatpush2.msra.mxu0 0.0
    %1373 = vmatprep.subr.mxu0 0.0
    %1374 = vmatpush2.msra.mxu0 0.0
    %1375 = vmatprep.subr.mxu0 0.0
    %1376 = vmatpush2.msra.mxu0 0.0
    %1377 = vmatprep.mubr.f32.mxu0 0.0
    %1378 = vmatmul.mubr.f32.gmra.mxu0 %v1169
    %v1379 = vpop.f32.mrf.mxu0
    %v1380 = vadd.f32 %v1166, %v1379
    %v1381 = vpop.f32.mrf.mxu0
    %v1382 = vadd.f32 %v1166, %v1381
    %1383 = vdwg.mxu0
    %1384 = vmatprep.subr.mxu0 0.0
    %1385 = vmatpush1.msra.mxu0 0.0
    %1386 = vmatprep.subr.mxu0 0.0
    %1387 = vmatpush1.msra.mxu0 0.0
    %1388 = vmatprep.subr.mxu0 0.0
    %1389 = vmatpush1.msra.mxu0 0.0
    %1390 = vmatprep.subr.mxu0 0.0
    %1391 = vmatpush1.msra.mxu0 0.0
    %1392 = vmatprep.subr.mxu0 0.0
    %1393 = vmatpush1.msra.mxu0 0.0
    %1394 = vmatprep.subr.mxu0 0.0
    %1395 = vmatpush1.msra.mxu0 0.0
    %1396 = vmatprep.subr.mxu0 0.0
    %1397 = vmatpush1.msra.mxu0 0.0
    %1398 = vmatprep.subr.mxu0 %v1162
    %1399 = vmatpush1.msra.mxu0 %v1161
    %1400 = vmatprep.subr.mxu0 %v1154
    %1401 = vmatpush1.msra.mxu0 %v1153
    %1402 = vmatprep.subr.mxu0 %v1146
    %1403 = vmatpush1.msra.mxu0 %v1145
    %1404 = vmatprep.subr.mxu0 %v1138
    %1405 = vmatpush1.msra.mxu0 %v1137
    %1406 = vmatprep.subr.mxu0 %v1130
    %1407 = vmatpush1.msra.mxu0 %v1129
    %1408 = vmatprep.subr.mxu0 %v1122
    %1409 = vmatpush1.msra.mxu0 %v1121
    %1410 = vmatprep.subr.mxu0 %v1114
    %1411 = vmatpush1.msra.mxu0 %v1113
    %1412 = vmatprep.subr.mxu0 %v1106
    %1413 = vmatpush1.msra.mxu0 %v1105
    %1414 = vmatprep.subr.mxu0 %v1098
    %1415 = vmatpush1.msra.mxu0 %v1097
    %1416 = vmatprep.subr.mxu0 0.0
    %1417 = vmatpush2.msra.mxu0 0.0
    %1418 = vmatprep.subr.mxu0 0.0
    %1419 = vmatpush2.msra.mxu0 0.0
    %1420 = vmatprep.subr.mxu0 0.0
    %1421 = vmatpush2.msra.mxu0 0.0
    %1422 = vmatprep.subr.mxu0 0.0
    %1423 = vmatpush2.msra.mxu0 0.0
    %1424 = vmatprep.subr.mxu0 0.0
    %1425 = vmatpush2.msra.mxu0 0.0
    %1426 = vmatprep.subr.mxu0 0.0
    %1427 = vmatpush2.msra.mxu0 0.0
    %1428 = vmatprep.subr.mxu0 0.0
    %1429 = vmatpush2.msra.mxu0 0.0
    %1430 = vmatprep.subr.mxu0 0.0
    %1431 = vmatpush2.msra.mxu0 0.0
    %1432 = vmatprep.subr.mxu0 0.0
    %1433 = vmatpush2.msra.mxu0 0.0
    %1434 = vmatprep.subr.mxu0 0.0
    %1435 = vmatpush2.msra.mxu0 0.0
    %1436 = vmatprep.subr.mxu0 0.0
    %1437 = vmatpush2.msra.mxu0 0.0
    %1438 = vmatprep.subr.mxu0 0.0
    %1439 = vmatpush2.msra.mxu0 0.0
    %1440 = vmatprep.subr.mxu0 0.0
    %1441 = vmatpush2.msra.mxu0 0.0
    %1442 = vmatprep.subr.mxu0 0.0
    %1443 = vmatpush2.msra.mxu0 0.0
    %1444 = vmatprep.subr.mxu0 0.0
    %1445 = vmatpush2.msra.mxu0 0.0
    %1446 = vmatprep.subr.mxu0 0.0
    %1447 = vmatpush2.msra.mxu0 0.0
    %1448 = vmatprep.mubr.f32.mxu0 0.0
    %1449 = vmatmul.mubr.f32.gmra.mxu0 %v1169
    %v1450 = vpop.f32.mrf.mxu0
    %v1451 = vadd.f32 %v1166, %v1450
    %v1452 = vpop.f32.mrf.mxu0
    %v1453 = vadd.f32 %v1166, %v1452
    %1454 = vdwg.mxu0
    %v1455 = vmul.f32 %v1238, %v690
    %v1456 = vmul.f32 %v1240, %v694
    %v1457 = vmul.f32 %v1309, %v698
    %v1458 = vmul.f32 %v1311, %v702
    %v1459 = vmul.f32 %v1380, %v706
    %v1460 = vmul.f32 %v1382, %v710
    %v1461 = vmul.f32 %v1451, %v714
    %v1462 = vmul.f32 %v1453, %v718
    %v1463 = vadd.f32 %v1455, %v1456
    %v1464 = vadd.f32 %v1463, %v1457
    %v1465 = vadd.f32 %v1464, %v1458
    %v1466 = vadd.f32 %v1465, %v1459
    %v1467 = vadd.f32 %v1466, %v1460
    %v1468 = vadd.f32 %v1467, %v1461
    %v1469 = vadd.f32 %v1468, %v1462
    %1470 = vadd.xlane.f32.xlu0 %v1469
    %v1471 = vpop.xlane.xlu0 %1470
    %v1472 = vmul.f32 %v1455, %v1455
    %v1473 = vmul.f32 %v1456, %v1456
    %v1474 = vmul.f32 %v1457, %v1457
    %v1475 = vmul.f32 %v1458, %v1458
    %v1476 = vmul.f32 %v1459, %v1459
    %v1477 = vmul.f32 %v1460, %v1460
    %v1478 = vmul.f32 %v1461, %v1461
    %v1479 = vmul.f32 %v1462, %v1462
    %v1480 = vadd.f32 %v1472, %v1473
    %v1481 = vadd.f32 %v1480, %v1474
    %v1482 = vadd.f32 %v1481, %v1475
    %v1483 = vadd.f32 %v1482, %v1476
    %v1484 = vadd.f32 %v1483, %v1477
    %v1485 = vadd.f32 %v1484, %v1478
    %v1486 = vadd.f32 %v1485, %v1479
    %1487 = vadd.xlane.f32.xlu0 %v1486
    %v1488 = vpop.xlane.xlu0 %1487
    %v1489 = vmul.f32 %v1471, 0.001953125
    %v1490 = vmul.f32 %v1488, 0.001953125
    %v1491 = vmul.f32 %v1489, %v1489
    %v1492 = vsub.f32 %v1490, %v1491
    %v1493 = vadd.f32 %v1492, 1e-05
    %v1494 = vrsqrt.pop %v1493
    %v1495 = vmul.f32 %v1494, %v1090
    %v1496 = vmul.f32 %v1489, %v1495
    %1498 = vrot.lane.b32.xlu0 %v1496, 1
    %v1499 = vpop.permute.xlu0 %1498
    %v1501 = vsub.f32 %v1090, %v1499
    %1503 = vset.pattern.permute.xlu0 85
    %1504 = vperm.xlu0 %1503, %v1495
    %v1505 = vpop.permute.xlu0 %1504
    %v1507 = vmul.f32 %v1238, %v1505
    %v1508 = vmul.f32 %v1240, %v1505
    %v1509 = vmul.f32 %v1309, %v1505
    %v1510 = vmul.f32 %v1311, %v1505
    %v1511 = vmul.f32 %v1380, %v1505
    %v1512 = vmul.f32 %v1382, %v1505
    %v1513 = vmul.f32 %v1451, %v1505
    %v1514 = vmul.f32 %v1453, %v1505
    %1516 = vset.pattern.permute.xlu0 86
    %1517 = vperm.xlu0 %1516, %v1501
    %v1518 = vpop.permute.xlu0 %1517
    %v1520 = vadd.f32 %v1507, %v1518
    %v1521 = vadd.f32 %v1508, %v1518
    %v1522 = vadd.f32 %v1509, %v1518
    %v1523 = vadd.f32 %v1510, %v1518
    %v1524 = vadd.f32 %v1511, %v1518
    %v1525 = vadd.f32 %v1512, %v1518
    %v1526 = vadd.f32 %v1513, %v1518
    %v1527 = vadd.f32 %v1514, %v1518
    %v1528 = vmax.f32 %v1520, 0.0
    %v1529 = vmax.f32 %v1521, 0.0
    %v1530 = vmax.f32 %v1522, 0.0
    %v1531 = vmax.f32 %v1523, 0.0
    %v1532 = vmax.f32 %v1524, 0.0
    %v1533 = vmax.f32 %v1525, 0.0
    %v1534 = vmax.f32 %v1526, 0.0
    %v1535 = vmax.f32 %v1527, 0.0
    %v1536 = vld [vmem:[#allocation6] sm:$0xff]
    %v1537 = vld [vmem:[#allocation6 + $0x8] sm:$0xff]
    %1539 = vset.pattern.permute.xlu0 96
    %1540 = vperm.xlu0 %1539, %v1536
    %v1541 = vpop.permute.xlu0 %1540
    %1544 = vset.pattern.permute.xlu0 96
    %1545 = vperm.xlu0 %1544, %v1537
    %v1546 = vpop.permute.xlu0 %1545
    %1548 = vrot.lane.b32.xlu0 %v1536, 40
    %v1549 = vpop.permute.xlu0 %1548
    %1550 = vrot.lane.b32.xlu0 %v1537, 40
    %v1551 = vpop.permute.xlu0 %1550
    %vm1552 = vcmask 64512
    %v1553 = vsel %vm1552, %v1549, 0
    %v1555 = vsel %vm1552, %v1551, 0
    %1557 = vmatprep.subr.mxu0 0.0
    %1558 = vmatpush1.msra.mxu0 0.0
    %1559 = vmatprep.subr.mxu0 0.0
    %1560 = vmatpush1.msra.mxu0 0.0
    %1561 = vmatprep.subr.mxu0 0.0
    %1562 = vmatpush1.msra.mxu0 0.0
    %1563 = vmatprep.subr.mxu0 0.0
    %1564 = vmatpush1.msra.mxu0 0.0
    %1565 = vmatprep.subr.mxu0 0.0
    %1566 = vmatpush1.msra.mxu0 0.0
    %1567 = vmatprep.subr.mxu0 0.0
    %1568 = vmatpush1.msra.mxu0 0.0
    %1569 = vmatprep.subr.mxu0 0.0
    %1570 = vmatpush1.msra.mxu0 0.0
    %1571 = vmatprep.subr.mxu0 0.0
    %1572 = vmatpush1.msra.mxu0 0.0
    %1573 = vmatprep.subr.mxu0 0.0
    %1574 = vmatpush1.msra.mxu0 0.0
    %1575 = vmatprep.subr.mxu0 0.0
    %1576 = vmatpush1.msra.mxu0 0.0
    %1577 = vmatprep.subr.mxu0 0.0
    %1578 = vmatpush1.msra.mxu0 0.0
    %1579 = vmatprep.subr.mxu0 0.0
    %1580 = vmatpush1.msra.mxu0 0.0
    %1581 = vmatprep.subr.mxu0 0.0
    %1582 = vmatpush1.msra.mxu0 0.0
    %1583 = vmatprep.subr.mxu0 0.0
    %1584 = vmatpush1.msra.mxu0 0.0
    %1585 = vmatprep.subr.mxu0 0.0
    %1586 = vmatpush1.msra.mxu0 0.0
    %1587 = vmatprep.subr.mxu0 %v1529
    %1588 = vmatpush1.msra.mxu0 %v1528
    %1589 = vmatprep.subr.mxu0 0.0
    %1590 = vmatpush2.msra.mxu0 0.0
    %1591 = vmatprep.subr.mxu0 0.0
    %1592 = vmatpush2.msra.mxu0 0.0
    %1593 = vmatprep.subr.mxu0 0.0
    %1594 = vmatpush2.msra.mxu0 0.0
    %1595 = vmatprep.subr.mxu0 0.0
    %1596 = vmatpush2.msra.mxu0 0.0
    %1597 = vmatprep.subr.mxu0 0.0
    %1598 = vmatpush2.msra.mxu0 0.0
    %1599 = vmatprep.subr.mxu0 0.0
    %1600 = vmatpush2.msra.mxu0 0.0
    %1601 = vmatprep.subr.mxu0 0.0
    %1602 = vmatpush2.msra.mxu0 0.0
    %1603 = vmatprep.subr.mxu0 0.0
    %1604 = vmatpush2.msra.mxu0 0.0
    %1605 = vmatprep.subr.mxu0 0.0
    %1606 = vmatpush2.msra.mxu0 0.0
    %1607 = vmatprep.subr.mxu0 0.0
    %1608 = vmatpush2.msra.mxu0 0.0
    %1609 = vmatprep.subr.mxu0 0.0
    %1610 = vmatpush2.msra.mxu0 0.0
    %1611 = vmatprep.subr.mxu0 0.0
    %1612 = vmatpush2.msra.mxu0 0.0
    %1613 = vmatprep.subr.mxu0 0.0
    %1614 = vmatpush2.msra.mxu0 0.0
    %1615 = vmatprep.subr.mxu0 0.0
    %1616 = vmatpush2.msra.mxu0 0.0
    %1617 = vmatprep.subr.mxu0 0.0
    %1618 = vmatpush2.msra.mxu0 0.0
    %1619 = vmatprep.subr.mxu0 0.0
    %1620 = vmatpush2.msra.mxu0 0.0
    %1621 = vmatprep.mubr.f32.mxu0 0.0
    %1622 = vmatmul.mubr.f32.gmra.mxu0 %v1553
    %v1623 = vpop.f32.mrf.mxu0
    %v1624 = vadd.f32 %v1541, %v1623
    %v1625 = vpop.f32.mrf.mxu0
    %v1626 = vadd.f32 %v1541, %v1625
    %1627 = vmatprep.mubr.f32.mxu0 0.0
    %1628 = vmatmul.mubr.f32.gmra.mxu0 %v1555
    %v1629 = vpop.f32.mrf.mxu0
    %v1630 = vadd.f32 %v1546, %v1629
    %v1631 = vpop.f32.mrf.mxu0
    %v1632 = vadd.f32 %v1546, %v1631
    %1633 = vdwg.mxu0
    %1634 = vmatprep.subr.mxu0 0.0
    %1635 = vmatpush1.msra.mxu0 0.0
    %1636 = vmatprep.subr.mxu0 0.0
    %1637 = vmatpush1.msra.mxu0 0.0
    %1638 = vmatprep.subr.mxu0 0.0
    %1639 = vmatpush1.msra.mxu0 0.0
    %1640 = vmatprep.subr.mxu0 0.0
    %1641 = vmatpush1.msra.mxu0 0.0
    %1642 = vmatprep.subr.mxu0 0.0
    %1643 = vmatpush1.msra.mxu0 0.0
    %1644 = vmatprep.subr.mxu0 0.0
    %1645 = vmatpush1.msra.mxu0 0.0
    %1646 = vmatprep.subr.mxu0 0.0
    %1647 = vmatpush1.msra.mxu0 0.0
    %1648 = vmatprep.subr.mxu0 0.0
    %1649 = vmatpush1.msra.mxu0 0.0
    %1650 = vmatprep.subr.mxu0 0.0
    %1651 = vmatpush1.msra.mxu0 0.0
    %1652 = vmatprep.subr.mxu0 0.0
    %1653 = vmatpush1.msra.mxu0 0.0
    %1654 = vmatprep.subr.mxu0 0.0
    %1655 = vmatpush1.msra.mxu0 0.0
    %1656 = vmatprep.subr.mxu0 0.0
    %1657 = vmatpush1.msra.mxu0 0.0
    %1658 = vmatprep.subr.mxu0 0.0
    %1659 = vmatpush1.msra.mxu0 0.0
    %1660 = vmatprep.subr.mxu0 0.0
    %1661 = vmatpush1.msra.mxu0 0.0
    %1662 = vmatprep.subr.mxu0 0.0
    %1663 = vmatpush1.msra.mxu0 0.0
    %1664 = vmatprep.subr.mxu0 %v1531
    %1665 = vmatpush1.msra.mxu0 %v1530
    %1666 = vmatprep.subr.mxu0 0.0
    %1667 = vmatpush2.msra.mxu0 0.0
    %1668 = vmatprep.subr.mxu0 0.0
    %1669 = vmatpush2.msra.mxu0 0.0
    %1670 = vmatprep.subr.mxu0 0.0
    %1671 = vmatpush2.msra.mxu0 0.0
    %1672 = vmatprep.subr.mxu0 0.0
    %1673 = vmatpush2.msra.mxu0 0.0
    %1674 = vmatprep.subr.mxu0 0.0
    %1675 = vmatpush2.msra.mxu0 0.0
    %1676 = vmatprep.subr.mxu0 0.0
    %1677 = vmatpush2.msra.mxu0 0.0
    %1678 = vmatprep.subr.mxu0 0.0
    %1679 = vmatpush2.msra.mxu0 0.0
    %1680 = vmatprep.subr.mxu0 0.0
    %1681 = vmatpush2.msra.mxu0 0.0
    %1682 = vmatprep.subr.mxu0 0.0
    %1683 = vmatpush2.msra.mxu0 0.0
    %1684 = vmatprep.subr.mxu0 0.0
    %1685 = vmatpush2.msra.mxu0 0.0
    %1686 = vmatprep.subr.mxu0 0.0
    %1687 = vmatpush2.msra.mxu0 0.0
    %1688 = vmatprep.subr.mxu0 0.0
    %1689 = vmatpush2.msra.mxu0 0.0
    %1690 = vmatprep.subr.mxu0 0.0
    %1691 = vmatpush2.msra.mxu0 0.0
    %1692 = vmatprep.subr.mxu0 0.0
    %1693 = vmatpush2.msra.mxu0 0.0
    %1694 = vmatprep.subr.mxu0 0.0
    %1695 = vmatpush2.msra.mxu0 0.0
    %1696 = vmatprep.subr.mxu0 0.0
    %1697 = vmatpush2.msra.mxu0 0.0
    %1698 = vmatprep.mubr.f32.mxu0 0.0
    %1699 = vmatmul.mubr.f32.gmra.mxu0 %v1553
    %v1700 = vpop.f32.mrf.mxu0
    %v1701 = vadd.f32 %v1541, %v1700
    %v1702 = vpop.f32.mrf.mxu0
    %v1703 = vadd.f32 %v1541, %v1702
    %1704 = vmatprep.mubr.f32.mxu0 0.0
    %1705 = vmatmul.mubr.f32.gmra.mxu0 %v1555
    %v1706 = vpop.f32.mrf.mxu0
    %v1707 = vadd.f32 %v1546, %v1706
    %v1708 = vpop.f32.mrf.mxu0
    %v1709 = vadd.f32 %v1546, %v1708
    %1710 = vdwg.mxu0
    %1711 = vmatprep.subr.mxu0 0.0
    %1712 = vmatpush1.msra.mxu0 0.0
    %1713 = vmatprep.subr.mxu0 0.0
    %1714 = vmatpush1.msra.mxu0 0.0
    %1715 = vmatprep.subr.mxu0 0.0
    %1716 = vmatpush1.msra.mxu0 0.0
    %1717 = vmatprep.subr.mxu0 0.0
    %1718 = vmatpush1.msra.mxu0 0.0
    %1719 = vmatprep.subr.mxu0 0.0
    %1720 = vmatpush1.msra.mxu0 0.0
    %1721 = vmatprep.subr.mxu0 0.0
    %1722 = vmatpush1.msra.mxu0 0.0
    %1723 = vmatprep.subr.mxu0 0.0
    %1724 = vmatpush1.msra.mxu0 0.0
    %1725 = vmatprep.subr.mxu0 0.0
    %1726 = vmatpush1.msra.mxu0 0.0
    %1727 = vmatprep.subr.mxu0 0.0
    %1728 = vmatpush1.msra.mxu0 0.0
    %1729 = vmatprep.subr.mxu0 0.0
    %1730 = vmatpush1.msra.mxu0 0.0
    %1731 = vmatprep.subr.mxu0 0.0
    %1732 = vmatpush1.msra.mxu0 0.0
    %1733 = vmatprep.subr.mxu0 0.0
    %1734 = vmatpush1.msra.mxu0 0.0
    %1735 = vmatprep.subr.mxu0 0.0
    %1736 = vmatpush1.msra.mxu0 0.0
    %1737 = vmatprep.subr.mxu0 0.0
    %1738 = vmatpush1.msra.mxu0 0.0
    %1739 = vmatprep.subr.mxu0 0.0
    %1740 = vmatpush1.msra.mxu0 0.0
    %1741 = vmatprep.subr.mxu0 %v1533
    %1742 = vmatpush1.msra.mxu0 %v1532
    %1743 = vmatprep.subr.mxu0 0.0
    %1744 = vmatpush2.msra.mxu0 0.0
    %1745 = vmatprep.subr.mxu0 0.0
    %1746 = vmatpush2.msra.mxu0 0.0
    %1747 = vmatprep.subr.mxu0 0.0
    %1748 = vmatpush2.msra.mxu0 0.0
    %1749 = vmatprep.subr.mxu0 0.0
    %1750 = vmatpush2.msra.mxu0 0.0
    %1751 = vmatprep.subr.mxu0 0.0
    %1752 = vmatpush2.msra.mxu0 0.0
    %1753 = vmatprep.subr.mxu0 0.0
    %1754 = vmatpush2.msra.mxu0 0.0
    %1755 = vmatprep.subr.mxu0 0.0
    %1756 = vmatpush2.msra.mxu0 0.0
    %1757 = vmatprep.subr.mxu0 0.0
    %1758 = vmatpush2.msra.mxu0 0.0
    %1759 = vmatprep.subr.mxu0 0.0
    %1760 = vmatpush2.msra.mxu0 0.0
    %1761 = vmatprep.subr.mxu0 0.0
    %1762 = vmatpush2.msra.mxu0 0.0
    %1763 = vmatprep.subr.mxu0 0.0
    %1764 = vmatpush2.msra.mxu0 0.0
    %1765 = vmatprep.subr.mxu0 0.0
    %1766 = vmatpush2.msra.mxu0 0.0
    %1767 = vmatprep.subr.mxu0 0.0
    %1768 = vmatpush2.msra.mxu0 0.0
    %1769 = vmatprep.subr.mxu0 0.0
    %1770 = vmatpush2.msra.mxu0 0.0
    %1771 = vmatprep.subr.mxu0 0.0
    %1772 = vmatpush2.msra.mxu0 0.0
    %1773 = vmatprep.subr.mxu0 0.0
    %1774 = vmatpush2.msra.mxu0 0.0
    %1775 = vmatprep.mubr.f32.mxu0 0.0
    %1776 = vmatmul.mubr.f32.gmra.mxu0 %v1553
    %v1777 = vpop.f32.mrf.mxu0
    %v1778 = vadd.f32 %v1541, %v1777
    %v1779 = vpop.f32.mrf.mxu0
    %v1780 = vadd.f32 %v1541, %v1779
    %1781 = vmatprep.mubr.f32.mxu0 0.0
    %1782 = vmatmul.mubr.f32.gmra.mxu0 %v1555
    %v1783 = vpop.f32.mrf.mxu0
    %v1784 = vadd.f32 %v1546, %v1783
    %v1785 = vpop.f32.mrf.mxu0
    %v1786 = vadd.f32 %v1546, %v1785
    %1787 = vdwg.mxu0
    %1788 = vmatprep.subr.mxu0 0.0
    %1789 = vmatpush1.msra.mxu0 0.0
    %1790 = vmatprep.subr.mxu0 0.0
    %1791 = vmatpush1.msra.mxu0 0.0
    %1792 = vmatprep.subr.mxu0 0.0
    %1793 = vmatpush1.msra.mxu0 0.0
    %1794 = vmatprep.subr.mxu0 0.0
    %1795 = vmatpush1.msra.mxu0 0.0
    %1796 = vmatprep.subr.mxu0 0.0
    %1797 = vmatpush1.msra.mxu0 0.0
    %1798 = vmatprep.subr.mxu0 0.0
    %1799 = vmatpush1.msra.mxu0 0.0
    %1800 = vmatprep.subr.mxu0 0.0
    %1801 = vmatpush1.msra.mxu0 0.0
    %1802 = vmatprep.subr.mxu0 0.0
    %1803 = vmatpush1.msra.mxu0 0.0
    %1804 = vmatprep.subr.mxu0 0.0
    %1805 = vmatpush1.msra.mxu0 0.0
    %1806 = vmatprep.subr.mxu0 0.0
    %1807 = vmatpush1.msra.mxu0 0.0
    %1808 = vmatprep.subr.mxu0 0.0
    %1809 = vmatpush1.msra.mxu0 0.0
    %1810 = vmatprep.subr.mxu0 0.0
    %1811 = vmatpush1.msra.mxu0 0.0
    %1812 = vmatprep.subr.mxu0 0.0
    %1813 = vmatpush1.msra.mxu0 0.0
    %1814 = vmatprep.subr.mxu0 0.0
    %1815 = vmatpush1.msra.mxu0 0.0
    %1816 = vmatprep.subr.mxu0 0.0
    %1817 = vmatpush1.msra.mxu0 0.0
    %1818 = vmatprep.subr.mxu0 %v1535
    %1819 = vmatpush1.msra.mxu0 %v1534
    %1820 = vmatprep.subr.mxu0 0.0
    %1821 = vmatpush2.msra.mxu0 0.0
    %1822 = vmatprep.subr.mxu0 0.0
    %1823 = vmatpush2.msra.mxu0 0.0
    %1824 = vmatprep.subr.mxu0 0.0
    %1825 = vmatpush2.msra.mxu0 0.0
    %1826 = vmatprep.subr.mxu0 0.0
    %1827 = vmatpush2.msra.mxu0 0.0
    %1828 = vmatprep.subr.mxu0 0.0
    %1829 = vmatpush2.msra.mxu0 0.0
    %1830 = vmatprep.subr.mxu0 0.0
    %1831 = vmatpush2.msra.mxu0 0.0
    %1832 = vmatprep.subr.mxu0 0.0
    %1833 = vmatpush2.msra.mxu0 0.0
    %1834 = vmatprep.subr.mxu0 0.0
    %1835 = vmatpush2.msra.mxu0 0.0
    %1836 = vmatprep.subr.mxu0 0.0
    %1837 = vmatpush2.msra.mxu0 0.0
    %1838 = vmatprep.subr.mxu0 0.0
    %1839 = vmatpush2.msra.mxu0 0.0
    %1840 = vmatprep.subr.mxu0 0.0
    %1841 = vmatpush2.msra.mxu0 0.0
    %1842 = vmatprep.subr.mxu0 0.0
    %1843 = vmatpush2.msra.mxu0 0.0
    %1844 = vmatprep.subr.mxu0 0.0
    %1845 = vmatpush2.msra.mxu0 0.0
    %1846 = vmatprep.subr.mxu0 0.0
    %1847 = vmatpush2.msra.mxu0 0.0
    %1848 = vmatprep.subr.mxu0 0.0
    %1849 = vmatpush2.msra.mxu0 0.0
    %1850 = vmatprep.subr.mxu0 0.0
    %1851 = vmatpush2.msra.mxu0 0.0
    %1852 = vmatprep.mubr.f32.mxu0 0.0
    %1853 = vmatmul.mubr.f32.gmra.mxu0 %v1553
    %v1854 = vpop.f32.mrf.mxu0
    %v1855 = vadd.f32 %v1541, %v1854
    %v1856 = vpop.f32.mrf.mxu0
    %v1857 = vadd.f32 %v1541, %v1856
    %1858 = vmatprep.mubr.f32.mxu0 0.0
    %1859 = vmatmul.mubr.f32.gmra.mxu0 %v1555
    %v1860 = vpop.f32.mrf.mxu0
    %v1861 = vadd.f32 %v1546, %v1860
    %v1862 = vpop.f32.mrf.mxu0
    %v1863 = vadd.f32 %v1546, %v1862
    %1864 = vdwg.mxu0
    %v1865 = vmul.f32 %v1624, %v690
    %v1866 = vmul.f32 %v1626, %v694
    %v1867 = vmul.f32 %v1701, %v698
    %v1868 = vmul.f32 %v1703, %v702
    %v1869 = vmul.f32 %v1778, %v706
    %v1870 = vmul.f32 %v1780, %v710
    %v1871 = vmul.f32 %v1855, %v714
    %v1872 = vmul.f32 %v1857, %v718
    %v1873 = vmul.f32 %v1630, %v690
    %v1874 = vmul.f32 %v1632, %v694
    %v1875 = vmul.f32 %v1707, %v698
    %v1876 = vmul.f32 %v1709, %v702
    %v1877 = vmul.f32 %v1784, %v706
    %v1878 = vmul.f32 %v1786, %v710
    %v1879 = vmul.f32 %v1861, %v714
    %v1880 = vmul.f32 %v1863, %v718
    %v1881 = vadd.f32 %v1865, %v1866
    %v1882 = vadd.f32 %v1881, %v1867
    %v1883 = vadd.f32 %v1882, %v1868
    %v1884 = vadd.f32 %v1883, %v1869
    %v1885 = vadd.f32 %v1884, %v1870
    %v1886 = vadd.f32 %v1885, %v1871
    %v1887 = vadd.f32 %v1886, %v1872
    %1888 = vadd.xlane.f32.xlu0 %v1887
    %v1889 = vpop.xlane.xlu0 %1888
    %v1890 = vadd.f32 %v1873, %v1874
    %v1891 = vadd.f32 %v1890, %v1875
    %v1892 = vadd.f32 %v1891, %v1876
    %v1893 = vadd.f32 %v1892, %v1877
    %v1894 = vadd.f32 %v1893, %v1878
    %v1895 = vadd.f32 %v1894, %v1879
    %v1896 = vadd.f32 %v1895, %v1880
    %1897 = vadd.xlane.f32.xlu0 %v1896
    %v1898 = vpop.xlane.xlu0 %1897
    %v1899 = vmul.f32 %v1865, %v1865
    %v1900 = vmul.f32 %v1866, %v1866
    %v1901 = vmul.f32 %v1867, %v1867
    %v1902 = vmul.f32 %v1868, %v1868
    %v1903 = vmul.f32 %v1869, %v1869
    %v1904 = vmul.f32 %v1870, %v1870
    %v1905 = vmul.f32 %v1871, %v1871
    %v1906 = vmul.f32 %v1872, %v1872
    %v1907 = vmul.f32 %v1873, %v1873
    %v1908 = vmul.f32 %v1874, %v1874
    %v1909 = vmul.f32 %v1875, %v1875
    %v1910 = vmul.f32 %v1876, %v1876
    %v1911 = vmul.f32 %v1877, %v1877
    %v1912 = vmul.f32 %v1878, %v1878
    %v1913 = vmul.f32 %v1879, %v1879
    %v1914 = vmul.f32 %v1880, %v1880
    %v1915 = vadd.f32 %v1899, %v1900
    %v1916 = vadd.f32 %v1915, %v1901
    %v1917 = vadd.f32 %v1916, %v1902
    %v1918 = vadd.f32 %v1917, %v1903
    %v1919 = vadd.f32 %v1918, %v1904
    %v1920 = vadd.f32 %v1919, %v1905
    %v1921 = vadd.f32 %v1920, %v1906
    %1922 = vadd.xlane.f32.xlu0 %v1921
    %v1923 = vpop.xlane.xlu0 %1922
    %v1924 = vadd.f32 %v1907, %v1908
    %v1925 = vadd.f32 %v1924, %v1909
    %v1926 = vadd.f32 %v1925, %v1910
    %v1927 = vadd.f32 %v1926, %v1911
    %v1928 = vadd.f32 %v1927, %v1912
    %v1929 = vadd.f32 %v1928, %v1913
    %v1930 = vadd.f32 %v1929, %v1914
    %1931 = vadd.xlane.f32.xlu0 %v1930
    %v1932 = vpop.xlane.xlu0 %1931
    %v1933 = vmul.f32 %v1889, 0.001953125
    %v1934 = vmul.f32 %v1898, 0.001953125
    %v1935 = vmul.f32 %v1923, 0.001953125
    %v1936 = vmul.f32 %v1932, 0.001953125
    %v1937 = vmul.f32 %v1933, %v1933
    %v1938 = vmul.f32 %v1934, %v1934
    %v1939 = vsub.f32 %v1935, %v1937
    %v1940 = vsub.f32 %v1936, %v1938
    %v1941 = vadd.f32 %v1939, 1e-05
    %v1942 = vadd.f32 %v1940, 1e-05
    %v1943 = vrsqrt.pop %v1941
    %v1944 = vrsqrt.pop %v1942
    %v1945 = vmul.f32 %v1943, %v1536
    %v1946 = vmul.f32 %v1944, %v1537
    %v1947 = vmul.f32 %v1933, %v1945
    %v1948 = vmul.f32 %v1934, %v1946
    %1951 = vrot.lane.b32.xlu0 %v1947, 1
    %v1952 = vpop.permute.xlu0 %1951
    %1953 = vrot.lane.b32.xlu0 %v1948, 1
    %v1954 = vpop.permute.xlu0 %1953
    %v1957 = vsub.f32 %v1536, %v1952
    %v1958 = vsub.f32 %v1537, %v1954
    %v1959 = vld [vmem:[#allocation3] ss:$2 sm:$0xff]
    %v1960 = vld [vmem:[%s105] ss:$2 sm:$0x1]
    %v1963 = vlaneseq
    %v1964 = vshrl.u32 %v1963, 7
    %v1965 = vsub.s32 0, %v1964
    %v1966 = vrot.slane %v1959, %v1965
    %v1967 = vlaneseq
    %v1968 = vshrl.u32 %v1967, 7
    %v1969 = vsub.s32 1, %v1968
    %v1970 = vrot.slane %v1959, %v1969
    %v1971 = vlaneseq
    %v1972 = vshrl.u32 %v1971, 7
    %v1973 = vsub.s32 2, %v1972
    %v1974 = vrot.slane %v1959, %v1973
    %v1975 = vlaneseq
    %v1976 = vshrl.u32 %v1975, 7
    %v1977 = vsub.s32 3, %v1976
    %v1978 = vrot.slane %v1959, %v1977
    %v1979 = vlaneseq
    %v1980 = vshrl.u32 %v1979, 7
    %v1981 = vsub.s32 4, %v1980
    %v1982 = vrot.slane %v1959, %v1981
    %v1983 = vlaneseq
    %v1984 = vshrl.u32 %v1983, 7
    %v1985 = vsub.s32 5, %v1984
    %v1986 = vrot.slane %v1959, %v1985
    %v1987 = vlaneseq
    %v1988 = vshrl.u32 %v1987, 7
    %v1989 = vsub.s32 6, %v1988
    %v1990 = vrot.slane %v1959, %v1989
    %v1991 = vlaneseq
    %v1992 = vshrl.u32 %v1991, 7
    %v1993 = vsub.s32 7, %v1992
    %v1994 = vrot.slane %v1959, %v1993
    %v1995 = vlaneseq
    %v1996 = vshrl.u32 %v1995, 7
    %v1997 = vsub.s32 0, %v1996
    %v1998 = vrot.slane %v1960, %v1997
    %1999 = vrot.lane.b32.xlu0 %v1966, 103
    %v2000 = vpop.permute.xlu0 %1999
    %2001 = vrot.lane.b32.xlu0 %v1970, 103
    %v2002 = vpop.permute.xlu0 %2001
    %2003 = vrot.lane.b32.xlu0 %v1974, 103
    %v2004 = vpop.permute.xlu0 %2003
    %2005 = vrot.lane.b32.xlu0 %v1978, 103
    %v2006 = vpop.permute.xlu0 %2005
    %2007 = vrot.lane.b32.xlu0 %v1982, 103
    %v2008 = vpop.permute.xlu0 %2007
    %2009 = vrot.lane.b32.xlu0 %v1986, 103
    %v2010 = vpop.permute.xlu0 %2009
    %2011 = vrot.lane.b32.xlu0 %v1990, 103
    %v2012 = vpop.permute.xlu0 %2011
    %2013 = vrot.lane.b32.xlu0 %v1994, 103
    %v2014 = vpop.permute.xlu0 %2013
    %2015 = vrot.lane.b32.xlu0 %v1998, 103
    %v2016 = vpop.permute.xlu0 %2015
    %v2017 = vsel %vm389, %v2000, %v2002
    %v2018 = vsel %vm389, %v2002, %v2004
    %v2019 = vsel %vm389, %v2004, %v2006
    %v2020 = vsel %vm389, %v2006, %v2008
    %v2021 = vsel %vm389, %v2008, %v2010
    %v2022 = vsel %vm389, %v2010, %v2012
    %v2023 = vsel %vm389, %v2012, %v2014
    %v2024 = vsel %vm389, %v2014, %v2016
    %vm2033 = vcmask 1040384
    %v2034 = vsel %vm2033, %v2017, 0.0
    %v2035 = vsel %vm2033, %v2018, 0.0
    %v2036 = vadd.f32 %v2034, %v2035
    %v2037 = vsel %vm2033, %v2019, 0.0
    %v2038 = vadd.f32 %v2036, %v2037
    %v2039 = vsel %vm2033, %v2020, 0.0
    %v2040 = vadd.f32 %v2038, %v2039
    %v2041 = vsel %vm2033, %v2021, 0.0
    %v2042 = vadd.f32 %v2040, %v2041
    %v2043 = vsel %vm2033, %v2022, 0.0
    %v2044 = vadd.f32 %v2042, %v2043
    %v2045 = vsel %vm2033, %v2023, 0.0
    %v2046 = vadd.f32 %v2044, %v2045
    %v2047 = vsel %vm2033, %v2024, 0.0
    %v2048 = vadd.f32 %v2046, %v2047
    %2049 = vadd.xlane.f32.xlu0 %v2048
    %v2050 = vpop.xlane.xlu0 %2049
    %v2051 = vmul.f32 %v1959, %v1959
    %v2052 = vmul.f32 %v1960, %v1960
    %v2055 = vlaneseq
    %v2056 = vshrl.u32 %v2055, 7
    %v2057 = vsub.s32 0, %v2056
    %v2058 = vrot.slane %v2051, %v2057
    %v2059 = vlaneseq
    %v2060 = vshrl.u32 %v2059, 7
    %v2061 = vsub.s32 1, %v2060
    %v2062 = vrot.slane %v2051, %v2061
    %v2063 = vlaneseq
    %v2064 = vshrl.u32 %v2063, 7
    %v2065 = vsub.s32 2, %v2064
    %v2066 = vrot.slane %v2051, %v2065
    %v2067 = vlaneseq
    %v2068 = vshrl.u32 %v2067, 7
    %v2069 = vsub.s32 3, %v2068
    %v2070 = vrot.slane %v2051, %v2069
    %v2071 = vlaneseq
    %v2072 = vshrl.u32 %v2071, 7
    %v2073 = vsub.s32 4, %v2072
    %v2074 = vrot.slane %v2051, %v2073
    %v2075 = vlaneseq
    %v2076 = vshrl.u32 %v2075, 7
    %v2077 = vsub.s32 5, %v2076
    %v2078 = vrot.slane %v2051, %v2077
    %v2079 = vlaneseq
    %v2080 = vshrl.u32 %v2079, 7
    %v2081 = vsub.s32 6, %v2080
    %v2082 = vrot.slane %v2051, %v2081
    %v2083 = vlaneseq
    %v2084 = vshrl.u32 %v2083, 7
    %v2085 = vsub.s32 7, %v2084
    %v2086 = vrot.slane %v2051, %v2085
    %v2087 = vlaneseq
    %v2088 = vshrl.u32 %v2087, 7
    %v2089 = vsub.s32 0, %v2088
    %v2090 = vrot.slane %v2052, %v2089
    %2091 = vrot.lane.b32.xlu0 %v2058, 103
    %v2092 = vpop.permute.xlu0 %2091
    %2093 = vrot.lane.b32.xlu0 %v2062, 103
    %v2094 = vpop.permute.xlu0 %2093
    %2095 = vrot.lane.b32.xlu0 %v2066, 103
    %v2096 = vpop.permute.xlu0 %2095
    %2097 = vrot.lane.b32.xlu0 %v2070, 103
    %v2098 = vpop.permute.xlu0 %2097
    %2099 = vrot.lane.b32.xlu0 %v2074, 103
    %v2100 = vpop.permute.xlu0 %2099
    %2101 = vrot.lane.b32.xlu0 %v2078, 103
    %v2102 = vpop.permute.xlu0 %2101
    %2103 = vrot.lane.b32.xlu0 %v2082, 103
    %v2104 = vpop.permute.xlu0 %2103
    %2105 = vrot.lane.b32.xlu0 %v2086, 103
    %v2106 = vpop.permute.xlu0 %2105
    %2107 = vrot.lane.b32.xlu0 %v2090, 103
    %v2108 = vpop.permute.xlu0 %2107
    %v2109 = vsel %vm389, %v2092, %v2094
    %v2110 = vsel %vm389, %v2094, %v2096
    %v2111 = vsel %vm389, %v2096, %v2098
    %v2112 = vsel %vm389, %v2098, %v2100
    %v2113 = vsel %vm389, %v2100, %v2102
    %v2114 = vsel %vm389, %v2102, %v2104
    %v2115 = vsel %vm389, %v2104, %v2106
    %v2116 = vsel %vm389, %v2106, %v2108
    %v2125 = vsel %vm2033, %v2109, 0.0
    %v2126 = vsel %vm2033, %v2110, 0.0
    %v2127 = vadd.f32 %v2125, %v2126
    %v2128 = vsel %vm2033, %v2111, 0.0
    %v2129 = vadd.f32 %v2127, %v2128
    %v2130 = vsel %vm2033, %v2112, 0.0
    %v2131 = vadd.f32 %v2129, %v2130
    %v2132 = vsel %vm2033, %v2113, 0.0
    %v2133 = vadd.f32 %v2131, %v2132
    %v2134 = vsel %vm2033, %v2114, 0.0
    %v2135 = vadd.f32 %v2133, %v2134
    %v2136 = vsel %vm2033, %v2115, 0.0
    %v2137 = vadd.f32 %v2135, %v2136
    %v2138 = vsel %vm2033, %v2116, 0.0
    %v2139 = vadd.f32 %v2137, %v2138
    %2140 = vadd.xlane.f32.xlu0 %v2139
    %v2141 = vpop.xlane.xlu0 %2140
    %v2142 = vmul.f32 %v2050, 0.001953125
    %v2143 = vmul.f32 %v2141, 0.001953125
    %v2144 = vmul.f32 %v2142, %v2142
    %v2145 = vsub.f32 %v2143, %v2144
    %2146 = vrot.lane.b32.xlu0 %v1536, 126
    %v2147 = vpop.permute.xlu0 %2146
    %2148 = vrot.lane.b32.xlu0 %v1537, 126
    %v2149 = vpop.permute.xlu0 %2148
    %v2152 = vmul.f32 %v1536, %v2147
    %v2153 = vmul.f32 %v1537, %v2149
    %v2154 = vmul.f32 %v1536, %v1536
    %v2155 = vmul.f32 %v1537, %v1537
    %v2156 = vlaneseq
    %v2157 = vshrl.u32 %v2156, 7
    %v2158 = vsub.s32 0, %v2157
    %v2159 = vrot.slane %v2145, %v2158
    %v2160 = vmul.f32 %v2154, %v2159
    %v2161 = vmul.f32 %v2155, %v2159
    %v2162 = vadd.f32 %v2160, 1e-05
    %v2163 = vadd.f32 %v2161, 1e-05
    %v2164 = vrsqrt.pop %v2162
    %v2165 = vrsqrt.pop %v2163
    %v2166 = vmul.f32 %v2152, %v2164
    %v2167 = vmul.f32 %v2153, %v2165
    %v2168 = vlaneseq
    %v2169 = vshrl.u32 %v2168, 7
    %v2170 = vsub.s32 0, %v2169
    %v2171 = vrot.slane %v2142, %v2170
    %v2172 = vmul.f32 %v2166, %v2171
    %v2173 = vmul.f32 %v2167, %v2171
    %2176 = vrot.lane.b32.xlu0 %v2172, 3
    %v2177 = vpop.permute.xlu0 %2176
    %2178 = vrot.lane.b32.xlu0 %v2173, 3
    %v2179 = vpop.permute.xlu0 %2178
    %v2182 = vsub.f32 %v1536, %v2177
    %v2183 = vsub.f32 %v1537, %v2179
    %2185 = vset.pattern.permute.xlu0 97
    %2186 = vperm.xlu0 %2185, %v1945
    %v2187 = vpop.permute.xlu0 %2186
    %2190 = vset.pattern.permute.xlu0 97
    %2191 = vperm.xlu0 %2190, %v1946
    %v2192 = vpop.permute.xlu0 %2191
    %v2194 = vmul.f32 %v1624, %v2187
    %v2195 = vmul.f32 %v1626, %v2187
    %v2196 = vmul.f32 %v1701, %v2187
    %v2197 = vmul.f32 %v1703, %v2187
    %v2198 = vmul.f32 %v1778, %v2187
    %v2199 = vmul.f32 %v1780, %v2187
    %v2200 = vmul.f32 %v1855, %v2187
    %v2201 = vmul.f32 %v1857, %v2187
    %v2202 = vmul.f32 %v1630, %v2192
    %v2203 = vmul.f32 %v1632, %v2192
    %v2204 = vmul.f32 %v1707, %v2192
    %v2205 = vmul.f32 %v1709, %v2192
    %v2206 = vmul.f32 %v1784, %v2192
    %v2207 = vmul.f32 %v1786, %v2192
    %v2208 = vmul.f32 %v1861, %v2192
    %v2209 = vmul.f32 %v1863, %v2192
    %2211 = vset.pattern.permute.xlu0 99
    %2212 = vperm.xlu0 %2211, %v2166
    %v2213 = vpop.permute.xlu0 %2212
    %2216 = vset.pattern.permute.xlu0 99
    %2217 = vperm.xlu0 %2216, %v2167
    %v2218 = vpop.permute.xlu0 %2217
    %v2229 = vmul.f32 %v2213, %v1966
    %v2230 = vmul.f32 %v2213, %v1970
    %v2231 = vmul.f32 %v2213, %v1974
    %v2232 = vmul.f32 %v2213, %v1978
    %v2233 = vmul.f32 %v2213, %v1982
    %v2234 = vmul.f32 %v2213, %v1986
    %v2235 = vmul.f32 %v2213, %v1990
    %v2236 = vmul.f32 %v2213, %v1994
    %v2237 = vmul.f32 %v2213, %v1998
    %v2238 = vmul.f32 %v2218, %v1966
    %v2239 = vmul.f32 %v2218, %v1970
    %v2240 = vmul.f32 %v2218, %v1974
    %v2241 = vmul.f32 %v2218, %v1978
    %v2242 = vmul.f32 %v2218, %v1982
    %v2243 = vmul.f32 %v2218, %v1986
    %v2244 = vmul.f32 %v2218, %v1990
    %v2245 = vmul.f32 %v2218, %v1994
    %v2246 = vmul.f32 %v2218, %v1998
    %2265 = vrot.lane.b32.xlu0 %v2229, 103
    %v2266 = vpop.permute.xlu0 %2265
    %2267 = vrot.lane.b32.xlu0 %v2230, 103
    %v2268 = vpop.permute.xlu0 %2267
    %2269 = vrot.lane.b32.xlu0 %v2231, 103
    %v2270 = vpop.permute.xlu0 %2269
    %2271 = vrot.lane.b32.xlu0 %v2232, 103
    %v2272 = vpop.permute.xlu0 %2271
    %2273 = vrot.lane.b32.xlu0 %v2233, 103
    %v2274 = vpop.permute.xlu0 %2273
    %2275 = vrot.lane.b32.xlu0 %v2234, 103
    %v2276 = vpop.permute.xlu0 %2275
    %2277 = vrot.lane.b32.xlu0 %v2235, 103
    %v2278 = vpop.permute.xlu0 %2277
    %2279 = vrot.lane.b32.xlu0 %v2236, 103
    %v2280 = vpop.permute.xlu0 %2279
    %2281 = vrot.lane.b32.xlu0 %v2237, 103
    %v2282 = vpop.permute.xlu0 %2281
    %2283 = vrot.lane.b32.xlu0 %v2238, 103
    %v2284 = vpop.permute.xlu0 %2283
    %2285 = vrot.lane.b32.xlu0 %v2239, 103
    %v2286 = vpop.permute.xlu0 %2285
    %2287 = vrot.lane.b32.xlu0 %v2240, 103
    %v2288 = vpop.permute.xlu0 %2287
    %2289 = vrot.lane.b32.xlu0 %v2241, 103
    %v2290 = vpop.permute.xlu0 %2289
    %2291 = vrot.lane.b32.xlu0 %v2242, 103
    %v2292 = vpop.permute.xlu0 %2291
    %2293 = vrot.lane.b32.xlu0 %v2243, 103
    %v2294 = vpop.permute.xlu0 %2293
    %2295 = vrot.lane.b32.xlu0 %v2244, 103
    %v2296 = vpop.permute.xlu0 %2295
    %2297 = vrot.lane.b32.xlu0 %v2245, 103
    %v2298 = vpop.permute.xlu0 %2297
    %2299 = vrot.lane.b32.xlu0 %v2246, 103
    %v2300 = vpop.permute.xlu0 %2299
    %v2301 = vsel %vm389, %v2266, %v2268
    %v2302 = vsel %vm389, %v2268, %v2270
    %v2303 = vsel %vm389, %v2270, %v2272
    %v2304 = vsel %vm389, %v2272, %v2274
    %v2305 = vsel %vm389, %v2274, %v2276
    %v2306 = vsel %vm389, %v2276, %v2278
    %v2307 = vsel %vm389, %v2278, %v2280
    %v2308 = vsel %vm389, %v2280, %v2282
    %v2309 = vsel %vm389, %v2284, %v2286
    %v2310 = vsel %vm389, %v2286, %v2288
    %v2311 = vsel %vm389, %v2288, %v2290
    %v2312 = vsel %vm389, %v2290, %v2292
    %v2313 = vsel %vm389, %v2292, %v2294
    %v2314 = vsel %vm389, %v2294, %v2296
    %v2315 = vsel %vm389, %v2296, %v2298
    %v2316 = vsel %vm389, %v2298, %v2300
    %v2333 = vadd.f32 %v2194, %v2301
    %v2334 = vadd.f32 %v2195, %v2302
    %v2335 = vadd.f32 %v2196, %v2303
    %v2336 = vadd.f32 %v2197, %v2304
    %v2337 = vadd.f32 %v2198, %v2305
    %v2338 = vadd.f32 %v2199, %v2306
    %v2339 = vadd.f32 %v2200, %v2307
    %v2340 = vadd.f32 %v2201, %v2308
    %v2341 = vadd.f32 %v2202, %v2309
    %v2342 = vadd.f32 %v2203, %v2310
    %v2343 = vadd.f32 %v2204, %v2311
    %v2344 = vadd.f32 %v2205, %v2312
    %v2345 = vadd.f32 %v2206, %v2313
    %v2346 = vadd.f32 %v2207, %v2314
    %v2347 = vadd.f32 %v2208, %v2315
    %v2348 = vadd.f32 %v2209, %v2316
    %2351 = vrot.lane.b32.xlu0 %v2182, 124
    %v2352 = vpop.permute.xlu0 %2351
    %2353 = vrot.lane.b32.xlu0 %v2183, 124
    %v2354 = vpop.permute.xlu0 %2353
    %v2357 = vadd.f32 %v1957, %v2352
    %v2358 = vadd.f32 %v1958, %v2354
    %2360 = vset.pattern.permute.xlu0 98
    %2361 = vperm.xlu0 %2360, %v2357
    %v2362 = vpop.permute.xlu0 %2361
    %2365 = vset.pattern.permute.xlu0 98
    %2366 = vperm.xlu0 %2365, %v2358
    %v2367 = vpop.permute.xlu0 %2366
    %v2369 = vadd.f32 %v2333, %v2362
    %v2370 = vadd.f32 %v2334, %v2362
    %v2371 = vadd.f32 %v2335, %v2362
    %v2372 = vadd.f32 %v2336, %v2362
    %v2373 = vadd.f32 %v2337, %v2362
    %v2374 = vadd.f32 %v2338, %v2362
    %v2375 = vadd.f32 %v2339, %v2362
    %v2376 = vadd.f32 %v2340, %v2362
    %v2377 = vadd.f32 %v2341, %v2367
    %v2378 = vadd.f32 %v2342, %v2367
    %v2379 = vadd.f32 %v2343, %v2367
    %v2380 = vadd.f32 %v2344, %v2367
    %v2381 = vadd.f32 %v2345, %v2367
    %v2382 = vadd.f32 %v2346, %v2367
    %v2383 = vadd.f32 %v2347, %v2367
    %v2384 = vadd.f32 %v2348, %v2367
    %v2385 = vmax.f32 %v2369, 0.0
    %v2386 = vmax.f32 %v2370, 0.0
    %v2387 = vmax.f32 %v2371, 0.0
    %v2388 = vmax.f32 %v2372, 0.0
    %v2389 = vmax.f32 %v2373, 0.0
    %v2390 = vmax.f32 %v2374, 0.0
    %v2391 = vmax.f32 %v2375, 0.0
    %v2392 = vmax.f32 %v2376, 0.0
    %v2393 = vmax.f32 %v2377, 0.0
    %v2394 = vmax.f32 %v2378, 0.0
    %v2395 = vmax.f32 %v2379, 0.0
    %v2396 = vmax.f32 %v2380, 0.0
    %v2397 = vmax.f32 %v2381, 0.0
    %v2398 = vmax.f32 %v2382, 0.0
    %v2399 = vmax.f32 %v2383, 0.0
    %v2400 = vmax.f32 %v2384, 0.0
    %2401 = vrot.lane.b32.xlu0 %v2385, 127
    %v2402 = vpop.permute.xlu0 %2401
    %2403 = vrot.lane.b32.xlu0 %v2393, 127
    %v2404 = vpop.permute.xlu0 %2403
    %2405 = vrot.lane.b32.xlu0 %v2386, 127
    %v2406 = vpop.permute.xlu0 %2405
    %2407 = vrot.lane.b32.xlu0 %v2394, 127
    %v2408 = vpop.permute.xlu0 %2407
    %2409 = vrot.lane.b32.xlu0 %v2387, 127
    %v2410 = vpop.permute.xlu0 %2409
    %2411 = vrot.lane.b32.xlu0 %v2395, 127
    %v2412 = vpop.permute.xlu0 %2411
    %2413 = vrot.lane.b32.xlu0 %v2388, 127
    %v2414 = vpop.permute.xlu0 %2413
    %2415 = vrot.lane.b32.xlu0 %v2396, 127
    %v2416 = vpop.permute.xlu0 %2415
    %2417 = vrot.lane.b32.xlu0 %v2389, 127
    %v2418 = vpop.permute.xlu0 %2417
    %2419 = vrot.lane.b32.xlu0 %v2397, 127
    %v2420 = vpop.permute.xlu0 %2419
    %2421 = vrot.lane.b32.xlu0 %v2390, 127
    %v2422 = vpop.permute.xlu0 %2421
    %2423 = vrot.lane.b32.xlu0 %v2398, 127
    %v2424 = vpop.permute.xlu0 %2423
    %2425 = vrot.lane.b32.xlu0 %v2391, 127
    %v2426 = vpop.permute.xlu0 %2425
    %2427 = vrot.lane.b32.xlu0 %v2399, 127
    %v2428 = vpop.permute.xlu0 %2427
    %2429 = vrot.lane.b32.xlu0 %v2392, 127
    %v2430 = vpop.permute.xlu0 %2429
    %2431 = vrot.lane.b32.xlu0 %v2400, 127
    %v2432 = vpop.permute.xlu0 %2431
    %v2433 = vsel %vm974, %v2426, %v2430
    %v2434 = vsel %vm974, %v2428, %v2432
    %v2435 = vsel %vm974, %v2422, %v2426
    %v2436 = vsel %vm974, %v2424, %v2428
    %v2437 = vsel %vm974, %v2418, %v2422
    %v2438 = vsel %vm974, %v2420, %v2424
    %v2439 = vsel %vm974, %v2414, %v2418
    %v2440 = vsel %vm974, %v2416, %v2420
    %v2441 = vsel %vm974, %v2410, %v2414
    %v2442 = vsel %vm974, %v2412, %v2416
    %v2443 = vsel %vm974, %v2406, %v2410
    %v2444 = vsel %vm974, %v2408, %v2412
    %v2445 = vsel %vm974, %v2402, %v2406
    %v2446 = vsel %vm974, %v2404, %v2408
    %v2447 = vsel %vm974, %v2430, %v2402
    %v2448 = vsel %vm974, %v2432, %v2404
    %v2449 = vmax.f32 %v2385, %v2445
    %v2450 = vmax.f32 %v2386, %v2443
    %v2451 = vmax.f32 %v2387, %v2441
    %v2452 = vmax.f32 %v2388, %v2439
    %v2453 = vmax.f32 %v2389, %v2437
    %v2454 = vmax.f32 %v2390, %v2435
    %v2455 = vmax.f32 %v2391, %v2433
    %v2456 = vmax.f32 %v2392, %v2447
    %v2457 = vmax.f32 %v2393, %v2446
    %v2458 = vmax.f32 %v2394, %v2444
    %v2459 = vmax.f32 %v2395, %v2442
    %v2460 = vmax.f32 %v2396, %v2440
    %v2461 = vmax.f32 %v2397, %v2438
    %v2462 = vmax.f32 %v2398, %v2436
    %v2463 = vmax.f32 %v2399, %v2434
    %v2464 = vmax.f32 %v2400, %v2448
    %2465 = vrot.lane.b32.xlu0 %v2385, 104
    %v2466 = vpop.permute.xlu0 %2465
    %2467 = vrot.lane.b32.xlu0 %v2393, 104
    %v2468 = vpop.permute.xlu0 %2467
    %2469 = vrot.lane.b32.xlu0 %v2386, 104
    %v2470 = vpop.permute.xlu0 %2469
    %2471 = vrot.lane.b32.xlu0 %v2394, 104
    %v2472 = vpop.permute.xlu0 %2471
    %2473 = vrot.lane.b32.xlu0 %v2387, 104
    %v2474 = vpop.permute.xlu0 %2473
    %2475 = vrot.lane.b32.xlu0 %v2395, 104
    %v2476 = vpop.permute.xlu0 %2475
    %2477 = vrot.lane.b32.xlu0 %v2388, 104
    %v2478 = vpop.permute.xlu0 %2477
    %2479 = vrot.lane.b32.xlu0 %v2396, 104
    %v2480 = vpop.permute.xlu0 %2479
    %2481 = vrot.lane.b32.xlu0 %v2389, 104
    %v2482 = vpop.permute.xlu0 %2481
    %2483 = vrot.lane.b32.xlu0 %v2397, 104
    %v2484 = vpop.permute.xlu0 %2483
    %2485 = vrot.lane.b32.xlu0 %v2390, 104
    %v2486 = vpop.permute.xlu0 %2485
    %2487 = vrot.lane.b32.xlu0 %v2398, 104
    %v2488 = vpop.permute.xlu0 %2487
    %2489 = vrot.lane.b32.xlu0 %v2391, 104
    %v2490 = vpop.permute.xlu0 %2489
    %2491 = vrot.lane.b32.xlu0 %v2399, 104
    %v2492 = vpop.permute.xlu0 %2491
    %2493 = vrot.lane.b32.xlu0 %v2392, 104
    %v2494 = vpop.permute.xlu0 %2493
    %2495 = vrot.lane.b32.xlu0 %v2400, 104
    %v2496 = vpop.permute.xlu0 %2495
    %v2497 = vsel %vm1040, %v2490, %v2494
    %v2498 = vsel %vm1040, %v2492, %v2496
    %v2499 = vsel %vm1040, %v2486, %v2490
    %v2500 = vsel %vm1040, %v2488, %v2492
    %v2501 = vsel %vm1040, %v2482, %v2486
    %v2502 = vsel %vm1040, %v2484, %v2488
    %v2503 = vsel %vm1040, %v2478, %v2482
    %v2504 = vsel %vm1040, %v2480, %v2484
    %v2505 = vsel %vm1040, %v2474, %v2478
    %v2506 = vsel %vm1040, %v2476, %v2480
    %v2507 = vsel %vm1040, %v2470, %v2474
    %v2508 = vsel %vm1040, %v2472, %v2476
    %v2509 = vsel %vm1040, %v2466, %v2470
    %v2510 = vsel %vm1040, %v2468, %v2472
    %v2511 = vsel %vm1040, %v2494, %v2466
    %v2512 = vsel %vm1040, %v2496, %v2468
    %2513 = vrot.lane.b32.xlu0 %v2385, 103
    %v2514 = vpop.permute.xlu0 %2513
    %2515 = vrot.lane.b32.xlu0 %v2393, 103
    %v2516 = vpop.permute.xlu0 %2515
    %2517 = vrot.lane.b32.xlu0 %v2386, 103
    %v2518 = vpop.permute.xlu0 %2517
    %2519 = vrot.lane.b32.xlu0 %v2394, 103
    %v2520 = vpop.permute.xlu0 %2519
    %2521 = vrot.lane.b32.xlu0 %v2387, 103
    %v2522 = vpop.permute.xlu0 %2521
    %2523 = vrot.lane.b32.xlu0 %v2395, 103
    %v2524 = vpop.permute.xlu0 %2523
    %2525 = vrot.lane.b32.xlu0 %v2388, 103
    %v2526 = vpop.permute.xlu0 %2525
    %2527 = vrot.lane.b32.xlu0 %v2396, 103
    %v2528 = vpop.permute.xlu0 %2527
    %2529 = vrot.lane.b32.xlu0 %v2389, 103
    %v2530 = vpop.permute.xlu0 %2529
    %2531 = vrot.lane.b32.xlu0 %v2397, 103
    %v2532 = vpop.permute.xlu0 %2531
    %2533 = vrot.lane.b32.xlu0 %v2390, 103
    %v2534 = vpop.permute.xlu0 %2533
    %2535 = vrot.lane.b32.xlu0 %v2398, 103
    %v2536 = vpop.permute.xlu0 %2535
    %2537 = vrot.lane.b32.xlu0 %v2391, 103
    %v2538 = vpop.permute.xlu0 %2537
    %2539 = vrot.lane.b32.xlu0 %v2399, 103
    %v2540 = vpop.permute.xlu0 %2539
    %2541 = vrot.lane.b32.xlu0 %v2392, 103
    %v2542 = vpop.permute.xlu0 %2541
    %2543 = vrot.lane.b32.xlu0 %v2400, 103
    %v2544 = vpop.permute.xlu0 %2543
    %v2545 = vsel %vm1073, %v2538, %v2542
    %v2546 = vsel %vm1073, %v2540, %v2544
    %v2547 = vsel %vm1073, %v2534, %v2538
    %v2548 = vsel %vm1073, %v2536, %v2540
    %v2549 = vsel %vm1073, %v2530, %v2534
    %v2550 = vsel %vm1073, %v2532, %v2536
    %v2551 = vsel %vm1073, %v2526, %v2530
    %v2552 = vsel %vm1073, %v2528, %v2532
    %v2553 = vsel %vm1073, %v2522, %v2526
    %v2554 = vsel %vm1073, %v2524, %v2528
    %v2555 = vsel %vm1073, %v2518, %v2522
    %v2556 = vsel %vm1073, %v2520, %v2524
    %v2557 = vsel %vm1073, %v2514, %v2518
    %v2558 = vsel %vm1073, %v2516, %v2520
    %v2559 = vsel %vm1073, %v2542, %v2514
    %v2560 = vsel %vm1073, %v2544, %v2516
    %v2561 = vmax.f32 %v2509, %v2557
    %v2562 = vmax.f32 %v2507, %v2555
    %v2563 = vmax.f32 %v2505, %v2553
    %v2564 = vmax.f32 %v2503, %v2551
    %v2565 = vmax.f32 %v2501, %v2549
    %v2566 = vmax.f32 %v2499, %v2547
    %v2567 = vmax.f32 %v2497, %v2545
    %v2568 = vmax.f32 %v2511, %v2559
    %v2569 = vmax.f32 %v2510, %v2558
    %v2570 = vmax.f32 %v2508, %v2556
    %v2571 = vmax.f32 %v2506, %v2554
    %v2572 = vmax.f32 %v2504, %v2552
    %v2573 = vmax.f32 %v2502, %v2550
    %v2574 = vmax.f32 %v2500, %v2548
    %v2575 = vmax.f32 %v2498, %v2546
    %v2576 = vmax.f32 %v2512, %v2560
    %v2577 = vmax.f32 %v2449, %v2561
    %v2578 = vmax.f32 %v2450, %v2562
    %v2579 = vmax.f32 %v2451, %v2563
    %v2580 = vmax.f32 %v2452, %v2564
    %v2581 = vmax.f32 %v2453, %v2565
    %v2582 = vmax.f32 %v2454, %v2566
    %v2583 = vmax.f32 %v2455, %v2567
    %v2584 = vmax.f32 %v2456, %v2568
    %v2585 = vmax.f32 %v2457, %v2569
    %v2586 = vmax.f32 %v2458, %v2570
    %v2587 = vmax.f32 %v2459, %v2571
    %v2588 = vmax.f32 %v2460, %v2572
    %v2589 = vmax.f32 %v2461, %v2573
    %v2590 = vmax.f32 %v2462, %v2574
    %v2591 = vmax.f32 %v2463, %v2575
    %v2592 = vmax.f32 %v2464, %v2576
    %v2593 = vlaneseq
    %v2594 = vshrl.u32 %v2593, 7
    %v2595 = vadd.s32 %v2594, 8
    %v2596 = vadd.s32 %v2594, 16
    %v2597 = vadd.s32 %v2594, 24
    %v2598 = vadd.s32 %v2594, 32
    %v2599 = vadd.s32 %v2594, 40
    %v2600 = vadd.s32 %v2594, 48
    %v2601 = vadd.s32 %v2594, 56
    %v2602 = vadd.s32 %v2594, 64
    %v2603 = vadd.s32 %v2594, 72
    %v2604 = vadd.s32 %v2594, 80
    %v2605 = vadd.s32 %v2594, 88
    %v2606 = vadd.s32 %v2594, 96
    %v2607 = vadd.s32 %v2594, 104
    %v2608 = vadd.s32 %v2594, 112
    %v2609 = vadd.s32 %v2594, 120
    %v2610 = vadd.s32 %v2594, 128
    %v2611 = vadd.s32 %v2594, 136
    %v2612 = vadd.s32 %v2594, 144
    %v2613 = vadd.s32 %v2594, 152
    %v2614 = vadd.s32 %v2594, 160
    %v2615 = vadd.s32 %v2594, 168
    %v2616 = vadd.s32 %v2594, 176
    %v2617 = vadd.s32 %v2594, 184
    %v2618 = vadd.s32 %v2594, 192
    %v2619 = vadd.s32 %v2594, 200
    %v2620 = vadd.s32 %v2594, 208
    %v2621 = vadd.s32 %v2594, 216
    %v2622 = vadd.s32 %v2594, 224
    %v2623 = vadd.s32 %v2594, 232
    %v2624 = vadd.s32 %v2594, 240
    %v2625 = vadd.s32 %v2594, 248
    %v2626 = vadd.s32 %v2594, 256
    %v2627 = vadd.s32 %v2594, 264
    %v2628 = vadd.s32 %v2594, 272
    %v2629 = vadd.s32 %v2594, 280
    %v2630 = vadd.s32 %v2594, 288
    %v2631 = vadd.s32 %v2594, 296
    %v2632 = vadd.s32 %v2594, 304
    %v2633 = vadd.s32 %v2594, 312
    %v2634 = vadd.s32 %v2594, 320
    %v2635 = vadd.s32 %v2594, 328
    %v2636 = vadd.s32 %v2594, 336
    %v2637 = vadd.s32 %v2594, 344
    %v2638 = vadd.s32 %v2594, 352
    %v2639 = vadd.s32 %v2594, 360
    %v2640 = vadd.s32 %v2594, 368
    %v2641 = vadd.s32 %v2594, 376
    %v2642 = vadd.s32 %v2594, 384
    %v2643 = vadd.s32 %v2594, 392
    %v2644 = vadd.s32 %v2594, 400
    %v2645 = vadd.s32 %v2594, 408
    %v2646 = vadd.s32 %v2594, 416
    %v2647 = vadd.s32 %v2594, 424
    %v2648 = vadd.s32 %v2594, 432
    %v2649 = vadd.s32 %v2594, 440
    %v2650 = vadd.s32 %v2594, 448
    %v2651 = vadd.s32 %v2594, 456
    %v2652 = vadd.s32 %v2594, 464
    %v2653 = vadd.s32 %v2594, 472
    %v2654 = vadd.s32 %v2594, 480
    %v2655 = vadd.s32 %v2594, 488
    %v2656 = vadd.s32 %v2594, 496
    %v2657 = vadd.s32 %v2594, 504
    %v2658 = vadd.s32 %v2594, 512
    %v2659 = vadd.s32 %v2594, 520
    %v2660 = vadd.s32 %v2594, 528
    %v2661 = vadd.s32 %v2594, 536
    %v2662 = vadd.s32 %v2594, 544
    %v2663 = vadd.s32 %v2594, 552
    %v2664 = vadd.s32 %v2594, 560
    %v2665 = vadd.s32 %v2594, 568
    %v2666 = vadd.s32 %v2594, 576
    %v2667 = vadd.s32 %v2594, 584
    %v2668 = vadd.s32 %v2594, 592
    %v2669 = vadd.s32 %v2594, 600
    %v2670 = vadd.s32 %v2594, 608
    %v2671 = vadd.s32 %v2594, 616
    %v2672 = vadd.s32 %v2594, 624
    %v2673 = vadd.s32 %v2594, 632
    %v2674 = vadd.s32 %v2594, 640
    %v2675 = vadd.s32 %v2594, 648
    %v2676 = vadd.s32 %v2594, 656
    %v2677 = vadd.s32 %v2594, 664
    %v2678 = vadd.s32 %v2594, 672
    %v2679 = vadd.s32 %v2594, 680
    %v2680 = vadd.s32 %v2594, 688
    %v2681 = vadd.s32 %v2594, 696
    %v2682 = vadd.s32 %v2594, 704
    %v2683 = vadd.s32 %v2594, 712
    %v2684 = vadd.s32 %v2594, 720
    %v2685 = vadd.s32 %v2594, 728
    %v2686 = vadd.s32 %v2594, 736
    %v2687 = vadd.s32 %v2594, 744
    %v2688 = vadd.s32 %v2594, 752
    %v2689 = vadd.s32 %v2594, 760
    %v2690 = vadd.s32 %v2594, 768
    %v2691 = vadd.s32 %v2594, 776
    %v2692 = vadd.s32 %v2594, 784
    %v2693 = vadd.s32 %v2594, 792
    %v2694 = vadd.s32 %v2594, 800
    %v2695 = vadd.s32 %v2594, 808
    %v2696 = vadd.s32 %v2594, 816
    %v2697 = vadd.s32 %v2594, 824
    %v2698 = vadd.s32 %v2594, 832
    %v2699 = vadd.s32 %v2594, 840
    %v2700 = vadd.s32 %v2594, 848
    %v2701 = vadd.s32 %v2594, 856
    %v2702 = vadd.s32 %v2594, 864
    %v2703 = vadd.s32 %v2594, 872
    %v2704 = vadd.s32 %v2594, 880
    %v2705 = vadd.s32 %v2594, 888
    %v2706 = vadd.s32 %v2594, 896
    %v2707 = vadd.s32 %v2594, 904
    %v2708 = vadd.s32 %v2594, 912
    %v2709 = vadd.s32 %v2594, 920
    %v2710 = vadd.s32 %v2594, 928
    %v2711 = vadd.s32 %v2594, 936
    %v2712 = vadd.s32 %v2594, 944
    %v2713 = vadd.s32 %v2594, 952
    %v2714 = vadd.s32 %v2594, 960
    %v2715 = vadd.s32 %v2594, 968
    %v2716 = vadd.s32 %v2594, 976
    %v2717 = vadd.s32 %v2594, 984
    %v2718 = vadd.s32 %v2594, 992
    %v2719 = vadd.s32 %v2594, 1000
    %v2720 = vadd.s32 %v2594, 1008
    %v2721 = vadd.s32 %v2594, 1016
    %v2722 = vld [vmem:[#allocation6 + $0x18] sm:$0x1]
    %v2723 = vcvt.f32.s32.to.zero.pseudo %v2722
    %v2724 = vlaneseq
    %v2725 = vshrl.u32 %v2724, 7
    %v2726 = vsub.s32 0, %v2725
    %v2727 = vrot.slane %v2723, %v2726
    %vm2728 = vcmp.eq.s32.totalorder %v2594, %v2727
    %vm2729 = vcmp.eq.s32.totalorder %v2595, %v2727
    %vm2730 = vcmp.eq.s32.totalorder %v2596, %v2727
    %vm2731 = vcmp.eq.s32.totalorder %v2597, %v2727
    %vm2732 = vcmp.eq.s32.totalorder %v2598, %v2727
    %vm2733 = vcmp.eq.s32.totalorder %v2599, %v2727
    %vm2734 = vcmp.eq.s32.totalorder %v2600, %v2727
    %vm2735 = vcmp.eq.s32.totalorder %v2601, %v2727
    %vm2736 = vcmp.eq.s32.totalorder %v2602, %v2727
    %vm2737 = vcmp.eq.s32.totalorder %v2603, %v2727
    %vm2738 = vcmp.eq.s32.totalorder %v2604, %v2727
    %vm2739 = vcmp.eq.s32.totalorder %v2605, %v2727
    %vm2740 = vcmp.eq.s32.totalorder %v2606, %v2727
    %vm2741 = vcmp.eq.s32.totalorder %v2607, %v2727
    %vm2742 = vcmp.eq.s32.totalorder %v2608, %v2727
    %vm2743 = vcmp.eq.s32.totalorder %v2609, %v2727
    %vm2744 = vcmp.eq.s32.totalorder %v2610, %v2727
    %vm2745 = vcmp.eq.s32.totalorder %v2611, %v2727
    %vm2746 = vcmp.eq.s32.totalorder %v2612, %v2727
    %vm2747 = vcmp.eq.s32.totalorder %v2613, %v2727
    %vm2748 = vcmp.eq.s32.totalorder %v2614, %v2727
    %vm2749 = vcmp.eq.s32.totalorder %v2615, %v2727
    %vm2750 = vcmp.eq.s32.totalorder %v2616, %v2727
    %vm2751 = vcmp.eq.s32.totalorder %v2617, %v2727
    %vm2752 = vcmp.eq.s32.totalorder %v2618, %v2727
    %vm2753 = vcmp.eq.s32.totalorder %v2619, %v2727
    %vm2754 = vcmp.eq.s32.totalorder %v2620, %v2727
    %vm2755 = vcmp.eq.s32.totalorder %v2621, %v2727
    %vm2756 = vcmp.eq.s32.totalorder %v2622, %v2727
    %vm2757 = vcmp.eq.s32.totalorder %v2623, %v2727
    %vm2758 = vcmp.eq.s32.totalorder %v2624, %v2727
    %vm2759 = vcmp.eq.s32.totalorder %v2625, %v2727
    %vm2760 = vcmp.eq.s32.totalorder %v2626, %v2727
    %vm2761 = vcmp.eq.s32.totalorder %v2627, %v2727
    %vm2762 = vcmp.eq.s32.totalorder %v2628, %v2727
    %vm2763 = vcmp.eq.s32.totalorder %v2629, %v2727
    %vm2764 = vcmp.eq.s32.totalorder %v2630, %v2727
    %vm2765 = vcmp.eq.s32.totalorder %v2631, %v2727
    %vm2766 = vcmp.eq.s32.totalorder %v2632, %v2727
    %vm2767 = vcmp.eq.s32.totalorder %v2633, %v2727
    %vm2768 = vcmp.eq.s32.totalorder %v2634, %v2727
    %vm2769 = vcmp.eq.s32.totalorder %v2635, %v2727
    %vm2770 = vcmp.eq.s32.totalorder %v2636, %v2727
    %vm2771 = vcmp.eq.s32.totalorder %v2637, %v2727
    %vm2772 = vcmp.eq.s32.totalorder %v2638, %v2727
    %vm2773 = vcmp.eq.s32.totalorder %v2639, %v2727
    %vm2774 = vcmp.eq.s32.totalorder %v2640, %v2727
    %vm2775 = vcmp.eq.s32.totalorder %v2641, %v2727
    %vm2776 = vcmp.eq.s32.totalorder %v2642, %v2727
    %vm2777 = vcmp.eq.s32.totalorder %v2643, %v2727
    %vm2778 = vcmp.eq.s32.totalorder %v2644, %v2727
    %vm2779 = vcmp.eq.s32.totalorder %v2645, %v2727
    %vm2780 = vcmp.eq.s32.totalorder %v2646, %v2727
    %vm2781 = vcmp.eq.s32.totalorder %v2647, %v2727
    %vm2782 = vcmp.eq.s32.totalorder %v2648, %v2727
    %vm2783 = vcmp.eq.s32.totalorder %v2649, %v2727
    %vm2784 = vcmp.eq.s32.totalorder %v2650, %v2727
    %vm2785 = vcmp.eq.s32.totalorder %v2651, %v2727
    %vm2786 = vcmp.eq.s32.totalorder %v2652, %v2727
    %vm2787 = vcmp.eq.s32.totalorder %v2653, %v2727
    %vm2788 = vcmp.eq.s32.totalorder %v2654, %v2727
    %vm2789 = vcmp.eq.s32.totalorder %v2655, %v2727
    %vm2790 = vcmp.eq.s32.totalorder %v2656, %v2727
    %vm2791 = vcmp.eq.s32.totalorder %v2657, %v2727
    %vm2792 = vcmp.eq.s32.totalorder %v2658, %v2727
    %vm2793 = vcmp.eq.s32.totalorder %v2659, %v2727
    %vm2794 = vcmp.eq.s32.totalorder %v2660, %v2727
    %vm2795 = vcmp.eq.s32.totalorder %v2661, %v2727
    %vm2796 = vcmp.eq.s32.totalorder %v2662, %v2727
    %vm2797 = vcmp.eq.s32.totalorder %v2663, %v2727
    %vm2798 = vcmp.eq.s32.totalorder %v2664, %v2727
    %vm2799 = vcmp.eq.s32.totalorder %v2665, %v2727
    %vm2800 = vcmp.eq.s32.totalorder %v2666, %v2727
    %vm2801 = vcmp.eq.s32.totalorder %v2667, %v2727
    %vm2802 = vcmp.eq.s32.totalorder %v2668, %v2727
    %vm2803 = vcmp.eq.s32.totalorder %v2669, %v2727
    %vm2804 = vcmp.eq.s32.totalorder %v2670, %v2727
    %vm2805 = vcmp.eq.s32.totalorder %v2671, %v2727
    %vm2806 = vcmp.eq.s32.totalorder %v2672, %v2727
    %vm2807 = vcmp.eq.s32.totalorder %v2673, %v2727
    %vm2808 = vcmp.eq.s32.totalorder %v2674, %v2727
    %vm2809 = vcmp.eq.s32.totalorder %v2675, %v2727
    %vm2810 = vcmp.eq.s32.totalorder %v2676, %v2727
    %vm2811 = vcmp.eq.s32.totalorder %v2677, %v2727
    %vm2812 = vcmp.eq.s32.totalorder %v2678, %v2727
    %vm2813 = vcmp.eq.s32.totalorder %v2679, %v2727
    %vm2814 = vcmp.eq.s32.totalorder %v2680, %v2727
    %vm2815 = vcmp.eq.s32.totalorder %v2681, %v2727
    %vm2816 = vcmp.eq.s32.totalorder %v2682, %v2727
    %vm2817 = vcmp.eq.s32.totalorder %v2683, %v2727
    %vm2818 = vcmp.eq.s32.totalorder %v2684, %v2727
    %vm2819 = vcmp.eq.s32.totalorder %v2685, %v2727
    %vm2820 = vcmp.eq.s32.totalorder %v2686, %v2727
    %vm2821 = vcmp.eq.s32.totalorder %v2687, %v2727
    %vm2822 = vcmp.eq.s32.totalorder %v2688, %v2727
    %vm2823 = vcmp.eq.s32.totalorder %v2689, %v2727
    %vm2824 = vcmp.eq.s32.totalorder %v2690, %v2727
    %vm2825 = vcmp.eq.s32.totalorder %v2691, %v2727
    %vm2826 = vcmp.eq.s32.totalorder %v2692, %v2727
    %vm2827 = vcmp.eq.s32.totalorder %v2693, %v2727
    %vm2828 = vcmp.eq.s32.totalorder %v2694, %v2727
    %vm2829 = vcmp.eq.s32.totalorder %v2695, %v2727
    %vm2830 = vcmp.eq.s32.totalorder %v2696, %v2727
    %vm2831 = vcmp.eq.s32.totalorder %v2697, %v2727
    %vm2832 = vcmp.eq.s32.totalorder %v2698, %v2727
    %vm2833 = vcmp.eq.s32.totalorder %v2699, %v2727
    %vm2834 = vcmp.eq.s32.totalorder %v2700, %v2727
    %vm2835 = vcmp.eq.s32.totalorder %v2701, %v2727
    %vm2836 = vcmp.eq.s32.totalorder %v2702, %v2727
    %vm2837 = vcmp.eq.s32.totalorder %v2703, %v2727
    %vm2838 = vcmp.eq.s32.totalorder %v2704, %v2727
    %vm2839 = vcmp.eq.s32.totalorder %v2705, %v2727
    %vm2840 = vcmp.eq.s32.totalorder %v2706, %v2727
    %vm2841 = vcmp.eq.s32.totalorder %v2707, %v2727
    %vm2842 = vcmp.eq.s32.totalorder %v2708, %v2727
    %vm2843 = vcmp.eq.s32.totalorder %v2709, %v2727
    %vm2844 = vcmp.eq.s32.totalorder %v2710, %v2727
    %vm2845 = vcmp.eq.s32.totalorder %v2711, %v2727
    %vm2846 = vcmp.eq.s32.totalorder %v2712, %v2727
    %vm2847 = vcmp.eq.s32.totalorder %v2713, %v2727
    %vm2848 = vcmp.eq.s32.totalorder %v2714, %v2727
    %vm2849 = vcmp.eq.s32.totalorder %v2715, %v2727
    %vm2850 = vcmp.eq.s32.totalorder %v2716, %v2727
    %vm2851 = vcmp.eq.s32.totalorder %v2717, %v2727
    %vm2852 = vcmp.eq.s32.totalorder %v2718, %v2727
    %vm2853 = vcmp.eq.s32.totalorder %v2719, %v2727
    %vm2854 = vcmp.eq.s32.totalorder %v2720, %v2727
    %vm2855 = vcmp.eq.s32.totalorder %v2721, %v2727
    %v2856 = vsel %vm2728, 1, 0
    %v2857 = vsel %vm2729, 1, 0
    %v2858 = vsel %vm2730, 1, 0
    %v2859 = vsel %vm2731, 1, 0
    %v2860 = vsel %vm2732, 1, 0
    %v2861 = vsel %vm2733, 1, 0
    %v2862 = vsel %vm2734, 1, 0
    %v2863 = vsel %vm2735, 1, 0
    %v2864 = vsel %vm2736, 1, 0
    %v2865 = vsel %vm2737, 1, 0
    %v2866 = vsel %vm2738, 1, 0
    %v2867 = vsel %vm2739, 1, 0
    %v2868 = vsel %vm2740, 1, 0
    %v2869 = vsel %vm2741, 1, 0
    %v2870 = vsel %vm2742, 1, 0
    %v2871 = vsel %vm2743, 1, 0
    %v2872 = vsel %vm2744, 1, 0
    %v2873 = vsel %vm2745, 1, 0
    %v2874 = vsel %vm2746, 1, 0
    %v2875 = vsel %vm2747, 1, 0
    %v2876 = vsel %vm2748, 1, 0
    %v2877 = vsel %vm2749, 1, 0
    %v2878 = vsel %vm2750, 1, 0
    %v2879 = vsel %vm2751, 1, 0
    %v2880 = vsel %vm2752, 1, 0
    %v2881 = vsel %vm2753, 1, 0
    %v2882 = vsel %vm2754, 1, 0
    %v2883 = vsel %vm2755, 1, 0
    %v2884 = vsel %vm2756, 1, 0
    %v2885 = vsel %vm2757, 1, 0
    %v2886 = vsel %vm2758, 1, 0
    %v2887 = vsel %vm2759, 1, 0
    %v2888 = vsel %vm2760, 1, 0
    %v2889 = vsel %vm2761, 1, 0
    %v2890 = vsel %vm2762, 1, 0
    %v2891 = vsel %vm2763, 1, 0
    %v2892 = vsel %vm2764, 1, 0
    %v2893 = vsel %vm2765, 1, 0
    %v2894 = vsel %vm2766, 1, 0
    %v2895 = vsel %vm2767, 1, 0
    %v2896 = vsel %vm2768, 1, 0
    %v2897 = vsel %vm2769, 1, 0
    %v2898 = vsel %vm2770, 1, 0
    %v2899 = vsel %vm2771, 1, 0
    %v2900 = vsel %vm2772, 1, 0
    %v2901 = vsel %vm2773, 1, 0
    %v2902 = vsel %vm2774, 1, 0
    %v2903 = vsel %vm2775, 1, 0
    %v2904 = vsel %vm2776, 1, 0
    %v2905 = vsel %vm2777, 1, 0
    %v2906 = vsel %vm2778, 1, 0
    %v2907 = vsel %vm2779, 1, 0
    %v2908 = vsel %vm2780, 1, 0
    %v2909 = vsel %vm2781, 1, 0
    %v2910 = vsel %vm2782, 1, 0
    %v2911 = vsel %vm2783, 1, 0
    %v2912 = vsel %vm2784, 1, 0
    %v2913 = vsel %vm2785, 1, 0
    %v2914 = vsel %vm2786, 1, 0
    %v2915 = vsel %vm2787, 1, 0
    %v2916 = vsel %vm2788, 1, 0
    %v2917 = vsel %vm2789, 1, 0
    %v2918 = vsel %vm2790, 1, 0
    %v2919 = vsel %vm2791, 1, 0
    %v2920 = vsel %vm2792, 1, 0
    %v2921 = vsel %vm2793, 1, 0
    %v2922 = vsel %vm2794, 1, 0
    %v2923 = vsel %vm2795, 1, 0
    %v2924 = vsel %vm2796, 1, 0
    %v2925 = vsel %vm2797, 1, 0
    %v2926 = vsel %vm2798, 1, 0
    %v2927 = vsel %vm2799, 1, 0
    %v2928 = vsel %vm2800, 1, 0
    %v2929 = vsel %vm2801, 1, 0
    %v2930 = vsel %vm2802, 1, 0
    %v2931 = vsel %vm2803, 1, 0
    %v2932 = vsel %vm2804, 1, 0
    %v2933 = vsel %vm2805, 1, 0
    %v2934 = vsel %vm2806, 1, 0
    %v2935 = vsel %vm2807, 1, 0
    %v2936 = vsel %vm2808, 1, 0
    %v2937 = vsel %vm2809, 1, 0
    %v2938 = vsel %vm2810, 1, 0
    %v2939 = vsel %vm2811, 1, 0
    %v2940 = vsel %vm2812, 1, 0
    %v2941 = vsel %vm2813, 1, 0
    %v2942 = vsel %vm2814, 1, 0
    %v2943 = vsel %vm2815, 1, 0
    %v2944 = vsel %vm2816, 1, 0
    %v2945 = vsel %vm2817, 1, 0
    %v2946 = vsel %vm2818, 1, 0
    %v2947 = vsel %vm2819, 1, 0
    %v2948 = vsel %vm2820, 1, 0
    %v2949 = vsel %vm2821, 1, 0
    %v2950 = vsel %vm2822, 1, 0
    %v2951 = vsel %vm2823, 1, 0
    %v2952 = vsel %vm2824, 1, 0
    %v2953 = vsel %vm2825, 1, 0
    %v2954 = vsel %vm2826, 1, 0
    %v2955 = vsel %vm2827, 1, 0
    %v2956 = vsel %vm2828, 1, 0
    %v2957 = vsel %vm2829, 1, 0
    %v2958 = vsel %vm2830, 1, 0
    %v2959 = vsel %vm2831, 1, 0
    %v2960 = vsel %vm2832, 1, 0
    %v2961 = vsel %vm2833, 1, 0
    %v2962 = vsel %vm2834, 1, 0
    %v2963 = vsel %vm2835, 1, 0
    %v2964 = vsel %vm2836, 1, 0
    %v2965 = vsel %vm2837, 1, 0
    %v2966 = vsel %vm2838, 1, 0
    %v2967 = vsel %vm2839, 1, 0
    %v2968 = vsel %vm2840, 1, 0
    %v2969 = vsel %vm2841, 1, 0
    %v2970 = vsel %vm2842, 1, 0
    %v2971 = vsel %vm2843, 1, 0
    %v2972 = vsel %vm2844, 1, 0
    %v2973 = vsel %vm2845, 1, 0
    %v2974 = vsel %vm2846, 1, 0
    %v2975 = vsel %vm2847, 1, 0
    %v2976 = vsel %vm2848, 1, 0
    %v2977 = vsel %vm2849, 1, 0
    %v2978 = vsel %vm2850, 1, 0
    %v2979 = vsel %vm2851, 1, 0
    %v2980 = vsel %vm2852, 1, 0
    %v2981 = vsel %vm2853, 1, 0
    %v2982 = vsel %vm2854, 1, 0
    %v2983 = vsel %vm2855, 1, 0
    %v2984 = vcvt.s32.f32 %v2856
    %v2985 = vcvt.s32.f32 %v2857
    %v2986 = vcvt.s32.f32 %v2858
    %v2987 = vcvt.s32.f32 %v2859
    %v2988 = vcvt.s32.f32 %v2860
    %v2989 = vcvt.s32.f32 %v2861
    %v2990 = vcvt.s32.f32 %v2862
    %v2991 = vcvt.s32.f32 %v2863
    %v2992 = vcvt.s32.f32 %v2864
    %v2993 = vcvt.s32.f32 %v2865
    %v2994 = vcvt.s32.f32 %v2866
    %v2995 = vcvt.s32.f32 %v2867
    %v2996 = vcvt.s32.f32 %v2868
    %v2997 = vcvt.s32.f32 %v2869
    %v2998 = vcvt.s32.f32 %v2870
    %v2999 = vcvt.s32.f32 %v2871
    %v3000 = vcvt.s32.f32 %v2872
    %v3001 = vcvt.s32.f32 %v2873
    %v3002 = vcvt.s32.f32 %v2874
    %v3003 = vcvt.s32.f32 %v2875
    %v3004 = vcvt.s32.f32 %v2876
    %v3005 = vcvt.s32.f32 %v2877
    %v3006 = vcvt.s32.f32 %v2878
    %v3007 = vcvt.s32.f32 %v2879
    %v3008 = vcvt.s32.f32 %v2880
    %v3009 = vcvt.s32.f32 %v2881
    %v3010 = vcvt.s32.f32 %v2882
    %v3011 = vcvt.s32.f32 %v2883
    %v3012 = vcvt.s32.f32 %v2884
    %v3013 = vcvt.s32.f32 %v2885
    %v3014 = vcvt.s32.f32 %v2886
    %v3015 = vcvt.s32.f32 %v2887
    %v3016 = vcvt.s32.f32 %v2888
    %v3017 = vcvt.s32.f32 %v2889
    %v3018 = vcvt.s32.f32 %v2890
    %v3019 = vcvt.s32.f32 %v2891
    %v3020 = vcvt.s32.f32 %v2892
    %v3021 = vcvt.s32.f32 %v2893
    %v3022 = vcvt.s32.f32 %v2894
    %v3023 = vcvt.s32.f32 %v2895
    %v3024 = vcvt.s32.f32 %v2896
    %v3025 = vcvt.s32.f32 %v2897
    %v3026 = vcvt.s32.f32 %v2898
    %v3027 = vcvt.s32.f32 %v2899
    %v3028 = vcvt.s32.f32 %v2900
    %v3029 = vcvt.s32.f32 %v2901
    %v3030 = vcvt.s32.f32 %v2902
    %v3031 = vcvt.s32.f32 %v2903
    %v3032 = vcvt.s32.f32 %v2904
    %v3033 = vcvt.s32.f32 %v2905
    %v3034 = vcvt.s32.f32 %v2906
    %v3035 = vcvt.s32.f32 %v2907
    %v3036 = vcvt.s32.f32 %v2908
    %v3037 = vcvt.s32.f32 %v2909
    %v3038 = vcvt.s32.f32 %v2910
    %v3039 = vcvt.s32.f32 %v2911
    %v3040 = vcvt.s32.f32 %v2912
    %v3041 = vcvt.s32.f32 %v2913
    %v3042 = vcvt.s32.f32 %v2914
    %v3043 = vcvt.s32.f32 %v2915
    %v3044 = vcvt.s32.f32 %v2916
    %v3045 = vcvt.s32.f32 %v2917
    %v3046 = vcvt.s32.f32 %v2918
    %v3047 = vcvt.s32.f32 %v2919
    %v3048 = vcvt.s32.f32 %v2920
    %v3049 = vcvt.s32.f32 %v2921
    %v3050 = vcvt.s32.f32 %v2922
    %v3051 = vcvt.s32.f32 %v2923
    %v3052 = vcvt.s32.f32 %v2924
    %v3053 = vcvt.s32.f32 %v2925
    %v3054 = vcvt.s32.f32 %v2926
    %v3055 = vcvt.s32.f32 %v2927
    %v3056 = vcvt.s32.f32 %v2928
    %v3057 = vcvt.s32.f32 %v2929
    %v3058 = vcvt.s32.f32 %v2930
    %v3059 = vcvt.s32.f32 %v2931
    %v3060 = vcvt.s32.f32 %v2932
    %v3061 = vcvt.s32.f32 %v2933
    %v3062 = vcvt.s32.f32 %v2934
    %v3063 = vcvt.s32.f32 %v2935
    %v3064 = vcvt.s32.f32 %v2936
    %v3065 = vcvt.s32.f32 %v2937
    %v3066 = vcvt.s32.f32 %v2938
    %v3067 = vcvt.s32.f32 %v2939
    %v3068 = vcvt.s32.f32 %v2940
    %v3069 = vcvt.s32.f32 %v2941
    %v3070 = vcvt.s32.f32 %v2942
    %v3071 = vcvt.s32.f32 %v2943
    %v3072 = vcvt.s32.f32 %v2944
    %v3073 = vcvt.s32.f32 %v2945
    %v3074 = vcvt.s32.f32 %v2946
    %v3075 = vcvt.s32.f32 %v2947
    %v3076 = vcvt.s32.f32 %v2948
    %v3077 = vcvt.s32.f32 %v2949
    %v3078 = vcvt.s32.f32 %v2950
    %v3079 = vcvt.s32.f32 %v2951
    %v3080 = vcvt.s32.f32 %v2952
    %v3081 = vcvt.s32.f32 %v2953
    %v3082 = vcvt.s32.f32 %v2954
    %v3083 = vcvt.s32.f32 %v2955
    %v3084 = vcvt.s32.f32 %v2956
    %v3085 = vcvt.s32.f32 %v2957
    %v3086 = vcvt.s32.f32 %v2958
    %v3087 = vcvt.s32.f32 %v2959
    %v3088 = vcvt.s32.f32 %v2960
    %v3089 = vcvt.s32.f32 %v2961
    %v3090 = vcvt.s32.f32 %v2962
    %v3091 = vcvt.s32.f32 %v2963
    %v3092 = vcvt.s32.f32 %v2964
    %v3093 = vcvt.s32.f32 %v2965
    %v3094 = vcvt.s32.f32 %v2966
    %v3095 = vcvt.s32.f32 %v2967
    %v3096 = vcvt.s32.f32 %v2968
    %v3097 = vcvt.s32.f32 %v2969
    %v3098 = vcvt.s32.f32 %v2970
    %v3099 = vcvt.s32.f32 %v2971
    %v3100 = vcvt.s32.f32 %v2972
    %v3101 = vcvt.s32.f32 %v2973
    %v3102 = vcvt.s32.f32 %v2974
    %v3103 = vcvt.s32.f32 %v2975
    %v3104 = vcvt.s32.f32 %v2976
    %v3105 = vcvt.s32.f32 %v2977
    %v3106 = vcvt.s32.f32 %v2978
    %v3107 = vcvt.s32.f32 %v2979
    %v3108 = vcvt.s32.f32 %v2980
    %v3109 = vcvt.s32.f32 %v2981
    %v3110 = vcvt.s32.f32 %v2982
    %v3111 = vcvt.s32.f32 %v2983
    %3112 = vmatprep.subr.mxu0 0.0
    %3113 = vmatpush1.msra.mxu0 %v2999
    %3114 = vmatprep.subr.mxu0 0.0
    %3115 = vmatpush1.msra.mxu0 %v2998
    %3116 = vmatprep.subr.mxu0 0.0
    %3117 = vmatpush1.msra.mxu0 %v2997
    %3118 = vmatprep.subr.mxu0 0.0
    %3119 = vmatpush1.msra.mxu0 %v2996
    %3120 = vmatprep.subr.mxu0 0.0
    %3121 = vmatpush1.msra.mxu0 %v2995
    %3122 = vmatprep.subr.mxu0 0.0
    %3123 = vmatpush1.msra.mxu0 %v2994
    %3124 = vmatprep.subr.mxu0 0.0
    %3125 = vmatpush1.msra.mxu0 %v2993
    %3126 = vmatprep.subr.mxu0 0.0
    %3127 = vmatpush1.msra.mxu0 %v2992
    %3128 = vmatprep.subr.mxu0 0.0
    %3129 = vmatpush1.msra.mxu0 %v2991
    %3130 = vmatprep.subr.mxu0 0.0
    %3131 = vmatpush1.msra.mxu0 %v2990
    %3132 = vmatprep.subr.mxu0 0.0
    %3133 = vmatpush1.msra.mxu0 %v2989
    %3134 = vmatprep.subr.mxu0 0.0
    %3135 = vmatpush1.msra.mxu0 %v2988
    %3136 = vmatprep.subr.mxu0 0.0
    %3137 = vmatpush1.msra.mxu0 %v2987
    %3138 = vmatprep.subr.mxu0 0.0
    %3139 = vmatpush1.msra.mxu0 %v2986
    %3140 = vmatprep.subr.mxu0 0.0
    %3141 = vmatpush1.msra.mxu0 %v2985
    %3142 = vmatprep.subr.mxu0 0.0
    %3143 = vmatpush1.msra.mxu0 %v2984
    %3144 = vmatprep.subr.mxu0 0.0
    %3145 = vmatpush2.msra.mxu0 %v3015
    %3146 = vmatprep.subr.mxu0 0.0
    %3147 = vmatpush2.msra.mxu0 %v3014
    %3148 = vmatprep.subr.mxu0 0.0
    %3149 = vmatpush2.msra.mxu0 %v3013
    %3150 = vmatprep.subr.mxu0 0.0
    %3151 = vmatpush2.msra.mxu0 %v3012
    %3152 = vmatprep.subr.mxu0 0.0
    %3153 = vmatpush2.msra.mxu0 %v3011
    %3154 = vmatprep.subr.mxu0 0.0
    %3155 = vmatpush2.msra.mxu0 %v3010
    %3156 = vmatprep.subr.mxu0 0.0
    %3157 = vmatpush2.msra.mxu0 %v3009
    %3158 = vmatprep.subr.mxu0 0.0
    %3159 = vmatpush2.msra.mxu0 %v3008
    %3160 = vmatprep.subr.mxu0 0.0
    %3161 = vmatpush2.msra.mxu0 %v3007
    %3162 = vmatprep.subr.mxu0 0.0
    %3163 = vmatpush2.msra.mxu0 %v3006
    %3164 = vmatprep.subr.mxu0 0.0
    %3165 = vmatpush2.msra.mxu0 %v3005
    %3166 = vmatprep.subr.mxu0 0.0
    %3167 = vmatpush2.msra.mxu0 %v3004
    %3168 = vmatprep.subr.mxu0 0.0
    %3169 = vmatpush2.msra.mxu0 %v3003
    %3170 = vmatprep.subr.mxu0 0.0
    %3171 = vmatpush2.msra.mxu0 %v3002
    %3172 = vmatprep.subr.mxu0 0.0
    %3173 = vmatpush2.msra.mxu0 %v3001
    %3174 = vmatprep.subr.mxu0 0.0
    %3175 = vmatpush2.msra.mxu0 %v3000
    %3176 = vmatprep.mubr.f32.mxu0 %v2578
    %3177 = vmatmul.mubr.f32.gmra.mxu0 %v2577
    %v3178 = vpop.f32.mrf.mxu0
    %v3179 = vadd.f32 0.0, %v3178
    %v3180 = vpop.f32.mrf.mxu0
    %3181 = vmatprep.mubr.f32.mxu0 %v2586
    %3182 = vmatmul.mubr.f32.gmra.mxu0 %v2585
    %v3183 = vpop.f32.mrf.mxu0
    %v3184 = vadd.f32 0.0, %v3183
    %v3185 = vpop.f32.mrf.mxu0
    %3186 = vdwg.mxu0
    %3187 = vmatprep.subr.mxu0 0.0
    %3188 = vmatpush1.msra.mxu0 %v3031
    %3189 = vmatprep.subr.mxu0 0.0
    %3190 = vmatpush1.msra.mxu0 %v3030
    %3191 = vmatprep.subr.mxu0 0.0
    %3192 = vmatpush1.msra.mxu0 %v3029
    %3193 = vmatprep.subr.mxu0 0.0
    %3194 = vmatpush1.msra.mxu0 %v3028
    %3195 = vmatprep.subr.mxu0 0.0
    %3196 = vmatpush1.msra.mxu0 %v3027
    %3197 = vmatprep.subr.mxu0 0.0
    %3198 = vmatpush1.msra.mxu0 %v3026
    %3199 = vmatprep.subr.mxu0 0.0
    %3200 = vmatpush1.msra.mxu0 %v3025
    %3201 = vmatprep.subr.mxu0 0.0
    %3202 = vmatpush1.msra.mxu0 %v3024
    %3203 = vmatprep.subr.mxu0 0.0
    %3204 = vmatpush1.msra.mxu0 %v3023
    %3205 = vmatprep.subr.mxu0 0.0
    %3206 = vmatpush1.msra.mxu0 %v3022
    %3207 = vmatprep.subr.mxu0 0.0
    %3208 = vmatpush1.msra.mxu0 %v3021
    %3209 = vmatprep.subr.mxu0 0.0
    %3210 = vmatpush1.msra.mxu0 %v3020
    %3211 = vmatprep.subr.mxu0 0.0
    %3212 = vmatpush1.msra.mxu0 %v3019
    %3213 = vmatprep.subr.mxu0 0.0
    %3214 = vmatpush1.msra.mxu0 %v3018
    %3215 = vmatprep.subr.mxu0 0.0
    %3216 = vmatpush1.msra.mxu0 %v3017
    %3217 = vmatprep.subr.mxu0 0.0
    %3218 = vmatpush1.msra.mxu0 %v3016
    %3219 = vmatprep.subr.mxu0 0.0
    %3220 = vmatpush2.msra.mxu0 %v3047
    %3221 = vmatprep.subr.mxu0 0.0
    %3222 = vmatpush2.msra.mxu0 %v3046
    %3223 = vmatprep.subr.mxu0 0.0
    %3224 = vmatpush2.msra.mxu0 %v3045
    %3225 = vmatprep.subr.mxu0 0.0
    %3226 = vmatpush2.msra.mxu0 %v3044
    %3227 = vmatprep.subr.mxu0 0.0
    %3228 = vmatpush2.msra.mxu0 %v3043
    %3229 = vmatprep.subr.mxu0 0.0
    %3230 = vmatpush2.msra.mxu0 %v3042
    %3231 = vmatprep.subr.mxu0 0.0
    %3232 = vmatpush2.msra.mxu0 %v3041
    %3233 = vmatprep.subr.mxu0 0.0
    %3234 = vmatpush2.msra.mxu0 %v3040
    %3235 = vmatprep.subr.mxu0 0.0
    %3236 = vmatpush2.msra.mxu0 %v3039
    %3237 = vmatprep.subr.mxu0 0.0
    %3238 = vmatpush2.msra.mxu0 %v3038
    %3239 = vmatprep.subr.mxu0 0.0
    %3240 = vmatpush2.msra.mxu0 %v3037
    %3241 = vmatprep.subr.mxu0 0.0
    %3242 = vmatpush2.msra.mxu0 %v3036
    %3243 = vmatprep.subr.mxu0 0.0
    %3244 = vmatpush2.msra.mxu0 %v3035
    %3245 = vmatprep.subr.mxu0 0.0
    %3246 = vmatpush2.msra.mxu0 %v3034
    %3247 = vmatprep.subr.mxu0 0.0
    %3248 = vmatpush2.msra.mxu0 %v3033
    %3249 = vmatprep.subr.mxu0 0.0
    %3250 = vmatpush2.msra.mxu0 %v3032
    %3251 = vmatprep.mubr.f32.mxu0 %v2580
    %3252 = vmatmul.mubr.f32.gmra.mxu0 %v2579
    %v3253 = vpop.f32.mrf.mxu0
    %v3254 = vadd.f32 %v3179, %v3253
    %v3255 = vpop.f32.mrf.mxu0
    %3256 = vmatprep.mubr.f32.mxu0 %v2588
    %3257 = vmatmul.mubr.f32.gmra.mxu0 %v2587
    %v3258 = vpop.f32.mrf.mxu0
    %v3259 = vadd.f32 %v3184, %v3258
    %v3260 = vpop.f32.mrf.mxu0
    %3261 = vdwg.mxu0
    %3262 = vmatprep.subr.mxu0 0.0
    %3263 = vmatpush1.msra.mxu0 %v3063
    %3264 = vmatprep.subr.mxu0 0.0
    %3265 = vmatpush1.msra.mxu0 %v3062
    %3266 = vmatprep.subr.mxu0 0.0
    %3267 = vmatpush1.msra.mxu0 %v3061
    %3268 = vmatprep.subr.mxu0 0.0
    %3269 = vmatpush1.msra.mxu0 %v3060
    %3270 = vmatprep.subr.mxu0 0.0
    %3271 = vmatpush1.msra.mxu0 %v3059
    %3272 = vmatprep.subr.mxu0 0.0
    %3273 = vmatpush1.msra.mxu0 %v3058
    %3274 = vmatprep.subr.mxu0 0.0
    %3275 = vmatpush1.msra.mxu0 %v3057
    %3276 = vmatprep.subr.mxu0 0.0
    %3277 = vmatpush1.msra.mxu0 %v3056
    %3278 = vmatprep.subr.mxu0 0.0
    %3279 = vmatpush1.msra.mxu0 %v3055
    %3280 = vmatprep.subr.mxu0 0.0
    %3281 = vmatpush1.msra.mxu0 %v3054
    %3282 = vmatprep.subr.mxu0 0.0
    %3283 = vmatpush1.msra.mxu0 %v3053
    %3284 = vmatprep.subr.mxu0 0.0
    %3285 = vmatpush1.msra.mxu0 %v3052
    %3286 = vmatprep.subr.mxu0 0.0
    %3287 = vmatpush1.msra.mxu0 %v3051
    %3288 = vmatprep.subr.mxu0 0.0
    %3289 = vmatpush1.msra.mxu0 %v3050
    %3290 = vmatprep.subr.mxu0 0.0
    %3291 = vmatpush1.msra.mxu0 %v3049
    %3292 = vmatprep.subr.mxu0 0.0
    %3293 = vmatpush1.msra.mxu0 %v3048
    %3294 = vmatprep.subr.mxu0 0.0
    %3295 = vmatpush2.msra.mxu0 %v3079
    %3296 = vmatprep.subr.mxu0 0.0
    %3297 = vmatpush2.msra.mxu0 %v3078
    %3298 = vmatprep.subr.mxu0 0.0
    %3299 = vmatpush2.msra.mxu0 %v3077
    %3300 = vmatprep.subr.mxu0 0.0
    %3301 = vmatpush2.msra.mxu0 %v3076
    %3302 = vmatprep.subr.mxu0 0.0
    %3303 = vmatpush2.msra.mxu0 %v3075
    %3304 = vmatprep.subr.mxu0 0.0
    %3305 = vmatpush2.msra.mxu0 %v3074
    %3306 = vmatprep.subr.mxu0 0.0
    %3307 = vmatpush2.msra.mxu0 %v3073
    %3308 = vmatprep.subr.mxu0 0.0
    %3309 = vmatpush2.msra.mxu0 %v3072
    %3310 = vmatprep.subr.mxu0 0.0
    %3311 = vmatpush2.msra.mxu0 %v3071
    %3312 = vmatprep.subr.mxu0 0.0
    %3313 = vmatpush2.msra.mxu0 %v3070
    %3314 = vmatprep.subr.mxu0 0.0
    %3315 = vmatpush2.msra.mxu0 %v3069
    %3316 = vmatprep.subr.mxu0 0.0
    %3317 = vmatpush2.msra.mxu0 %v3068
    %3318 = vmatprep.subr.mxu0 0.0
    %3319 = vmatpush2.msra.mxu0 %v3067
    %3320 = vmatprep.subr.mxu0 0.0
    %3321 = vmatpush2.msra.mxu0 %v3066
    %3322 = vmatprep.subr.mxu0 0.0
    %3323 = vmatpush2.msra.mxu0 %v3065
    %3324 = vmatprep.subr.mxu0 0.0
    %3325 = vmatpush2.msra.mxu0 %v3064
    %3326 = vmatprep.mubr.f32.mxu0 %v2582
    %3327 = vmatmul.mubr.f32.gmra.mxu0 %v2581
    %v3328 = vpop.f32.mrf.mxu0
    %v3329 = vadd.f32 %v3254, %v3328
    %v3330 = vpop.f32.mrf.mxu0
    %3331 = vmatprep.mubr.f32.mxu0 %v2590
    %3332 = vmatmul.mubr.f32.gmra.mxu0 %v2589
    %v3333 = vpop.f32.mrf.mxu0
    %v3334 = vadd.f32 %v3259, %v3333
    %v3335 = vpop.f32.mrf.mxu0
    %3336 = vdwg.mxu0
    %3337 = vmatprep.subr.mxu0 0.0
    %3338 = vmatpush1.msra.mxu0 %v3095
    %3339 = vmatprep.subr.mxu0 0.0
    %3340 = vmatpush1.msra.mxu0 %v3094
    %3341 = vmatprep.subr.mxu0 0.0
    %3342 = vmatpush1.msra.mxu0 %v3093
    %3343 = vmatprep.subr.mxu0 0.0
    %3344 = vmatpush1.msra.mxu0 %v3092
    %3345 = vmatprep.subr.mxu0 0.0
    %3346 = vmatpush1.msra.mxu0 %v3091
    %3347 = vmatprep.subr.mxu0 0.0
    %3348 = vmatpush1.msra.mxu0 %v3090
    %3349 = vmatprep.subr.mxu0 0.0
    %3350 = vmatpush1.msra.mxu0 %v3089
    %3351 = vmatprep.subr.mxu0 0.0
    %3352 = vmatpush1.msra.mxu0 %v3088
    %3353 = vmatprep.subr.mxu0 0.0
    %3354 = vmatpush1.msra.mxu0 %v3087
    %3355 = vmatprep.subr.mxu0 0.0
    %3356 = vmatpush1.msra.mxu0 %v3086
    %3357 = vmatprep.subr.mxu0 0.0
    %3358 = vmatpush1.msra.mxu0 %v3085
    %3359 = vmatprep.subr.mxu0 0.0
    %3360 = vmatpush1.msra.mxu0 %v3084
    %3361 = vmatprep.subr.mxu0 0.0
    %3362 = vmatpush1.msra.mxu0 %v3083
    %3363 = vmatprep.subr.mxu0 0.0
    %3364 = vmatpush1.msra.mxu0 %v3082
    %3365 = vmatprep.subr.mxu0 0.0
    %3366 = vmatpush1.msra.mxu0 %v3081
    %3367 = vmatprep.subr.mxu0 0.0
    %3368 = vmatpush1.msra.mxu0 %v3080
    %3369 = vmatprep.subr.mxu0 0.0
    %3370 = vmatpush2.msra.mxu0 %v3111
    %3371 = vmatprep.subr.mxu0 0.0
    %3372 = vmatpush2.msra.mxu0 %v3110
    %3373 = vmatprep.subr.mxu0 0.0
    %3374 = vmatpush2.msra.mxu0 %v3109
    %3375 = vmatprep.subr.mxu0 0.0
    %3376 = vmatpush2.msra.mxu0 %v3108
    %3377 = vmatprep.subr.mxu0 0.0
    %3378 = vmatpush2.msra.mxu0 %v3107
    %3379 = vmatprep.subr.mxu0 0.0
    %3380 = vmatpush2.msra.mxu0 %v3106
    %3381 = vmatprep.subr.mxu0 0.0
    %3382 = vmatpush2.msra.mxu0 %v3105
    %3383 = vmatprep.subr.mxu0 0.0
    %3384 = vmatpush2.msra.mxu0 %v3104
    %3385 = vmatprep.subr.mxu0 0.0
    %3386 = vmatpush2.msra.mxu0 %v3103
    %3387 = vmatprep.subr.mxu0 0.0
    %3388 = vmatpush2.msra.mxu0 %v3102
    %3389 = vmatprep.subr.mxu0 0.0
    %3390 = vmatpush2.msra.mxu0 %v3101
    %3391 = vmatprep.subr.mxu0 0.0
    %3392 = vmatpush2.msra.mxu0 %v3100
    %3393 = vmatprep.subr.mxu0 0.0
    %3394 = vmatpush2.msra.mxu0 %v3099
    %3395 = vmatprep.subr.mxu0 0.0
    %3396 = vmatpush2.msra.mxu0 %v3098
    %3397 = vmatprep.subr.mxu0 0.0
    %3398 = vmatpush2.msra.mxu0 %v3097
    %3399 = vmatprep.subr.mxu0 0.0
    %3400 = vmatpush2.msra.mxu0 %v3096
    %3401 = vmatprep.mubr.f32.mxu0 %v2584
    %3402 = vmatmul.mubr.f32.gmra.mxu0 %v2583
    %v3403 = vpop.f32.mrf.mxu0
    %v3404 = vadd.f32 %v3329, %v3403
    %v3405 = vpop.f32.mrf.mxu0
    %3406 = vmatprep.mubr.f32.mxu0 %v2592
    %3407 = vmatmul.mubr.f32.gmra.mxu0 %v2591
    %v3408 = vpop.f32.mrf.mxu0
    %v3409 = vadd.f32 %v3334, %v3408
    %v3410 = vpop.f32.mrf.mxu0
    %3411 = vdwg.mxu0
    %3412 = vst [vmem:[#allocation8] sm:$0xff] %v3404
    %3413 = vst [vmem:[#allocation8 + $0x8] sm:$0xff] %v3409
    // Predicated region
    $region18: #{tpu_custom_call.1} parent=1 // pred_check
      _
    $region19: #{tpu_custom_call.1} parent=1 // pred_check_branch
      %3415 = sbr.rel (0) target = $region21
    $region20: #{tpu_custom_call.1} parent=1 // pred_region
      %s3417 = ssub.s32 256, 256
      %3418 = vsyncadd [#allocation5], %s3417
      %s3419 = sshll.u32 [#allocation8], 4
      %s3420 = int_to_ptr.vmem [resolvable:$true] %s3419
      %3425 = dma.vmem_to_hbm [thread:$0]  %s3420, 256, %s2, [#allocation5], 128, 128, 8
    $region21: #{tpu_custom_call.1} parent=1 // pred_fallthru
      _
    // Predicated region
    $region22: #{tpu_custom_call.1} parent=1 // pred_check
      _
    $region23: #{tpu_custom_call.1} parent=1 // pred_check_branch
      %3427 = sbr.rel (0) target = $region25
    $region24: #{tpu_custom_call.1} parent=1 // pred_region
      %3428 = dma.done [#allocation5], 256
    $region25: #{tpu_custom_call.1} parent=1 // pred_fallthru
      _
    %3429 = vsyncpa [#allocation4], 1
    %3430 = vsyncpa [#allocation7], 1
    %3431 = vsyncpa [#allocation5], 1

</llo_original>
